<compile_context>
chip_gen: v5e
topology: v5e:2x2
jax: 0.10.0
libtpu: 0.0.40
codegen_flags: <defaults>
</compile_context>

<pallas_src>
import functools

import jax
import jax.numpy as jnp
from jax import lax
from jax.experimental import pallas as pl
from jax.experimental.pallas import tpu as pltpu


def _round_up(x, m):
    return ((x + m - 1) // m) * m


def _sublane_tile(itemsize):
    # Packed sublane tile height: f32 -> 8, bf16/fp16 -> 16, int8/fp8 -> 32.
    return {4: 8, 2: 16, 1: 32}.get(itemsize, 8)


def _vmem_capacity_bytes():
    # Config-only query (never wraps kernel lowering); conservative v7x
    # per-core fallback if the query is unavailable on this toolchain.
    try:
        return int(pltpu.get_tpu_info().vmem_capacity_bytes)
    except Exception:
        return 64 * 1024 * 1024


def _omnishift_kernel(x_ref, w_ref, o_ref, pad_ref, *,
                      wpl, rows_blk, n_full, rem, row_unroll, chan_unroll):
    """Depthwise 5x5 conv, padding=2, for one (batch, channel-block).

    x_ref:   (CB, H, W)       un-padded input block, VMEM
    w_ref:   (C * 25,)        f32 reparameterized taps, SMEM (scalar reads)
    o_ref:   (CB, H, W)       output block, VMEM
    pad_ref: (CB, H+4, wpl)   halo scratch, VMEM.  Per channel:
                              rows [2, H+2) x cols [0, W) hold the input,
                              rows [0,2) & [H+2,H+4) and cols [W, wpl) are 0.
    """
    cb, H, W = x_ref.shape
    hp = H + 4
    c0 = pl.program_id(1) * cb            # first global channel of this block
    in_dt = pad_ref.dtype

    def channel_body(c, carry):
        # --- build the zero-halo plane for this channel (one VMEM pass) ---
        pad_ref[c, pl.ds(0, 2), :] = jnp.zeros((2, wpl), in_dt)
        pad_ref[c, pl.ds(H + 2, 2), :] = jnp.zeros((2, wpl), in_dt)
        pad_ref[c, :, pl.ds(W, wpl - W)] = jnp.zeros((hp, wpl - W), in_dt)
        pad_ref[c, pl.ds(2, H), pl.ds(0, W)] = x_ref[c]     # lane-aligned copy

        # --- 25 per-channel taps: scalar SMEM reads hoisted out of all loops;
        # the scalar*vector multiplies below rely on scalar-operand vmul. ---
        base = (c0 + c) * 25
        taps = [w_ref[base + k] for k in range(25)]

        def do_block(r0, nrows):
            # Full-lane-width f32 accumulator; only the final store narrows.
            acc = jnp.zeros((nrows, wpl), jnp.float32)
            for dh in range(5):
                # dh shift: plain row-offset window load (address change only).
                rows = pad_ref[c, pl.ds(r0 + dh, nrows), :].astype(jnp.float32)
                for dw in range(5):
                    # dw shift on the XLU: tap[:, j] = rows[:, (j + dw - 2) % wpl].
                    # Wrapped lanes land in the zeroed right-pad region, which
                    # is exactly the left zero halo; stored columns (< W) never
                    # see garbage.
                    if dw == 2:
                        tap = rows
                    else:
                        tap = pltpu.roll(rows, shift=(2 - dw) % wpl, axis=1)
                    acc = acc + tap * taps[dh * 5 + dw]
            o_ref[c, pl.ds(r0, nrows), :] = acc[:, :W].astype(o_ref.dtype)

        if n_full > 0:
            def row_body(r, carry_r):
                do_block(pl.multiple_of(r * rows_blk, rows_blk), rows_blk)
                return carry_r
            lax.fori_loop(0, n_full, row_body, 0, unroll=row_unroll)
        if rem > 0:
            # Ragged last row block: static-size loads/store, no wrapper slice.
            do_block(n_full * rows_blk, rem)
        return carry

    lax.fori_loop(0, cb, channel_body, 0, unroll=chan_unroll)


def omnishift_pallas(x_nchw, combined_c55):
    """x_nchw: (B, C, H, W); combined_c55: (C, 5, 5). Returns (B, C, H, W)."""
    B, C, H, W = x_nchw.shape
    isz = x_nchw.dtype.itemsize
    sub = _sublane_tile(isz)
    rows_blk = sub                         # dtype-aware row block height
    hp = H + 4
    wpl = _round_up(W + 4, 128)            # lane-padded scratch width
    n_full, rem = divmod(H, rows_blk)

    # Flat (C*25,) f32 taps -> SMEM scalars; pre-cast so the kernel never casts.
    w_flat = combined_c55.astype(jnp.float32).reshape(C * 25)

    # --- channel-block sizing from the actual tile-rounded VMEM footprint ---
    in_pc = _round_up(H, sub) * _round_up(W, 128) * isz      # per-channel in block
    out_pc = in_pc                                           # same shape / dtype
    pad_pc = _round_up(hp, sub) * wpl * isz                  # per-channel halo scratch

    def footprint(cb):                     # double-buffered in/out + scratch
        return cb * (2 * in_pc + 2 * out_pc + pad_pc)

    cap = _vmem_capacity_bytes()
    blk_budget = (28 << 20) if cap <= (80 << 20) else (56 << 20)

    cb = 1
    for d in range(C, 0, -1):
        if C % d == 0 and footprint(d) <= blk_budget:
            cb = d
            break
    # TODO(synk): add an H-tiled grid axis (row chunks with a 4-row halo via the
    # index_map) for the case where a single padded channel plane exceeds the
    # VMEM budget (cb == 1), and a channels-last (C-on-lanes) variant for
    # W < 128 with C >= 128.

    # Guarantee >= 2 grid steps so both v7x TensorCores get work and the DMA
    # pipeline has depth.
    if B * (C // cb) < 2 and C > 1:
        cb = max(d for d in range(1, C // 2 + 1) if C % d == 0)

    grid = (B, C // cb)

    need = footprint(cb)
    vmem_limit = max(32 << 20, need + max(need // 2, 2 << 20))
    vmem_limit = int(min(vmem_limit, cap - (2 << 20)))

    vregs_per_row = wpl // 128
    if n_full <= 1:
        row_unroll = 1
    else:
        row_unroll = int(min(n_full, max(1, 8 // vregs_per_row)))
    chan_unroll = True if cb <= 8 else 1

    kernel = functools.partial(
        _omnishift_kernel, wpl=wpl, rows_blk=rows_blk, n_full=n_full, rem=rem,
        row_unroll=row_unroll, chan_unroll=chan_unroll)

    return pl.pallas_call(
        kernel,
        out_shape=jax.ShapeDtypeStruct((B, C, H, W), x_nchw.dtype),
        grid_spec=pltpu.PrefetchScalarGridSpec(
            num_scalar_prefetch=0,
            grid=grid,
            in_specs=[
                pl.BlockSpec((None, cb, H, W), lambda b, c: (b, c, 0, 0)),
                pl.BlockSpec(memory_space=pltpu.MemorySpace.SMEM),
            ],
            out_specs=pl.BlockSpec((None, cb, H, W), lambda b, c: (b, c, 0, 0)),
            scratch_shapes=[pltpu.VMEM((cb, hp, wpl), x_nchw.dtype)],
        ),
        compiler_params=pltpu.CompilerParams(
            dimension_semantics=("parallel", "parallel"),
            vmem_limit_bytes=vmem_limit,
        ),
    )(x_nchw, w_flat)


# ----------------------------------------------------------------------------
# Parameter construction / reparameterization (mirrors OmniShift) + reference.
# ----------------------------------------------------------------------------
def make_params(dim, key):
    """Deterministic synthetic parameters matching OmniShift.__init__ shapes."""
    k1, k2, k3, k4 = jax.random.split(key, 4)
    w1x1 = jax.random.normal(k1, (dim, 1, 1, 1), jnp.float32)   # conv1x1.weight
    w3x3 = jax.random.normal(k2, (dim, 1, 3, 3), jnp.float32)   # conv3x3.weight
    w5x5 = jax.random.normal(k3, (dim, 1, 5, 5), jnp.float32)   # conv5x5.weight
    alpha = jax.random.normal(k4, (4,), jnp.float32)            # alpha
    return w1x1, w3x3, w5x5, alpha


def reparam_5x5(w1x1, w3x3, w5x5, alpha):
    """Mirror OmniShift.reparam_5x5: produce combined (dim, 1, 5, 5) weight."""
    pad1 = jnp.pad(w1x1, ((0, 0), (0, 0), (2, 2), (2, 2)))
    pad3 = jnp.pad(w3x3, ((0, 0), (0, 0), (1, 1), (1, 1)))
    ident = jnp.pad(jnp.ones_like(w1x1), ((0, 0), (0, 0), (2, 2), (2, 2)))
    return (alpha[0] * ident + alpha[1] * pad1
            + alpha[2] * pad3 + alpha[3] * w5x5)                # (dim, 1, 5, 5)


def reference_depthwise_conv5x5(x_nchw, combined_c155):
    """Pure-JAX reference: depthwise 5x5 conv, padding=2, groups=dim (NCHW)."""
    dim = x_nchw.shape[1]
    return lax.conv_general_dilated(
        x_nchw, combined_c155,
        window_strides=(1, 1), padding=((2, 2), (2, 2)),
        dimension_numbers=("NCHW", "OIHW", "NCHW"),
        feature_group_count=dim,
        precision=lax.Precision.HIGHEST)


if __name__ == "__main__":
    B, C, H, W = 2, 4, 16, 16
    key = jax.random.PRNGKey(0)
    kx, kp = jax.random.split(key)

    x = jax.random.normal(kx, (B, C, H, W), jnp.float32)
    w1x1, w3x3, w5x5, alpha = make_params(C, kp)

    combined = reparam_5x5(w1x1, w3x3, w5x5, alpha)      # (C, 1, 5, 5)
    combined_c55 = combined[:, 0, :, :]                  # (C, 5, 5)

    out = omnishift_pallas(x, combined_c55)
    out = jax.block_until_ready(out)

    ref = reference_depthwise_conv5x5(x, combined)
    assert out.shape == (B, C, H, W)
    assert jnp.allclose(out, ref, rtol=1e-4, atol=1e-4), "mismatch vs reference"

    print("KERNEL_OK")
</pallas_src>

<mosaic_0001>
module attributes {stable_mosaic.version = 11 : i64} {
  func.func @_omnishift_kernel(%arg0: i32, %arg1: i32, %arg2: memref<1x4x16x16xf32, #tpu.memory_space<vmem>>, %arg3: memref<100xf32, #tpu.memory_space<smem>>, %arg4: memref<1x4x16x16xf32, #tpu.memory_space<vmem>>, %arg5: memref<4x20x128xf32, #tpu.memory_space<vmem>>) attributes {dimension_semantics = [#tpu.dimension_semantics<parallel>, #tpu.dimension_semantics<parallel>], iteration_bounds = array<i64: 2, 1>, scalar_prefetch = 0 : i64, scratch_operands = 1 : i64, tpu.core_type = #tpu.core_type<tc>, window_params = [{transform_indices = @transform_0, window_bounds = array<i64: 1, 4, 16, 16>}, {transform_indices = @transform_1, window_bounds = array<i64: 100>}, {transform_indices = @transform_2, window_bounds = array<i64: 1, 4, 16, 16>}]} {
    %c4_i32 = arith.constant 4 : i32
    %0 = arith.muli %arg1, %c4_i32 : i32
    %c0_i32 = arith.constant 0 : i32
    %cst = arith.constant 0.000000e+00 : f32
    %1 = vector.broadcast %cst : f32 to vector<2x128xf32>
    %2 = arith.index_cast %c0_i32 : i32 to index
    %c0 = arith.constant 0 : index
    %c0_0 = arith.constant 0 : index
    %3 = vector.load %arg5[%2, %c0, %c0_0] : memref<4x20x128xf32, #tpu.memory_space<vmem>>, vector<1x2x128xf32>
    %4 = vector.shape_cast %3 : vector<1x2x128xf32> to vector<2x128xf32>
    %5 = vector.shape_cast %1 : vector<2x128xf32> to vector<1x2x128xf32>
    tpu.vector_store %arg5[%2, %c0, %c0_0], %5 {strides = array<i32>} : memref<4x20x128xf32, #tpu.memory_space<vmem>>, vector<1x2x128xf32>,
    %cst_1 = arith.constant 0.000000e+00 : f32
    %6 = vector.broadcast %cst_1 : f32 to vector<2x128xf32>
    %7 = arith.index_cast %c0_i32 : i32 to index
    %c18 = arith.constant 18 : index
    %c0_2 = arith.constant 0 : index
    %8 = vector.load %arg5[%7, %c18, %c0_2] : memref<4x20x128xf32, #tpu.memory_space<vmem>>, vector<1x2x128xf32>
    %9 = vector.shape_cast %8 : vector<1x2x128xf32> to vector<2x128xf32>
    %10 = vector.shape_cast %6 : vector<2x128xf32> to vector<1x2x128xf32>
    tpu.vector_store %arg5[%7, %c18, %c0_2], %10 {strides = array<i32>} : memref<4x20x128xf32, #tpu.memory_space<vmem>>, vector<1x2x128xf32>,
    %cst_3 = arith.constant 0.000000e+00 : f32
    %11 = vector.broadcast %cst_3 : f32 to vector<20x112xf32>
    %12 = arith.index_cast %c0_i32 : i32 to index
    %c0_4 = arith.constant 0 : index
    %c16 = arith.constant 16 : index
    %13 = vector.load %arg5[%12, %c0_4, %c16] : memref<4x20x128xf32, #tpu.memory_space<vmem>>, vector<1x20x112xf32>
    %14 = vector.shape_cast %13 : vector<1x20x112xf32> to vector<20x112xf32>
    %15 = vector.shape_cast %11 : vector<20x112xf32> to vector<1x20x112xf32>
    tpu.vector_store %arg5[%12, %c0_4, %c16], %15 {strides = array<i32>} : memref<4x20x128xf32, #tpu.memory_space<vmem>>, vector<1x20x112xf32>,
    %c0_5 = arith.constant 0 : index
    %16 = arith.index_cast %c0_i32 : i32 to index
    %c0_6 = arith.constant 0 : index
    %c0_7 = arith.constant 0 : index
    %17 = vector.load %arg2[%c0_5, %16, %c0_6, %c0_7] : memref<1x4x16x16xf32, #tpu.memory_space<vmem>>, vector<1x1x16x16xf32>
    %18 = vector.shape_cast %17 : vector<1x1x16x16xf32> to vector<16x16xf32>
    %19 = arith.index_cast %c0_i32 : i32 to index
    %c2 = arith.constant 2 : index
    %c0_8 = arith.constant 0 : index
    %20 = vector.load %arg5[%19, %c2, %c0_8] : memref<4x20x128xf32, #tpu.memory_space<vmem>>, vector<1x16x16xf32>
    %21 = vector.shape_cast %20 : vector<1x16x16xf32> to vector<16x16xf32>
    %22 = vector.shape_cast %18 : vector<16x16xf32> to vector<1x16x16xf32>
    tpu.vector_store %arg5[%19, %c2, %c0_8], %22 {strides = array<i32>} : memref<4x20x128xf32, #tpu.memory_space<vmem>>, vector<1x16x16xf32>,
    %23 = arith.addi %0, %c0_i32 : i32
    %c25_i32 = arith.constant 25 : i32
    %24 = arith.muli %23, %c25_i32 : i32
    %c0_i32_9 = arith.constant 0 : i32
    %25 = arith.addi %24, %c0_i32_9 : i32
    %26 = arith.index_cast %25 : i32 to index
    %27 = memref.load %arg3[%26] : memref<100xf32, #tpu.memory_space<smem>>
    %c1_i32 = arith.constant 1 : i32
    %28 = arith.addi %24, %c1_i32 : i32
    %29 = arith.index_cast %28 : i32 to index
    %30 = memref.load %arg3[%29] : memref<100xf32, #tpu.memory_space<smem>>
    %c2_i32 = arith.constant 2 : i32
    %31 = arith.addi %24, %c2_i32 : i32
    %32 = arith.index_cast %31 : i32 to index
    %33 = memref.load %arg3[%32] : memref<100xf32, #tpu.memory_space<smem>>
    %c3_i32 = arith.constant 3 : i32
    %34 = arith.addi %24, %c3_i32 : i32
    %35 = arith.index_cast %34 : i32 to index
    %36 = memref.load %arg3[%35] : memref<100xf32, #tpu.memory_space<smem>>
    %c4_i32_10 = arith.constant 4 : i32
    %37 = arith.addi %24, %c4_i32_10 : i32
    %38 = arith.index_cast %37 : i32 to index
    %39 = memref.load %arg3[%38] : memref<100xf32, #tpu.memory_space<smem>>
    %c5_i32 = arith.constant 5 : i32
    %40 = arith.addi %24, %c5_i32 : i32
    %41 = arith.index_cast %40 : i32 to index
    %42 = memref.load %arg3[%41] : memref<100xf32, #tpu.memory_space<smem>>
    %c6_i32 = arith.constant 6 : i32
    %43 = arith.addi %24, %c6_i32 : i32
    %44 = arith.index_cast %43 : i32 to index
    %45 = memref.load %arg3[%44] : memref<100xf32, #tpu.memory_space<smem>>
    %c7_i32 = arith.constant 7 : i32
    %46 = arith.addi %24, %c7_i32 : i32
    %47 = arith.index_cast %46 : i32 to index
    %48 = memref.load %arg3[%47] : memref<100xf32, #tpu.memory_space<smem>>
    %c8_i32 = arith.constant 8 : i32
    %49 = arith.addi %24, %c8_i32 : i32
    %50 = arith.index_cast %49 : i32 to index
    %51 = memref.load %arg3[%50] : memref<100xf32, #tpu.memory_space<smem>>
    %c9_i32 = arith.constant 9 : i32
    %52 = arith.addi %24, %c9_i32 : i32
    %53 = arith.index_cast %52 : i32 to index
    %54 = memref.load %arg3[%53] : memref<100xf32, #tpu.memory_space<smem>>
    %c10_i32 = arith.constant 10 : i32
    %55 = arith.addi %24, %c10_i32 : i32
    %56 = arith.index_cast %55 : i32 to index
    %57 = memref.load %arg3[%56] : memref<100xf32, #tpu.memory_space<smem>>
    %c11_i32 = arith.constant 11 : i32
    %58 = arith.addi %24, %c11_i32 : i32
    %59 = arith.index_cast %58 : i32 to index
    %60 = memref.load %arg3[%59] : memref<100xf32, #tpu.memory_space<smem>>
    %c12_i32 = arith.constant 12 : i32
    %61 = arith.addi %24, %c12_i32 : i32
    %62 = arith.index_cast %61 : i32 to index
    %63 = memref.load %arg3[%62] : memref<100xf32, #tpu.memory_space<smem>>
    %c13_i32 = arith.constant 13 : i32
    %64 = arith.addi %24, %c13_i32 : i32
    %65 = arith.index_cast %64 : i32 to index
    %66 = memref.load %arg3[%65] : memref<100xf32, #tpu.memory_space<smem>>
    %c14_i32 = arith.constant 14 : i32
    %67 = arith.addi %24, %c14_i32 : i32
    %68 = arith.index_cast %67 : i32 to index
    %69 = memref.load %arg3[%68] : memref<100xf32, #tpu.memory_space<smem>>
    %c15_i32 = arith.constant 15 : i32
    %70 = arith.addi %24, %c15_i32 : i32
    %71 = arith.index_cast %70 : i32 to index
    %72 = memref.load %arg3[%71] : memref<100xf32, #tpu.memory_space<smem>>
    %c16_i32 = arith.constant 16 : i32
    %73 = arith.addi %24, %c16_i32 : i32
    %74 = arith.index_cast %73 : i32 to index
    %75 = memref.load %arg3[%74] : memref<100xf32, #tpu.memory_space<smem>>
    %c17_i32 = arith.constant 17 : i32
    %76 = arith.addi %24, %c17_i32 : i32
    %77 = arith.index_cast %76 : i32 to index
    %78 = memref.load %arg3[%77] : memref<100xf32, #tpu.memory_space<smem>>
    %c18_i32 = arith.constant 18 : i32
    %79 = arith.addi %24, %c18_i32 : i32
    %80 = arith.index_cast %79 : i32 to index
    %81 = memref.load %arg3[%80] : memref<100xf32, #tpu.memory_space<smem>>
    %c19_i32 = arith.constant 19 : i32
    %82 = arith.addi %24, %c19_i32 : i32
    %83 = arith.index_cast %82 : i32 to index
    %84 = memref.load %arg3[%83] : memref<100xf32, #tpu.memory_space<smem>>
    %c20_i32 = arith.constant 20 : i32
    %85 = arith.addi %24, %c20_i32 : i32
    %86 = arith.index_cast %85 : i32 to index
    %87 = memref.load %arg3[%86] : memref<100xf32, #tpu.memory_space<smem>>
    %c21_i32 = arith.constant 21 : i32
    %88 = arith.addi %24, %c21_i32 : i32
    %89 = arith.index_cast %88 : i32 to index
    %90 = memref.load %arg3[%89] : memref<100xf32, #tpu.memory_space<smem>>
    %c22_i32 = arith.constant 22 : i32
    %91 = arith.addi %24, %c22_i32 : i32
    %92 = arith.index_cast %91 : i32 to index
    %93 = memref.load %arg3[%92] : memref<100xf32, #tpu.memory_space<smem>>
    %c23_i32 = arith.constant 23 : i32
    %94 = arith.addi %24, %c23_i32 : i32
    %95 = arith.index_cast %94 : i32 to index
    %96 = memref.load %arg3[%95] : memref<100xf32, #tpu.memory_space<smem>>
    %c24_i32 = arith.constant 24 : i32
    %97 = arith.addi %24, %c24_i32 : i32
    %98 = arith.index_cast %97 : i32 to index
    %99 = memref.load %arg3[%98] : memref<100xf32, #tpu.memory_space<smem>>
    %c0_i32_11 = arith.constant 0 : i32
    %c8_i32_12 = arith.constant 8 : i32
    %100 = arith.muli %c0_i32_11, %c8_i32_12 : i32
    %101 = tpu.assume_multiple %100, 8 : i32
    %cst_13 = arith.constant 0.000000e+00 : f32
    %102 = vector.broadcast %cst_13 : f32 to vector<8x128xf32>
    %c0_i32_14 = arith.constant 0 : i32
    %103 = arith.addi %101, %c0_i32_14 : i32
    %104 = arith.index_cast %c0_i32 : i32 to index
    %105 = arith.index_cast %103 : i32 to index
    %c0_15 = arith.constant 0 : index
    %106 = vector.load %arg5[%104, %105, %c0_15] : memref<4x20x128xf32, #tpu.memory_space<vmem>>, vector<1x8x128xf32>
    %107 = vector.shape_cast %106 : vector<1x8x128xf32> to vector<8x128xf32>
    %c2_i32_16 = arith.constant 2 : i32
    %108 = tpu.dynamic_rotate %107 by %c2_i32_16 dim 1 : vector<8x128xf32>, i32 -> vector<8x128xf32>
    %109 = vector.broadcast %27 : f32 to vector<8x128xf32>
    %110 = arith.mulf %108, %109 : vector<8x128xf32>
    %111 = arith.addf %102, %110 : vector<8x128xf32>
    %c1_i32_17 = arith.constant 1 : i32
    %112 = tpu.dynamic_rotate %107 by %c1_i32_17 dim 1 : vector<8x128xf32>, i32 -> vector<8x128xf32>
    %113 = vector.broadcast %30 : f32 to vector<8x128xf32>
    %114 = arith.mulf %112, %113 : vector<8x128xf32>
    %115 = arith.addf %111, %114 : vector<8x128xf32>
    %116 = vector.broadcast %33 : f32 to vector<8x128xf32>
    %117 = arith.mulf %107, %116 : vector<8x128xf32>
    %118 = arith.addf %115, %117 : vector<8x128xf32>
    %c127_i32 = arith.constant 127 : i32
    %119 = tpu.dynamic_rotate %107 by %c127_i32 dim 1 : vector<8x128xf32>, i32 -> vector<8x128xf32>
    %120 = vector.broadcast %36 : f32 to vector<8x128xf32>
    %121 = arith.mulf %119, %120 : vector<8x128xf32>
    %122 = arith.addf %118, %121 : vector<8x128xf32>
    %c126_i32 = arith.constant 126 : i32
    %123 = tpu.dynamic_rotate %107 by %c126_i32 dim 1 : vector<8x128xf32>, i32 -> vector<8x128xf32>
    %124 = vector.broadcast %39 : f32 to vector<8x128xf32>
    %125 = arith.mulf %123, %124 : vector<8x128xf32>
    %126 = arith.addf %122, %125 : vector<8x128xf32>
    %c1_i32_18 = arith.constant 1 : i32
    %127 = arith.addi %101, %c1_i32_18 : i32
    %128 = arith.index_cast %c0_i32 : i32 to index
    %129 = arith.index_cast %127 : i32 to index
    %c0_19 = arith.constant 0 : index
    %130 = vector.load %arg5[%128, %129, %c0_19] : memref<4x20x128xf32, #tpu.memory_space<vmem>>, vector<1x8x128xf32>
    %131 = vector.shape_cast %130 : vector<1x8x128xf32> to vector<8x128xf32>
    %c2_i32_20 = arith.constant 2 : i32
    %132 = tpu.dynamic_rotate %131 by %c2_i32_20 dim 1 : vector<8x128xf32>, i32 -> vector<8x128xf32>
    %133 = vector.broadcast %42 : f32 to vector<8x128xf32>
    %134 = arith.mulf %132, %133 : vector<8x128xf32>
    %135 = arith.addf %126, %134 : vector<8x128xf32>
    %c1_i32_21 = arith.constant 1 : i32
    %136 = tpu.dynamic_rotate %131 by %c1_i32_21 dim 1 : vector<8x128xf32>, i32 -> vector<8x128xf32>
    %137 = vector.broadcast %45 : f32 to vector<8x128xf32>
    %138 = arith.mulf %136, %137 : vector<8x128xf32>
    %139 = arith.addf %135, %138 : vector<8x128xf32>
    %140 = vector.broadcast %48 : f32 to vector<8x128xf32>
    %141 = arith.mulf %131, %140 : vector<8x128xf32>
    %142 = arith.addf %139, %141 : vector<8x128xf32>
    %c127_i32_22 = arith.constant 127 : i32
    %143 = tpu.dynamic_rotate %131 by %c127_i32_22 dim 1 : vector<8x128xf32>, i32 -> vector<8x128xf32>
    %144 = vector.broadcast %51 : f32 to vector<8x128xf32>
    %145 = arith.mulf %143, %144 : vector<8x128xf32>
    %146 = arith.addf %142, %145 : vector<8x128xf32>
    %c126_i32_23 = arith.constant 126 : i32
    %147 = tpu.dynamic_rotate %131 by %c126_i32_23 dim 1 : vector<8x128xf32>, i32 -> vector<8x128xf32>
    %148 = vector.broadcast %54 : f32 to vector<8x128xf32>
    %149 = arith.mulf %147, %148 : vector<8x128xf32>
    %150 = arith.addf %146, %149 : vector<8x128xf32>
    %c2_i32_24 = arith.constant 2 : i32
    %151 = arith.addi %101, %c2_i32_24 : i32
    %152 = arith.index_cast %c0_i32 : i32 to index
    %153 = arith.index_cast %151 : i32 to index
    %c0_25 = arith.constant 0 : index
    %154 = vector.load %arg5[%152, %153, %c0_25] : memref<4x20x128xf32, #tpu.memory_space<vmem>>, vector<1x8x128xf32>
    %155 = vector.shape_cast %154 : vector<1x8x128xf32> to vector<8x128xf32>
    %c2_i32_26 = arith.constant 2 : i32
    %156 = tpu.dynamic_rotate %155 by %c2_i32_26 dim 1 : vector<8x128xf32>, i32 -> vector<8x128xf32>
    %157 = vector.broadcast %57 : f32 to vector<8x128xf32>
    %158 = arith.mulf %156, %157 : vector<8x128xf32>
    %159 = arith.addf %150, %158 : vector<8x128xf32>
    %c1_i32_27 = arith.constant 1 : i32
    %160 = tpu.dynamic_rotate %155 by %c1_i32_27 dim 1 : vector<8x128xf32>, i32 -> vector<8x128xf32>
    %161 = vector.broadcast %60 : f32 to vector<8x128xf32>
    %162 = arith.mulf %160, %161 : vector<8x128xf32>
    %163 = arith.addf %159, %162 : vector<8x128xf32>
    %164 = vector.broadcast %63 : f32 to vector<8x128xf32>
    %165 = arith.mulf %155, %164 : vector<8x128xf32>
    %166 = arith.addf %163, %165 : vector<8x128xf32>
    %c127_i32_28 = arith.constant 127 : i32
    %167 = tpu.dynamic_rotate %155 by %c127_i32_28 dim 1 : vector<8x128xf32>, i32 -> vector<8x128xf32>
    %168 = vector.broadcast %66 : f32 to vector<8x128xf32>
    %169 = arith.mulf %167, %168 : vector<8x128xf32>
    %170 = arith.addf %166, %169 : vector<8x128xf32>
    %c126_i32_29 = arith.constant 126 : i32
    %171 = tpu.dynamic_rotate %155 by %c126_i32_29 dim 1 : vector<8x128xf32>, i32 -> vector<8x128xf32>
    %172 = vector.broadcast %69 : f32 to vector<8x128xf32>
    %173 = arith.mulf %171, %172 : vector<8x128xf32>
    %174 = arith.addf %170, %173 : vector<8x128xf32>
    %c3_i32_30 = arith.constant 3 : i32
    %175 = arith.addi %101, %c3_i32_30 : i32
    %176 = arith.index_cast %c0_i32 : i32 to index
    %177 = arith.index_cast %175 : i32 to index
    %c0_31 = arith.constant 0 : index
    %178 = vector.load %arg5[%176, %177, %c0_31] : memref<4x20x128xf32, #tpu.memory_space<vmem>>, vector<1x8x128xf32>
    %179 = vector.shape_cast %178 : vector<1x8x128xf32> to vector<8x128xf32>
    %c2_i32_32 = arith.constant 2 : i32
    %180 = tpu.dynamic_rotate %179 by %c2_i32_32 dim 1 : vector<8x128xf32>, i32 -> vector<8x128xf32>
    %181 = vector.broadcast %72 : f32 to vector<8x128xf32>
    %182 = arith.mulf %180, %181 : vector<8x128xf32>
    %183 = arith.addf %174, %182 : vector<8x128xf32>
    %c1_i32_33 = arith.constant 1 : i32
    %184 = tpu.dynamic_rotate %179 by %c1_i32_33 dim 1 : vector<8x128xf32>, i32 -> vector<8x128xf32>
    %185 = vector.broadcast %75 : f32 to vector<8x128xf32>
    %186 = arith.mulf %184, %185 : vector<8x128xf32>
    %187 = arith.addf %183, %186 : vector<8x128xf32>
    %188 = vector.broadcast %78 : f32 to vector<8x128xf32>
    %189 = arith.mulf %179, %188 : vector<8x128xf32>
    %190 = arith.addf %187, %189 : vector<8x128xf32>
    %c127_i32_34 = arith.constant 127 : i32
    %191 = tpu.dynamic_rotate %179 by %c127_i32_34 dim 1 : vector<8x128xf32>, i32 -> vector<8x128xf32>
    %192 = vector.broadcast %81 : f32 to vector<8x128xf32>
    %193 = arith.mulf %191, %192 : vector<8x128xf32>
    %194 = arith.addf %190, %193 : vector<8x128xf32>
    %c126_i32_35 = arith.constant 126 : i32
    %195 = tpu.dynamic_rotate %179 by %c126_i32_35 dim 1 : vector<8x128xf32>, i32 -> vector<8x128xf32>
    %196 = vector.broadcast %84 : f32 to vector<8x128xf32>
    %197 = arith.mulf %195, %196 : vector<8x128xf32>
    %198 = arith.addf %194, %197 : vector<8x128xf32>
    %c4_i32_36 = arith.constant 4 : i32
    %199 = arith.addi %101, %c4_i32_36 : i32
    %200 = arith.index_cast %c0_i32 : i32 to index
    %201 = arith.index_cast %199 : i32 to index
    %c0_37 = arith.constant 0 : index
    %202 = vector.load %arg5[%200, %201, %c0_37] : memref<4x20x128xf32, #tpu.memory_space<vmem>>, vector<1x8x128xf32>
    %203 = vector.shape_cast %202 : vector<1x8x128xf32> to vector<8x128xf32>
    %c2_i32_38 = arith.constant 2 : i32
    %204 = tpu.dynamic_rotate %203 by %c2_i32_38 dim 1 : vector<8x128xf32>, i32 -> vector<8x128xf32>
    %205 = vector.broadcast %87 : f32 to vector<8x128xf32>
    %206 = arith.mulf %204, %205 : vector<8x128xf32>
    %207 = arith.addf %198, %206 : vector<8x128xf32>
    %c1_i32_39 = arith.constant 1 : i32
    %208 = tpu.dynamic_rotate %203 by %c1_i32_39 dim 1 : vector<8x128xf32>, i32 -> vector<8x128xf32>
    %209 = vector.broadcast %90 : f32 to vector<8x128xf32>
    %210 = arith.mulf %208, %209 : vector<8x128xf32>
    %211 = arith.addf %207, %210 : vector<8x128xf32>
    %212 = vector.broadcast %93 : f32 to vector<8x128xf32>
    %213 = arith.mulf %203, %212 : vector<8x128xf32>
    %214 = arith.addf %211, %213 : vector<8x128xf32>
    %c127_i32_40 = arith.constant 127 : i32
    %215 = tpu.dynamic_rotate %203 by %c127_i32_40 dim 1 : vector<8x128xf32>, i32 -> vector<8x128xf32>
    %216 = vector.broadcast %96 : f32 to vector<8x128xf32>
    %217 = arith.mulf %215, %216 : vector<8x128xf32>
    %218 = arith.addf %214, %217 : vector<8x128xf32>
    %c126_i32_41 = arith.constant 126 : i32
    %219 = tpu.dynamic_rotate %203 by %c126_i32_41 dim 1 : vector<8x128xf32>, i32 -> vector<8x128xf32>
    %220 = vector.broadcast %99 : f32 to vector<8x128xf32>
    %221 = arith.mulf %219, %220 : vector<8x128xf32>
    %222 = arith.addf %218, %221 : vector<8x128xf32>
    %223 = vector.extract_strided_slice %222 {offsets = [0, 0], sizes = [8, 16], strides = [1, 1]} : vector<8x128xf32> to vector<8x16xf32>
    %c0_42 = arith.constant 0 : index
    %224 = arith.index_cast %c0_i32 : i32 to index
    %225 = arith.index_cast %101 : i32 to index
    %c0_43 = arith.constant 0 : index
    %226 = vector.load %arg4[%c0_42, %224, %225, %c0_43] : memref<1x4x16x16xf32, #tpu.memory_space<vmem>>, vector<1x1x8x16xf32>
    %227 = vector.shape_cast %226 : vector<1x1x8x16xf32> to vector<8x16xf32>
    %228 = vector.shape_cast %223 : vector<8x16xf32> to vector<1x1x8x16xf32>
    tpu.vector_store %arg4[%c0_42, %224, %225, %c0_43], %228 {strides = array<i32>} : memref<1x4x16x16xf32, #tpu.memory_space<vmem>>, vector<1x1x8x16xf32>,
    %c1_i32_44 = arith.constant 1 : i32
    %c8_i32_45 = arith.constant 8 : i32
    %229 = arith.muli %c1_i32_44, %c8_i32_45 : i32
    %230 = tpu.assume_multiple %229, 8 : i32
    %cst_46 = arith.constant 0.000000e+00 : f32
    %231 = vector.broadcast %cst_46 : f32 to vector<8x128xf32>
    %c0_i32_47 = arith.constant 0 : i32
    %232 = arith.addi %230, %c0_i32_47 : i32
    %233 = arith.index_cast %c0_i32 : i32 to index
    %234 = arith.index_cast %232 : i32 to index
    %c0_48 = arith.constant 0 : index
    %235 = vector.load %arg5[%233, %234, %c0_48] : memref<4x20x128xf32, #tpu.memory_space<vmem>>, vector<1x8x128xf32>
    %236 = vector.shape_cast %235 : vector<1x8x128xf32> to vector<8x128xf32>
    %c2_i32_49 = arith.constant 2 : i32
    %237 = tpu.dynamic_rotate %236 by %c2_i32_49 dim 1 : vector<8x128xf32>, i32 -> vector<8x128xf32>
    %238 = vector.broadcast %27 : f32 to vector<8x128xf32>
    %239 = arith.mulf %237, %238 : vector<8x128xf32>
    %240 = arith.addf %231, %239 : vector<8x128xf32>
    %c1_i32_50 = arith.constant 1 : i32
    %241 = tpu.dynamic_rotate %236 by %c1_i32_50 dim 1 : vector<8x128xf32>, i32 -> vector<8x128xf32>
    %242 = vector.broadcast %30 : f32 to vector<8x128xf32>
    %243 = arith.mulf %241, %242 : vector<8x128xf32>
    %244 = arith.addf %240, %243 : vector<8x128xf32>
    %245 = vector.broadcast %33 : f32 to vector<8x128xf32>
    %246 = arith.mulf %236, %245 : vector<8x128xf32>
    %247 = arith.addf %244, %246 : vector<8x128xf32>
    %c127_i32_51 = arith.constant 127 : i32
    %248 = tpu.dynamic_rotate %236 by %c127_i32_51 dim 1 : vector<8x128xf32>, i32 -> vector<8x128xf32>
    %249 = vector.broadcast %36 : f32 to vector<8x128xf32>
    %250 = arith.mulf %248, %249 : vector<8x128xf32>
    %251 = arith.addf %247, %250 : vector<8x128xf32>
    %c126_i32_52 = arith.constant 126 : i32
    %252 = tpu.dynamic_rotate %236 by %c126_i32_52 dim 1 : vector<8x128xf32>, i32 -> vector<8x128xf32>
    %253 = vector.broadcast %39 : f32 to vector<8x128xf32>
    %254 = arith.mulf %252, %253 : vector<8x128xf32>
    %255 = arith.addf %251, %254 : vector<8x128xf32>
    %c1_i32_53 = arith.constant 1 : i32
    %256 = arith.addi %230, %c1_i32_53 : i32
    %257 = arith.index_cast %c0_i32 : i32 to index
    %258 = arith.index_cast %256 : i32 to index
    %c0_54 = arith.constant 0 : index
    %259 = vector.load %arg5[%257, %258, %c0_54] : memref<4x20x128xf32, #tpu.memory_space<vmem>>, vector<1x8x128xf32>
    %260 = vector.shape_cast %259 : vector<1x8x128xf32> to vector<8x128xf32>
    %c2_i32_55 = arith.constant 2 : i32
    %261 = tpu.dynamic_rotate %260 by %c2_i32_55 dim 1 : vector<8x128xf32>, i32 -> vector<8x128xf32>
    %262 = vector.broadcast %42 : f32 to vector<8x128xf32>
    %263 = arith.mulf %261, %262 : vector<8x128xf32>
    %264 = arith.addf %255, %263 : vector<8x128xf32>
    %c1_i32_56 = arith.constant 1 : i32
    %265 = tpu.dynamic_rotate %260 by %c1_i32_56 dim 1 : vector<8x128xf32>, i32 -> vector<8x128xf32>
    %266 = vector.broadcast %45 : f32 to vector<8x128xf32>
    %267 = arith.mulf %265, %266 : vector<8x128xf32>
    %268 = arith.addf %264, %267 : vector<8x128xf32>
    %269 = vector.broadcast %48 : f32 to vector<8x128xf32>
    %270 = arith.mulf %260, %269 : vector<8x128xf32>
    %271 = arith.addf %268, %270 : vector<8x128xf32>
    %c127_i32_57 = arith.constant 127 : i32
    %272 = tpu.dynamic_rotate %260 by %c127_i32_57 dim 1 : vector<8x128xf32>, i32 -> vector<8x128xf32>
    %273 = vector.broadcast %51 : f32 to vector<8x128xf32>
    %274 = arith.mulf %272, %273 : vector<8x128xf32>
    %275 = arith.addf %271, %274 : vector<8x128xf32>
    %c126_i32_58 = arith.constant 126 : i32
    %276 = tpu.dynamic_rotate %260 by %c126_i32_58 dim 1 : vector<8x128xf32>, i32 -> vector<8x128xf32>
    %277 = vector.broadcast %54 : f32 to vector<8x128xf32>
    %278 = arith.mulf %276, %277 : vector<8x128xf32>
    %279 = arith.addf %275, %278 : vector<8x128xf32>
    %c2_i32_59 = arith.constant 2 : i32
    %280 = arith.addi %230, %c2_i32_59 : i32
    %281 = arith.index_cast %c0_i32 : i32 to index
    %282 = arith.index_cast %280 : i32 to index
    %c0_60 = arith.constant 0 : index
    %283 = vector.load %arg5[%281, %282, %c0_60] : memref<4x20x128xf32, #tpu.memory_space<vmem>>, vector<1x8x128xf32>
    %284 = vector.shape_cast %283 : vector<1x8x128xf32> to vector<8x128xf32>
    %c2_i32_61 = arith.constant 2 : i32
    %285 = tpu.dynamic_rotate %284 by %c2_i32_61 dim 1 : vector<8x128xf32>, i32 -> vector<8x128xf32>
    %286 = vector.broadcast %57 : f32 to vector<8x128xf32>
    %287 = arith.mulf %285, %286 : vector<8x128xf32>
    %288 = arith.addf %279, %287 : vector<8x128xf32>
    %c1_i32_62 = arith.constant 1 : i32
    %289 = tpu.dynamic_rotate %284 by %c1_i32_62 dim 1 : vector<8x128xf32>, i32 -> vector<8x128xf32>
    %290 = vector.broadcast %60 : f32 to vector<8x128xf32>
    %291 = arith.mulf %289, %290 : vector<8x128xf32>
    %292 = arith.addf %288, %291 : vector<8x128xf32>
    %293 = vector.broadcast %63 : f32 to vector<8x128xf32>
    %294 = arith.mulf %284, %293 : vector<8x128xf32>
    %295 = arith.addf %292, %294 : vector<8x128xf32>
    %c127_i32_63 = arith.constant 127 : i32
    %296 = tpu.dynamic_rotate %284 by %c127_i32_63 dim 1 : vector<8x128xf32>, i32 -> vector<8x128xf32>
    %297 = vector.broadcast %66 : f32 to vector<8x128xf32>
    %298 = arith.mulf %296, %297 : vector<8x128xf32>
    %299 = arith.addf %295, %298 : vector<8x128xf32>
    %c126_i32_64 = arith.constant 126 : i32
    %300 = tpu.dynamic_rotate %284 by %c126_i32_64 dim 1 : vector<8x128xf32>, i32 -> vector<8x128xf32>
    %301 = vector.broadcast %69 : f32 to vector<8x128xf32>
    %302 = arith.mulf %300, %301 : vector<8x128xf32>
    %303 = arith.addf %299, %302 : vector<8x128xf32>
    %c3_i32_65 = arith.constant 3 : i32
    %304 = arith.addi %230, %c3_i32_65 : i32
    %305 = arith.index_cast %c0_i32 : i32 to index
    %306 = arith.index_cast %304 : i32 to index
    %c0_66 = arith.constant 0 : index
    %307 = vector.load %arg5[%305, %306, %c0_66] : memref<4x20x128xf32, #tpu.memory_space<vmem>>, vector<1x8x128xf32>
    %308 = vector.shape_cast %307 : vector<1x8x128xf32> to vector<8x128xf32>
    %c2_i32_67 = arith.constant 2 : i32
    %309 = tpu.dynamic_rotate %308 by %c2_i32_67 dim 1 : vector<8x128xf32>, i32 -> vector<8x128xf32>
    %310 = vector.broadcast %72 : f32 to vector<8x128xf32>
    %311 = arith.mulf %309, %310 : vector<8x128xf32>
    %312 = arith.addf %303, %311 : vector<8x128xf32>
    %c1_i32_68 = arith.constant 1 : i32
    %313 = tpu.dynamic_rotate %308 by %c1_i32_68 dim 1 : vector<8x128xf32>, i32 -> vector<8x128xf32>
    %314 = vector.broadcast %75 : f32 to vector<8x128xf32>
    %315 = arith.mulf %313, %314 : vector<8x128xf32>
    %316 = arith.addf %312, %315 : vector<8x128xf32>
    %317 = vector.broadcast %78 : f32 to vector<8x128xf32>
    %318 = arith.mulf %308, %317 : vector<8x128xf32>
    %319 = arith.addf %316, %318 : vector<8x128xf32>
    %c127_i32_69 = arith.constant 127 : i32
    %320 = tpu.dynamic_rotate %308 by %c127_i32_69 dim 1 : vector<8x128xf32>, i32 -> vector<8x128xf32>
    %321 = vector.broadcast %81 : f32 to vector<8x128xf32>
    %322 = arith.mulf %320, %321 : vector<8x128xf32>
    %323 = arith.addf %319, %322 : vector<8x128xf32>
    %c126_i32_70 = arith.constant 126 : i32
    %324 = tpu.dynamic_rotate %308 by %c126_i32_70 dim 1 : vector<8x128xf32>, i32 -> vector<8x128xf32>
    %325 = vector.broadcast %84 : f32 to vector<8x128xf32>
    %326 = arith.mulf %324, %325 : vector<8x128xf32>
    %327 = arith.addf %323, %326 : vector<8x128xf32>
    %c4_i32_71 = arith.constant 4 : i32
    %328 = arith.addi %230, %c4_i32_71 : i32
    %329 = arith.index_cast %c0_i32 : i32 to index
    %330 = arith.index_cast %328 : i32 to index
    %c0_72 = arith.constant 0 : index
    %331 = vector.load %arg5[%329, %330, %c0_72] : memref<4x20x128xf32, #tpu.memory_space<vmem>>, vector<1x8x128xf32>
    %332 = vector.shape_cast %331 : vector<1x8x128xf32> to vector<8x128xf32>
    %c2_i32_73 = arith.constant 2 : i32
    %333 = tpu.dynamic_rotate %332 by %c2_i32_73 dim 1 : vector<8x128xf32>, i32 -> vector<8x128xf32>
    %334 = vector.broadcast %87 : f32 to vector<8x128xf32>
    %335 = arith.mulf %333, %334 : vector<8x128xf32>
    %336 = arith.addf %327, %335 : vector<8x128xf32>
    %c1_i32_74 = arith.constant 1 : i32
    %337 = tpu.dynamic_rotate %332 by %c1_i32_74 dim 1 : vector<8x128xf32>, i32 -> vector<8x128xf32>
    %338 = vector.broadcast %90 : f32 to vector<8x128xf32>
    %339 = arith.mulf %337, %338 : vector<8x128xf32>
    %340 = arith.addf %336, %339 : vector<8x128xf32>
    %341 = vector.broadcast %93 : f32 to vector<8x128xf32>
    %342 = arith.mulf %332, %341 : vector<8x128xf32>
    %343 = arith.addf %340, %342 : vector<8x128xf32>
    %c127_i32_75 = arith.constant 127 : i32
    %344 = tpu.dynamic_rotate %332 by %c127_i32_75 dim 1 : vector<8x128xf32>, i32 -> vector<8x128xf32>
    %345 = vector.broadcast %96 : f32 to vector<8x128xf32>
    %346 = arith.mulf %344, %345 : vector<8x128xf32>
    %347 = arith.addf %343, %346 : vector<8x128xf32>
    %c126_i32_76 = arith.constant 126 : i32
    %348 = tpu.dynamic_rotate %332 by %c126_i32_76 dim 1 : vector<8x128xf32>, i32 -> vector<8x128xf32>
    %349 = vector.broadcast %99 : f32 to vector<8x128xf32>
    %350 = arith.mulf %348, %349 : vector<8x128xf32>
    %351 = arith.addf %347, %350 : vector<8x128xf32>
    %352 = vector.extract_strided_slice %351 {offsets = [0, 0], sizes = [8, 16], strides = [1, 1]} : vector<8x128xf32> to vector<8x16xf32>
    %c0_77 = arith.constant 0 : index
    %353 = arith.index_cast %c0_i32 : i32 to index
    %354 = arith.index_cast %230 : i32 to index
    %c0_78 = arith.constant 0 : index
    %355 = vector.load %arg4[%c0_77, %353, %354, %c0_78] : memref<1x4x16x16xf32, #tpu.memory_space<vmem>>, vector<1x1x8x16xf32>
    %356 = vector.shape_cast %355 : vector<1x1x8x16xf32> to vector<8x16xf32>
    %357 = vector.shape_cast %352 : vector<8x16xf32> to vector<1x1x8x16xf32>
    tpu.vector_store %arg4[%c0_77, %353, %354, %c0_78], %357 {strides = array<i32>} : memref<1x4x16x16xf32, #tpu.memory_space<vmem>>, vector<1x1x8x16xf32>,
    %c2_i32_79 = arith.constant 2 : i32
    %c1_i32_80 = arith.constant 1 : i32
    %cst_81 = arith.constant 0.000000e+00 : f32
    %358 = vector.broadcast %cst_81 : f32 to vector<2x128xf32>
    %359 = arith.index_cast %c1_i32_80 : i32 to index
    %c0_82 = arith.constant 0 : index
    %c0_83 = arith.constant 0 : index
    %360 = vector.load %arg5[%359, %c0_82, %c0_83] : memref<4x20x128xf32, #tpu.memory_space<vmem>>, vector<1x2x128xf32>
    %361 = vector.shape_cast %360 : vector<1x2x128xf32> to vector<2x128xf32>
    %362 = vector.shape_cast %358 : vector<2x128xf32> to vector<1x2x128xf32>
    tpu.vector_store %arg5[%359, %c0_82, %c0_83], %362 {strides = array<i32>} : memref<4x20x128xf32, #tpu.memory_space<vmem>>, vector<1x2x128xf32>,
    %cst_84 = arith.constant 0.000000e+00 : f32
    %363 = vector.broadcast %cst_84 : f32 to vector<2x128xf32>
    %364 = arith.index_cast %c1_i32_80 : i32 to index
    %c18_85 = arith.constant 18 : index
    %c0_86 = arith.constant 0 : index
    %365 = vector.load %arg5[%364, %c18_85, %c0_86] : memref<4x20x128xf32, #tpu.memory_space<vmem>>, vector<1x2x128xf32>
    %366 = vector.shape_cast %365 : vector<1x2x128xf32> to vector<2x128xf32>
    %367 = vector.shape_cast %363 : vector<2x128xf32> to vector<1x2x128xf32>
    tpu.vector_store %arg5[%364, %c18_85, %c0_86], %367 {strides = array<i32>} : memref<4x20x128xf32, #tpu.memory_space<vmem>>, vector<1x2x128xf32>,
    %cst_87 = arith.constant 0.000000e+00 : f32
    %368 = vector.broadcast %cst_87 : f32 to vector<20x112xf32>
    %369 = arith.index_cast %c1_i32_80 : i32 to index
    %c0_88 = arith.constant 0 : index
    %c16_89 = arith.constant 16 : index
    %370 = vector.load %arg5[%369, %c0_88, %c16_89] : memref<4x20x128xf32, #tpu.memory_space<vmem>>, vector<1x20x112xf32>
    %371 = vector.shape_cast %370 : vector<1x20x112xf32> to vector<20x112xf32>
    %372 = vector.shape_cast %368 : vector<20x112xf32> to vector<1x20x112xf32>
    tpu.vector_store %arg5[%369, %c0_88, %c16_89], %372 {strides = array<i32>} : memref<4x20x128xf32, #tpu.memory_space<vmem>>, vector<1x20x112xf32>,
    %c0_90 = arith.constant 0 : index
    %373 = arith.index_cast %c1_i32_80 : i32 to index
    %c0_91 = arith.constant 0 : index
    %c0_92 = arith.constant 0 : index
    %374 = vector.load %arg2[%c0_90, %373, %c0_91, %c0_92] : memref<1x4x16x16xf32, #tpu.memory_space<vmem>>, vector<1x1x16x16xf32>
    %375 = vector.shape_cast %374 : vector<1x1x16x16xf32> to vector<16x16xf32>
    %376 = arith.index_cast %c1_i32_80 : i32 to index
    %c2_93 = arith.constant 2 : index
    %c0_94 = arith.constant 0 : index
    %377 = vector.load %arg5[%376, %c2_93, %c0_94] : memref<4x20x128xf32, #tpu.memory_space<vmem>>, vector<1x16x16xf32>
    %378 = vector.shape_cast %377 : vector<1x16x16xf32> to vector<16x16xf32>
    %379 = vector.shape_cast %375 : vector<16x16xf32> to vector<1x16x16xf32>
    tpu.vector_store %arg5[%376, %c2_93, %c0_94], %379 {strides = array<i32>} : memref<4x20x128xf32, #tpu.memory_space<vmem>>, vector<1x16x16xf32>,
    %380 = arith.addi %0, %c1_i32_80 : i32
    %c25_i32_95 = arith.constant 25 : i32
    %381 = arith.muli %380, %c25_i32_95 : i32
    %c0_i32_96 = arith.constant 0 : i32
    %382 = arith.addi %381, %c0_i32_96 : i32
    %383 = arith.index_cast %382 : i32 to index
    %384 = memref.load %arg3[%383] : memref<100xf32, #tpu.memory_space<smem>>
    %c1_i32_97 = arith.constant 1 : i32
    %385 = arith.addi %381, %c1_i32_97 : i32
    %386 = arith.index_cast %385 : i32 to index
    %387 = memref.load %arg3[%386] : memref<100xf32, #tpu.memory_space<smem>>
    %c2_i32_98 = arith.constant 2 : i32
    %388 = arith.addi %381, %c2_i32_98 : i32
    %389 = arith.index_cast %388 : i32 to index
    %390 = memref.load %arg3[%389] : memref<100xf32, #tpu.memory_space<smem>>
    %c3_i32_99 = arith.constant 3 : i32
    %391 = arith.addi %381, %c3_i32_99 : i32
    %392 = arith.index_cast %391 : i32 to index
    %393 = memref.load %arg3[%392] : memref<100xf32, #tpu.memory_space<smem>>
    %c4_i32_100 = arith.constant 4 : i32
    %394 = arith.addi %381, %c4_i32_100 : i32
    %395 = arith.index_cast %394 : i32 to index
    %396 = memref.load %arg3[%395] : memref<100xf32, #tpu.memory_space<smem>>
    %c5_i32_101 = arith.constant 5 : i32
    %397 = arith.addi %381, %c5_i32_101 : i32
    %398 = arith.index_cast %397 : i32 to index
    %399 = memref.load %arg3[%398] : memref<100xf32, #tpu.memory_space<smem>>
    %c6_i32_102 = arith.constant 6 : i32
    %400 = arith.addi %381, %c6_i32_102 : i32
    %401 = arith.index_cast %400 : i32 to index
    %402 = memref.load %arg3[%401] : memref<100xf32, #tpu.memory_space<smem>>
    %c7_i32_103 = arith.constant 7 : i32
    %403 = arith.addi %381, %c7_i32_103 : i32
    %404 = arith.index_cast %403 : i32 to index
    %405 = memref.load %arg3[%404] : memref<100xf32, #tpu.memory_space<smem>>
    %c8_i32_104 = arith.constant 8 : i32
    %406 = arith.addi %381, %c8_i32_104 : i32
    %407 = arith.index_cast %406 : i32 to index
    %408 = memref.load %arg3[%407] : memref<100xf32, #tpu.memory_space<smem>>
    %c9_i32_105 = arith.constant 9 : i32
    %409 = arith.addi %381, %c9_i32_105 : i32
    %410 = arith.index_cast %409 : i32 to index
    %411 = memref.load %arg3[%410] : memref<100xf32, #tpu.memory_space<smem>>
    %c10_i32_106 = arith.constant 10 : i32
    %412 = arith.addi %381, %c10_i32_106 : i32
    %413 = arith.index_cast %412 : i32 to index
    %414 = memref.load %arg3[%413] : memref<100xf32, #tpu.memory_space<smem>>
    %c11_i32_107 = arith.constant 11 : i32
    %415 = arith.addi %381, %c11_i32_107 : i32
    %416 = arith.index_cast %415 : i32 to index
    %417 = memref.load %arg3[%416] : memref<100xf32, #tpu.memory_space<smem>>
    %c12_i32_108 = arith.constant 12 : i32
    %418 = arith.addi %381, %c12_i32_108 : i32
    %419 = arith.index_cast %418 : i32 to index
    %420 = memref.load %arg3[%419] : memref<100xf32, #tpu.memory_space<smem>>
    %c13_i32_109 = arith.constant 13 : i32
    %421 = arith.addi %381, %c13_i32_109 : i32
    %422 = arith.index_cast %421 : i32 to index
    %423 = memref.load %arg3[%422] : memref<100xf32, #tpu.memory_space<smem>>
    %c14_i32_110 = arith.constant 14 : i32
    %424 = arith.addi %381, %c14_i32_110 : i32
    %425 = arith.index_cast %424 : i32 to index
    %426 = memref.load %arg3[%425] : memref<100xf32, #tpu.memory_space<smem>>
    %c15_i32_111 = arith.constant 15 : i32
    %427 = arith.addi %381, %c15_i32_111 : i32
    %428 = arith.index_cast %427 : i32 to index
    %429 = memref.load %arg3[%428] : memref<100xf32, #tpu.memory_space<smem>>
    %c16_i32_112 = arith.constant 16 : i32
    %430 = arith.addi %381, %c16_i32_112 : i32
    %431 = arith.index_cast %430 : i32 to index
    %432 = memref.load %arg3[%431] : memref<100xf32, #tpu.memory_space<smem>>
    %c17_i32_113 = arith.constant 17 : i32
    %433 = arith.addi %381, %c17_i32_113 : i32
    %434 = arith.index_cast %433 : i32 to index
    %435 = memref.load %arg3[%434] : memref<100xf32, #tpu.memory_space<smem>>
    %c18_i32_114 = arith.constant 18 : i32
    %436 = arith.addi %381, %c18_i32_114 : i32
    %437 = arith.index_cast %436 : i32 to index
    %438 = memref.load %arg3[%437] : memref<100xf32, #tpu.memory_space<smem>>
    %c19_i32_115 = arith.constant 19 : i32
    %439 = arith.addi %381, %c19_i32_115 : i32
    %440 = arith.index_cast %439 : i32 to index
    %441 = memref.load %arg3[%440] : memref<100xf32, #tpu.memory_space<smem>>
    %c20_i32_116 = arith.constant 20 : i32
    %442 = arith.addi %381, %c20_i32_116 : i32
    %443 = arith.index_cast %442 : i32 to index
    %444 = memref.load %arg3[%443] : memref<100xf32, #tpu.memory_space<smem>>
    %c21_i32_117 = arith.constant 21 : i32
    %445 = arith.addi %381, %c21_i32_117 : i32
    %446 = arith.index_cast %445 : i32 to index
    %447 = memref.load %arg3[%446] : memref<100xf32, #tpu.memory_space<smem>>
    %c22_i32_118 = arith.constant 22 : i32
    %448 = arith.addi %381, %c22_i32_118 : i32
    %449 = arith.index_cast %448 : i32 to index
    %450 = memref.load %arg3[%449] : memref<100xf32, #tpu.memory_space<smem>>
    %c23_i32_119 = arith.constant 23 : i32
    %451 = arith.addi %381, %c23_i32_119 : i32
    %452 = arith.index_cast %451 : i32 to index
    %453 = memref.load %arg3[%452] : memref<100xf32, #tpu.memory_space<smem>>
    %c24_i32_120 = arith.constant 24 : i32
    %454 = arith.addi %381, %c24_i32_120 : i32
    %455 = arith.index_cast %454 : i32 to index
    %456 = memref.load %arg3[%455] : memref<100xf32, #tpu.memory_space<smem>>
    %c0_i32_121 = arith.constant 0 : i32
    %c8_i32_122 = arith.constant 8 : i32
    %457 = arith.muli %c0_i32_121, %c8_i32_122 : i32
    %458 = tpu.assume_multiple %457, 8 : i32
    %cst_123 = arith.constant 0.000000e+00 : f32
    %459 = vector.broadcast %cst_123 : f32 to vector<8x128xf32>
    %c0_i32_124 = arith.constant 0 : i32
    %460 = arith.addi %458, %c0_i32_124 : i32
    %461 = arith.index_cast %c1_i32_80 : i32 to index
    %462 = arith.index_cast %460 : i32 to index
    %c0_125 = arith.constant 0 : index
    %463 = vector.load %arg5[%461, %462, %c0_125] : memref<4x20x128xf32, #tpu.memory_space<vmem>>, vector<1x8x128xf32>
    %464 = vector.shape_cast %463 : vector<1x8x128xf32> to vector<8x128xf32>
    %c2_i32_126 = arith.constant 2 : i32
    %465 = tpu.dynamic_rotate %464 by %c2_i32_126 dim 1 : vector<8x128xf32>, i32 -> vector<8x128xf32>
    %466 = vector.broadcast %384 : f32 to vector<8x128xf32>
    %467 = arith.mulf %465, %466 : vector<8x128xf32>
    %468 = arith.addf %459, %467 : vector<8x128xf32>
    %c1_i32_127 = arith.constant 1 : i32
    %469 = tpu.dynamic_rotate %464 by %c1_i32_127 dim 1 : vector<8x128xf32>, i32 -> vector<8x128xf32>
    %470 = vector.broadcast %387 : f32 to vector<8x128xf32>
    %471 = arith.mulf %469, %470 : vector<8x128xf32>
    %472 = arith.addf %468, %471 : vector<8x128xf32>
    %473 = vector.broadcast %390 : f32 to vector<8x128xf32>
    %474 = arith.mulf %464, %473 : vector<8x128xf32>
    %475 = arith.addf %472, %474 : vector<8x128xf32>
    %c127_i32_128 = arith.constant 127 : i32
    %476 = tpu.dynamic_rotate %464 by %c127_i32_128 dim 1 : vector<8x128xf32>, i32 -> vector<8x128xf32>
    %477 = vector.broadcast %393 : f32 to vector<8x128xf32>
    %478 = arith.mulf %476, %477 : vector<8x128xf32>
    %479 = arith.addf %475, %478 : vector<8x128xf32>
    %c126_i32_129 = arith.constant 126 : i32
    %480 = tpu.dynamic_rotate %464 by %c126_i32_129 dim 1 : vector<8x128xf32>, i32 -> vector<8x128xf32>
    %481 = vector.broadcast %396 : f32 to vector<8x128xf32>
    %482 = arith.mulf %480, %481 : vector<8x128xf32>
    %483 = arith.addf %479, %482 : vector<8x128xf32>
    %c1_i32_130 = arith.constant 1 : i32
    %484 = arith.addi %458, %c1_i32_130 : i32
    %485 = arith.index_cast %c1_i32_80 : i32 to index
    %486 = arith.index_cast %484 : i32 to index
    %c0_131 = arith.constant 0 : index
    %487 = vector.load %arg5[%485, %486, %c0_131] : memref<4x20x128xf32, #tpu.memory_space<vmem>>, vector<1x8x128xf32>
    %488 = vector.shape_cast %487 : vector<1x8x128xf32> to vector<8x128xf32>
    %c2_i32_132 = arith.constant 2 : i32
    %489 = tpu.dynamic_rotate %488 by %c2_i32_132 dim 1 : vector<8x128xf32>, i32 -> vector<8x128xf32>
    %490 = vector.broadcast %399 : f32 to vector<8x128xf32>
    %491 = arith.mulf %489, %490 : vector<8x128xf32>
    %492 = arith.addf %483, %491 : vector<8x128xf32>
    %c1_i32_133 = arith.constant 1 : i32
    %493 = tpu.dynamic_rotate %488 by %c1_i32_133 dim 1 : vector<8x128xf32>, i32 -> vector<8x128xf32>
    %494 = vector.broadcast %402 : f32 to vector<8x128xf32>
    %495 = arith.mulf %493, %494 : vector<8x128xf32>
    %496 = arith.addf %492, %495 : vector<8x128xf32>
    %497 = vector.broadcast %405 : f32 to vector<8x128xf32>
    %498 = arith.mulf %488, %497 : vector<8x128xf32>
    %499 = arith.addf %496, %498 : vector<8x128xf32>
    %c127_i32_134 = arith.constant 127 : i32
    %500 = tpu.dynamic_rotate %488 by %c127_i32_134 dim 1 : vector<8x128xf32>, i32 -> vector<8x128xf32>
    %501 = vector.broadcast %408 : f32 to vector<8x128xf32>
    %502 = arith.mulf %500, %501 : vector<8x128xf32>
    %503 = arith.addf %499, %502 : vector<8x128xf32>
    %c126_i32_135 = arith.constant 126 : i32
    %504 = tpu.dynamic_rotate %488 by %c126_i32_135 dim 1 : vector<8x128xf32>, i32 -> vector<8x128xf32>
    %505 = vector.broadcast %411 : f32 to vector<8x128xf32>
    %506 = arith.mulf %504, %505 : vector<8x128xf32>
    %507 = arith.addf %503, %506 : vector<8x128xf32>
    %c2_i32_136 = arith.constant 2 : i32
    %508 = arith.addi %458, %c2_i32_136 : i32
    %509 = arith.index_cast %c1_i32_80 : i32 to index
    %510 = arith.index_cast %508 : i32 to index
    %c0_137 = arith.constant 0 : index
    %511 = vector.load %arg5[%509, %510, %c0_137] : memref<4x20x128xf32, #tpu.memory_space<vmem>>, vector<1x8x128xf32>
    %512 = vector.shape_cast %511 : vector<1x8x128xf32> to vector<8x128xf32>
    %c2_i32_138 = arith.constant 2 : i32
    %513 = tpu.dynamic_rotate %512 by %c2_i32_138 dim 1 : vector<8x128xf32>, i32 -> vector<8x128xf32>
    %514 = vector.broadcast %414 : f32 to vector<8x128xf32>
    %515 = arith.mulf %513, %514 : vector<8x128xf32>
    %516 = arith.addf %507, %515 : vector<8x128xf32>
    %c1_i32_139 = arith.constant 1 : i32
    %517 = tpu.dynamic_rotate %512 by %c1_i32_139 dim 1 : vector<8x128xf32>, i32 -> vector<8x128xf32>
    %518 = vector.broadcast %417 : f32 to vector<8x128xf32>
    %519 = arith.mulf %517, %518 : vector<8x128xf32>
    %520 = arith.addf %516, %519 : vector<8x128xf32>
    %521 = vector.broadcast %420 : f32 to vector<8x128xf32>
    %522 = arith.mulf %512, %521 : vector<8x128xf32>
    %523 = arith.addf %520, %522 : vector<8x128xf32>
    %c127_i32_140 = arith.constant 127 : i32
    %524 = tpu.dynamic_rotate %512 by %c127_i32_140 dim 1 : vector<8x128xf32>, i32 -> vector<8x128xf32>
    %525 = vector.broadcast %423 : f32 to vector<8x128xf32>
    %526 = arith.mulf %524, %525 : vector<8x128xf32>
    %527 = arith.addf %523, %526 : vector<8x128xf32>
    %c126_i32_141 = arith.constant 126 : i32
    %528 = tpu.dynamic_rotate %512 by %c126_i32_141 dim 1 : vector<8x128xf32>, i32 -> vector<8x128xf32>
    %529 = vector.broadcast %426 : f32 to vector<8x128xf32>
    %530 = arith.mulf %528, %529 : vector<8x128xf32>
    %531 = arith.addf %527, %530 : vector<8x128xf32>
    %c3_i32_142 = arith.constant 3 : i32
    %532 = arith.addi %458, %c3_i32_142 : i32
    %533 = arith.index_cast %c1_i32_80 : i32 to index
    %534 = arith.index_cast %532 : i32 to index
    %c0_143 = arith.constant 0 : index
    %535 = vector.load %arg5[%533, %534, %c0_143] : memref<4x20x128xf32, #tpu.memory_space<vmem>>, vector<1x8x128xf32>
    %536 = vector.shape_cast %535 : vector<1x8x128xf32> to vector<8x128xf32>
    %c2_i32_144 = arith.constant 2 : i32
    %537 = tpu.dynamic_rotate %536 by %c2_i32_144 dim 1 : vector<8x128xf32>, i32 -> vector<8x128xf32>
    %538 = vector.broadcast %429 : f32 to vector<8x128xf32>
    %539 = arith.mulf %537, %538 : vector<8x128xf32>
    %540 = arith.addf %531, %539 : vector<8x128xf32>
    %c1_i32_145 = arith.constant 1 : i32
    %541 = tpu.dynamic_rotate %536 by %c1_i32_145 dim 1 : vector<8x128xf32>, i32 -> vector<8x128xf32>
    %542 = vector.broadcast %432 : f32 to vector<8x128xf32>
    %543 = arith.mulf %541, %542 : vector<8x128xf32>
    %544 = arith.addf %540, %543 : vector<8x128xf32>
    %545 = vector.broadcast %435 : f32 to vector<8x128xf32>
    %546 = arith.mulf %536, %545 : vector<8x128xf32>
    %547 = arith.addf %544, %546 : vector<8x128xf32>
    %c127_i32_146 = arith.constant 127 : i32
    %548 = tpu.dynamic_rotate %536 by %c127_i32_146 dim 1 : vector<8x128xf32>, i32 -> vector<8x128xf32>
    %549 = vector.broadcast %438 : f32 to vector<8x128xf32>
    %550 = arith.mulf %548, %549 : vector<8x128xf32>
    %551 = arith.addf %547, %550 : vector<8x128xf32>
    %c126_i32_147 = arith.constant 126 : i32
    %552 = tpu.dynamic_rotate %536 by %c126_i32_147 dim 1 : vector<8x128xf32>, i32 -> vector<8x128xf32>
    %553 = vector.broadcast %441 : f32 to vector<8x128xf32>
    %554 = arith.mulf %552, %553 : vector<8x128xf32>
    %555 = arith.addf %551, %554 : vector<8x128xf32>
    %c4_i32_148 = arith.constant 4 : i32
    %556 = arith.addi %458, %c4_i32_148 : i32
    %557 = arith.index_cast %c1_i32_80 : i32 to index
    %558 = arith.index_cast %556 : i32 to index
    %c0_149 = arith.constant 0 : index
    %559 = vector.load %arg5[%557, %558, %c0_149] : memref<4x20x128xf32, #tpu.memory_space<vmem>>, vector<1x8x128xf32>
    %560 = vector.shape_cast %559 : vector<1x8x128xf32> to vector<8x128xf32>
    %c2_i32_150 = arith.constant 2 : i32
    %561 = tpu.dynamic_rotate %560 by %c2_i32_150 dim 1 : vector<8x128xf32>, i32 -> vector<8x128xf32>
    %562 = vector.broadcast %444 : f32 to vector<8x128xf32>
    %563 = arith.mulf %561, %562 : vector<8x128xf32>
    %564 = arith.addf %555, %563 : vector<8x128xf32>
    %c1_i32_151 = arith.constant 1 : i32
    %565 = tpu.dynamic_rotate %560 by %c1_i32_151 dim 1 : vector<8x128xf32>, i32 -> vector<8x128xf32>
    %566 = vector.broadcast %447 : f32 to vector<8x128xf32>
    %567 = arith.mulf %565, %566 : vector<8x128xf32>
    %568 = arith.addf %564, %567 : vector<8x128xf32>
    %569 = vector.broadcast %450 : f32 to vector<8x128xf32>
    %570 = arith.mulf %560, %569 : vector<8x128xf32>
    %571 = arith.addf %568, %570 : vector<8x128xf32>
    %c127_i32_152 = arith.constant 127 : i32
    %572 = tpu.dynamic_rotate %560 by %c127_i32_152 dim 1 : vector<8x128xf32>, i32 -> vector<8x128xf32>
    %573 = vector.broadcast %453 : f32 to vector<8x128xf32>
    %574 = arith.mulf %572, %573 : vector<8x128xf32>
    %575 = arith.addf %571, %574 : vector<8x128xf32>
    %c126_i32_153 = arith.constant 126 : i32
    %576 = tpu.dynamic_rotate %560 by %c126_i32_153 dim 1 : vector<8x128xf32>, i32 -> vector<8x128xf32>
    %577 = vector.broadcast %456 : f32 to vector<8x128xf32>
    %578 = arith.mulf %576, %577 : vector<8x128xf32>
    %579 = arith.addf %575, %578 : vector<8x128xf32>
    %580 = vector.extract_strided_slice %579 {offsets = [0, 0], sizes = [8, 16], strides = [1, 1]} : vector<8x128xf32> to vector<8x16xf32>
    %c0_154 = arith.constant 0 : index
    %581 = arith.index_cast %c1_i32_80 : i32 to index
    %582 = arith.index_cast %458 : i32 to index
    %c0_155 = arith.constant 0 : index
    %583 = vector.load %arg4[%c0_154, %581, %582, %c0_155] : memref<1x4x16x16xf32, #tpu.memory_space<vmem>>, vector<1x1x8x16xf32>
    %584 = vector.shape_cast %583 : vector<1x1x8x16xf32> to vector<8x16xf32>
    %585 = vector.shape_cast %580 : vector<8x16xf32> to vector<1x1x8x16xf32>
    tpu.vector_store %arg4[%c0_154, %581, %582, %c0_155], %585 {strides = array<i32>} : memref<1x4x16x16xf32, #tpu.memory_space<vmem>>, vector<1x1x8x16xf32>,
    %c1_i32_156 = arith.constant 1 : i32
    %c8_i32_157 = arith.constant 8 : i32
    %586 = arith.muli %c1_i32_156, %c8_i32_157 : i32
    %587 = tpu.assume_multiple %586, 8 : i32
    %cst_158 = arith.constant 0.000000e+00 : f32
    %588 = vector.broadcast %cst_158 : f32 to vector<8x128xf32>
    %c0_i32_159 = arith.constant 0 : i32
    %589 = arith.addi %587, %c0_i32_159 : i32
    %590 = arith.index_cast %c1_i32_80 : i32 to index
    %591 = arith.index_cast %589 : i32 to index
    %c0_160 = arith.constant 0 : index
    %592 = vector.load %arg5[%590, %591, %c0_160] : memref<4x20x128xf32, #tpu.memory_space<vmem>>, vector<1x8x128xf32>
    %593 = vector.shape_cast %592 : vector<1x8x128xf32> to vector<8x128xf32>
    %c2_i32_161 = arith.constant 2 : i32
    %594 = tpu.dynamic_rotate %593 by %c2_i32_161 dim 1 : vector<8x128xf32>, i32 -> vector<8x128xf32>
    %595 = vector.broadcast %384 : f32 to vector<8x128xf32>
    %596 = arith.mulf %594, %595 : vector<8x128xf32>
    %597 = arith.addf %588, %596 : vector<8x128xf32>
    %c1_i32_162 = arith.constant 1 : i32
    %598 = tpu.dynamic_rotate %593 by %c1_i32_162 dim 1 : vector<8x128xf32>, i32 -> vector<8x128xf32>
    %599 = vector.broadcast %387 : f32 to vector<8x128xf32>
    %600 = arith.mulf %598, %599 : vector<8x128xf32>
    %601 = arith.addf %597, %600 : vector<8x128xf32>
    %602 = vector.broadcast %390 : f32 to vector<8x128xf32>
    %603 = arith.mulf %593, %602 : vector<8x128xf32>
    %604 = arith.addf %601, %603 : vector<8x128xf32>
    %c127_i32_163 = arith.constant 127 : i32
    %605 = tpu.dynamic_rotate %593 by %c127_i32_163 dim 1 : vector<8x128xf32>, i32 -> vector<8x128xf32>
    %606 = vector.broadcast %393 : f32 to vector<8x128xf32>
    %607 = arith.mulf %605, %606 : vector<8x128xf32>
    %608 = arith.addf %604, %607 : vector<8x128xf32>
    %c126_i32_164 = arith.constant 126 : i32
    %609 = tpu.dynamic_rotate %593 by %c126_i32_164 dim 1 : vector<8x128xf32>, i32 -> vector<8x128xf32>
    %610 = vector.broadcast %396 : f32 to vector<8x128xf32>
    %611 = arith.mulf %609, %610 : vector<8x128xf32>
    %612 = arith.addf %608, %611 : vector<8x128xf32>
    %c1_i32_165 = arith.constant 1 : i32
    %613 = arith.addi %587, %c1_i32_165 : i32
    %614 = arith.index_cast %c1_i32_80 : i32 to index
    %615 = arith.index_cast %613 : i32 to index
    %c0_166 = arith.constant 0 : index
    %616 = vector.load %arg5[%614, %615, %c0_166] : memref<4x20x128xf32, #tpu.memory_space<vmem>>, vector<1x8x128xf32>
    %617 = vector.shape_cast %616 : vector<1x8x128xf32> to vector<8x128xf32>
    %c2_i32_167 = arith.constant 2 : i32
    %618 = tpu.dynamic_rotate %617 by %c2_i32_167 dim 1 : vector<8x128xf32>, i32 -> vector<8x128xf32>
    %619 = vector.broadcast %399 : f32 to vector<8x128xf32>
    %620 = arith.mulf %618, %619 : vector<8x128xf32>
    %621 = arith.addf %612, %620 : vector<8x128xf32>
    %c1_i32_168 = arith.constant 1 : i32
    %622 = tpu.dynamic_rotate %617 by %c1_i32_168 dim 1 : vector<8x128xf32>, i32 -> vector<8x128xf32>
    %623 = vector.broadcast %402 : f32 to vector<8x128xf32>
    %624 = arith.mulf %622, %623 : vector<8x128xf32>
    %625 = arith.addf %621, %624 : vector<8x128xf32>
    %626 = vector.broadcast %405 : f32 to vector<8x128xf32>
    %627 = arith.mulf %617, %626 : vector<8x128xf32>
    %628 = arith.addf %625, %627 : vector<8x128xf32>
    %c127_i32_169 = arith.constant 127 : i32
    %629 = tpu.dynamic_rotate %617 by %c127_i32_169 dim 1 : vector<8x128xf32>, i32 -> vector<8x128xf32>
    %630 = vector.broadcast %408 : f32 to vector<8x128xf32>
    %631 = arith.mulf %629, %630 : vector<8x128xf32>
    %632 = arith.addf %628, %631 : vector<8x128xf32>
    %c126_i32_170 = arith.constant 126 : i32
    %633 = tpu.dynamic_rotate %617 by %c126_i32_170 dim 1 : vector<8x128xf32>, i32 -> vector<8x128xf32>
    %634 = vector.broadcast %411 : f32 to vector<8x128xf32>
    %635 = arith.mulf %633, %634 : vector<8x128xf32>
    %636 = arith.addf %632, %635 : vector<8x128xf32>
    %c2_i32_171 = arith.constant 2 : i32
    %637 = arith.addi %587, %c2_i32_171 : i32
    %638 = arith.index_cast %c1_i32_80 : i32 to index
    %639 = arith.index_cast %637 : i32 to index
    %c0_172 = arith.constant 0 : index
    %640 = vector.load %arg5[%638, %639, %c0_172] : memref<4x20x128xf32, #tpu.memory_space<vmem>>, vector<1x8x128xf32>
    %641 = vector.shape_cast %640 : vector<1x8x128xf32> to vector<8x128xf32>
    %c2_i32_173 = arith.constant 2 : i32
    %642 = tpu.dynamic_rotate %641 by %c2_i32_173 dim 1 : vector<8x128xf32>, i32 -> vector<8x128xf32>
    %643 = vector.broadcast %414 : f32 to vector<8x128xf32>
    %644 = arith.mulf %642, %643 : vector<8x128xf32>
    %645 = arith.addf %636, %644 : vector<8x128xf32>
    %c1_i32_174 = arith.constant 1 : i32
    %646 = tpu.dynamic_rotate %641 by %c1_i32_174 dim 1 : vector<8x128xf32>, i32 -> vector<8x128xf32>
    %647 = vector.broadcast %417 : f32 to vector<8x128xf32>
    %648 = arith.mulf %646, %647 : vector<8x128xf32>
    %649 = arith.addf %645, %648 : vector<8x128xf32>
    %650 = vector.broadcast %420 : f32 to vector<8x128xf32>
    %651 = arith.mulf %641, %650 : vector<8x128xf32>
    %652 = arith.addf %649, %651 : vector<8x128xf32>
    %c127_i32_175 = arith.constant 127 : i32
    %653 = tpu.dynamic_rotate %641 by %c127_i32_175 dim 1 : vector<8x128xf32>, i32 -> vector<8x128xf32>
    %654 = vector.broadcast %423 : f32 to vector<8x128xf32>
    %655 = arith.mulf %653, %654 : vector<8x128xf32>
    %656 = arith.addf %652, %655 : vector<8x128xf32>
    %c126_i32_176 = arith.constant 126 : i32
    %657 = tpu.dynamic_rotate %641 by %c126_i32_176 dim 1 : vector<8x128xf32>, i32 -> vector<8x128xf32>
    %658 = vector.broadcast %426 : f32 to vector<8x128xf32>
    %659 = arith.mulf %657, %658 : vector<8x128xf32>
    %660 = arith.addf %656, %659 : vector<8x128xf32>
    %c3_i32_177 = arith.constant 3 : i32
    %661 = arith.addi %587, %c3_i32_177 : i32
    %662 = arith.index_cast %c1_i32_80 : i32 to index
    %663 = arith.index_cast %661 : i32 to index
    %c0_178 = arith.constant 0 : index
    %664 = vector.load %arg5[%662, %663, %c0_178] : memref<4x20x128xf32, #tpu.memory_space<vmem>>, vector<1x8x128xf32>
    %665 = vector.shape_cast %664 : vector<1x8x128xf32> to vector<8x128xf32>
    %c2_i32_179 = arith.constant 2 : i32
    %666 = tpu.dynamic_rotate %665 by %c2_i32_179 dim 1 : vector<8x128xf32>, i32 -> vector<8x128xf32>
    %667 = vector.broadcast %429 : f32 to vector<8x128xf32>
    %668 = arith.mulf %666, %667 : vector<8x128xf32>
    %669 = arith.addf %660, %668 : vector<8x128xf32>
    %c1_i32_180 = arith.constant 1 : i32
    %670 = tpu.dynamic_rotate %665 by %c1_i32_180 dim 1 : vector<8x128xf32>, i32 -> vector<8x128xf32>
    %671 = vector.broadcast %432 : f32 to vector<8x128xf32>
    %672 = arith.mulf %670, %671 : vector<8x128xf32>
    %673 = arith.addf %669, %672 : vector<8x128xf32>
    %674 = vector.broadcast %435 : f32 to vector<8x128xf32>
    %675 = arith.mulf %665, %674 : vector<8x128xf32>
    %676 = arith.addf %673, %675 : vector<8x128xf32>
    %c127_i32_181 = arith.constant 127 : i32
    %677 = tpu.dynamic_rotate %665 by %c127_i32_181 dim 1 : vector<8x128xf32>, i32 -> vector<8x128xf32>
    %678 = vector.broadcast %438 : f32 to vector<8x128xf32>
    %679 = arith.mulf %677, %678 : vector<8x128xf32>
    %680 = arith.addf %676, %679 : vector<8x128xf32>
    %c126_i32_182 = arith.constant 126 : i32
    %681 = tpu.dynamic_rotate %665 by %c126_i32_182 dim 1 : vector<8x128xf32>, i32 -> vector<8x128xf32>
    %682 = vector.broadcast %441 : f32 to vector<8x128xf32>
    %683 = arith.mulf %681, %682 : vector<8x128xf32>
    %684 = arith.addf %680, %683 : vector<8x128xf32>
    %c4_i32_183 = arith.constant 4 : i32
    %685 = arith.addi %587, %c4_i32_183 : i32
    %686 = arith.index_cast %c1_i32_80 : i32 to index
    %687 = arith.index_cast %685 : i32 to index
    %c0_184 = arith.constant 0 : index
    %688 = vector.load %arg5[%686, %687, %c0_184] : memref<4x20x128xf32, #tpu.memory_space<vmem>>, vector<1x8x128xf32>
    %689 = vector.shape_cast %688 : vector<1x8x128xf32> to vector<8x128xf32>
    %c2_i32_185 = arith.constant 2 : i32
    %690 = tpu.dynamic_rotate %689 by %c2_i32_185 dim 1 : vector<8x128xf32>, i32 -> vector<8x128xf32>
    %691 = vector.broadcast %444 : f32 to vector<8x128xf32>
    %692 = arith.mulf %690, %691 : vector<8x128xf32>
    %693 = arith.addf %684, %692 : vector<8x128xf32>
    %c1_i32_186 = arith.constant 1 : i32
    %694 = tpu.dynamic_rotate %689 by %c1_i32_186 dim 1 : vector<8x128xf32>, i32 -> vector<8x128xf32>
    %695 = vector.broadcast %447 : f32 to vector<8x128xf32>
    %696 = arith.mulf %694, %695 : vector<8x128xf32>
    %697 = arith.addf %693, %696 : vector<8x128xf32>
    %698 = vector.broadcast %450 : f32 to vector<8x128xf32>
    %699 = arith.mulf %689, %698 : vector<8x128xf32>
    %700 = arith.addf %697, %699 : vector<8x128xf32>
    %c127_i32_187 = arith.constant 127 : i32
    %701 = tpu.dynamic_rotate %689 by %c127_i32_187 dim 1 : vector<8x128xf32>, i32 -> vector<8x128xf32>
    %702 = vector.broadcast %453 : f32 to vector<8x128xf32>
    %703 = arith.mulf %701, %702 : vector<8x128xf32>
    %704 = arith.addf %700, %703 : vector<8x128xf32>
    %c126_i32_188 = arith.constant 126 : i32
    %705 = tpu.dynamic_rotate %689 by %c126_i32_188 dim 1 : vector<8x128xf32>, i32 -> vector<8x128xf32>
    %706 = vector.broadcast %456 : f32 to vector<8x128xf32>
    %707 = arith.mulf %705, %706 : vector<8x128xf32>
    %708 = arith.addf %704, %707 : vector<8x128xf32>
    %709 = vector.extract_strided_slice %708 {offsets = [0, 0], sizes = [8, 16], strides = [1, 1]} : vector<8x128xf32> to vector<8x16xf32>
    %c0_189 = arith.constant 0 : index
    %710 = arith.index_cast %c1_i32_80 : i32 to index
    %711 = arith.index_cast %587 : i32 to index
    %c0_190 = arith.constant 0 : index
    %712 = vector.load %arg4[%c0_189, %710, %711, %c0_190] : memref<1x4x16x16xf32, #tpu.memory_space<vmem>>, vector<1x1x8x16xf32>
    %713 = vector.shape_cast %712 : vector<1x1x8x16xf32> to vector<8x16xf32>
    %714 = vector.shape_cast %709 : vector<8x16xf32> to vector<1x1x8x16xf32>
    tpu.vector_store %arg4[%c0_189, %710, %711, %c0_190], %714 {strides = array<i32>} : memref<1x4x16x16xf32, #tpu.memory_space<vmem>>, vector<1x1x8x16xf32>,
    %c2_i32_191 = arith.constant 2 : i32
    %c2_i32_192 = arith.constant 2 : i32
    %cst_193 = arith.constant 0.000000e+00 : f32
    %715 = vector.broadcast %cst_193 : f32 to vector<2x128xf32>
    %716 = arith.index_cast %c2_i32_192 : i32 to index
    %c0_194 = arith.constant 0 : index
    %c0_195 = arith.constant 0 : index
    %717 = vector.load %arg5[%716, %c0_194, %c0_195] : memref<4x20x128xf32, #tpu.memory_space<vmem>>, vector<1x2x128xf32>
    %718 = vector.shape_cast %717 : vector<1x2x128xf32> to vector<2x128xf32>
    %719 = vector.shape_cast %715 : vector<2x128xf32> to vector<1x2x128xf32>
    tpu.vector_store %arg5[%716, %c0_194, %c0_195], %719 {strides = array<i32>} : memref<4x20x128xf32, #tpu.memory_space<vmem>>, vector<1x2x128xf32>,
    %cst_196 = arith.constant 0.000000e+00 : f32
    %720 = vector.broadcast %cst_196 : f32 to vector<2x128xf32>
    %721 = arith.index_cast %c2_i32_192 : i32 to index
    %c18_197 = arith.constant 18 : index
    %c0_198 = arith.constant 0 : index
    %722 = vector.load %arg5[%721, %c18_197, %c0_198] : memref<4x20x128xf32, #tpu.memory_space<vmem>>, vector<1x2x128xf32>
    %723 = vector.shape_cast %722 : vector<1x2x128xf32> to vector<2x128xf32>
    %724 = vector.shape_cast %720 : vector<2x128xf32> to vector<1x2x128xf32>
    tpu.vector_store %arg5[%721, %c18_197, %c0_198], %724 {strides = array<i32>} : memref<4x20x128xf32, #tpu.memory_space<vmem>>, vector<1x2x128xf32>,
    %cst_199 = arith.constant 0.000000e+00 : f32
    %725 = vector.broadcast %cst_199 : f32 to vector<20x112xf32>
    %726 = arith.index_cast %c2_i32_192 : i32 to index
    %c0_200 = arith.constant 0 : index
    %c16_201 = arith.constant 16 : index
    %727 = vector.load %arg5[%726, %c0_200, %c16_201] : memref<4x20x128xf32, #tpu.memory_space<vmem>>, vector<1x20x112xf32>
    %728 = vector.shape_cast %727 : vector<1x20x112xf32> to vector<20x112xf32>
    %729 = vector.shape_cast %725 : vector<20x112xf32> to vector<1x20x112xf32>
    tpu.vector_store %arg5[%726, %c0_200, %c16_201], %729 {strides = array<i32>} : memref<4x20x128xf32, #tpu.memory_space<vmem>>, vector<1x20x112xf32>,
    %c0_202 = arith.constant 0 : index
    %730 = arith.index_cast %c2_i32_192 : i32 to index
    %c0_203 = arith.constant 0 : index
    %c0_204 = arith.constant 0 : index
    %731 = vector.load %arg2[%c0_202, %730, %c0_203, %c0_204] : memref<1x4x16x16xf32, #tpu.memory_space<vmem>>, vector<1x1x16x16xf32>
    %732 = vector.shape_cast %731 : vector<1x1x16x16xf32> to vector<16x16xf32>
    %733 = arith.index_cast %c2_i32_192 : i32 to index
    %c2_205 = arith.constant 2 : index
    %c0_206 = arith.constant 0 : index
    %734 = vector.load %arg5[%733, %c2_205, %c0_206] : memref<4x20x128xf32, #tpu.memory_space<vmem>>, vector<1x16x16xf32>
    %735 = vector.shape_cast %734 : vector<1x16x16xf32> to vector<16x16xf32>
    %736 = vector.shape_cast %732 : vector<16x16xf32> to vector<1x16x16xf32>
    tpu.vector_store %arg5[%733, %c2_205, %c0_206], %736 {strides = array<i32>} : memref<4x20x128xf32, #tpu.memory_space<vmem>>, vector<1x16x16xf32>,
    %737 = arith.addi %0, %c2_i32_192 : i32
    %c25_i32_207 = arith.constant 25 : i32
    %738 = arith.muli %737, %c25_i32_207 : i32
    %c0_i32_208 = arith.constant 0 : i32
    %739 = arith.addi %738, %c0_i32_208 : i32
    %740 = arith.index_cast %739 : i32 to index
    %741 = memref.load %arg3[%740] : memref<100xf32, #tpu.memory_space<smem>>
    %c1_i32_209 = arith.constant 1 : i32
    %742 = arith.addi %738, %c1_i32_209 : i32
    %743 = arith.index_cast %742 : i32 to index
    %744 = memref.load %arg3[%743] : memref<100xf32, #tpu.memory_space<smem>>
    %c2_i32_210 = arith.constant 2 : i32
    %745 = arith.addi %738, %c2_i32_210 : i32
    %746 = arith.index_cast %745 : i32 to index
    %747 = memref.load %arg3[%746] : memref<100xf32, #tpu.memory_space<smem>>
    %c3_i32_211 = arith.constant 3 : i32
    %748 = arith.addi %738, %c3_i32_211 : i32
    %749 = arith.index_cast %748 : i32 to index
    %750 = memref.load %arg3[%749] : memref<100xf32, #tpu.memory_space<smem>>
    %c4_i32_212 = arith.constant 4 : i32
    %751 = arith.addi %738, %c4_i32_212 : i32
    %752 = arith.index_cast %751 : i32 to index
    %753 = memref.load %arg3[%752] : memref<100xf32, #tpu.memory_space<smem>>
    %c5_i32_213 = arith.constant 5 : i32
    %754 = arith.addi %738, %c5_i32_213 : i32
    %755 = arith.index_cast %754 : i32 to index
    %756 = memref.load %arg3[%755] : memref<100xf32, #tpu.memory_space<smem>>
    %c6_i32_214 = arith.constant 6 : i32
    %757 = arith.addi %738, %c6_i32_214 : i32
    %758 = arith.index_cast %757 : i32 to index
    %759 = memref.load %arg3[%758] : memref<100xf32, #tpu.memory_space<smem>>
    %c7_i32_215 = arith.constant 7 : i32
    %760 = arith.addi %738, %c7_i32_215 : i32
    %761 = arith.index_cast %760 : i32 to index
    %762 = memref.load %arg3[%761] : memref<100xf32, #tpu.memory_space<smem>>
    %c8_i32_216 = arith.constant 8 : i32
    %763 = arith.addi %738, %c8_i32_216 : i32
    %764 = arith.index_cast %763 : i32 to index
    %765 = memref.load %arg3[%764] : memref<100xf32, #tpu.memory_space<smem>>
    %c9_i32_217 = arith.constant 9 : i32
    %766 = arith.addi %738, %c9_i32_217 : i32
    %767 = arith.index_cast %766 : i32 to index
    %768 = memref.load %arg3[%767] : memref<100xf32, #tpu.memory_space<smem>>
    %c10_i32_218 = arith.constant 10 : i32
    %769 = arith.addi %738, %c10_i32_218 : i32
    %770 = arith.index_cast %769 : i32 to index
    %771 = memref.load %arg3[%770] : memref<100xf32, #tpu.memory_space<smem>>
    %c11_i32_219 = arith.constant 11 : i32
    %772 = arith.addi %738, %c11_i32_219 : i32
    %773 = arith.index_cast %772 : i32 to index
    %774 = memref.load %arg3[%773] : memref<100xf32, #tpu.memory_space<smem>>
    %c12_i32_220 = arith.constant 12 : i32
    %775 = arith.addi %738, %c12_i32_220 : i32
    %776 = arith.index_cast %775 : i32 to index
    %777 = memref.load %arg3[%776] : memref<100xf32, #tpu.memory_space<smem>>
    %c13_i32_221 = arith.constant 13 : i32
    %778 = arith.addi %738, %c13_i32_221 : i32
    %779 = arith.index_cast %778 : i32 to index
    %780 = memref.load %arg3[%779] : memref<100xf32, #tpu.memory_space<smem>>
    %c14_i32_222 = arith.constant 14 : i32
    %781 = arith.addi %738, %c14_i32_222 : i32
    %782 = arith.index_cast %781 : i32 to index
    %783 = memref.load %arg3[%782] : memref<100xf32, #tpu.memory_space<smem>>
    %c15_i32_223 = arith.constant 15 : i32
    %784 = arith.addi %738, %c15_i32_223 : i32
    %785 = arith.index_cast %784 : i32 to index
    %786 = memref.load %arg3[%785] : memref<100xf32, #tpu.memory_space<smem>>
    %c16_i32_224 = arith.constant 16 : i32
    %787 = arith.addi %738, %c16_i32_224 : i32
    %788 = arith.index_cast %787 : i32 to index
    %789 = memref.load %arg3[%788] : memref<100xf32, #tpu.memory_space<smem>>
    %c17_i32_225 = arith.constant 17 : i32
    %790 = arith.addi %738, %c17_i32_225 : i32
    %791 = arith.index_cast %790 : i32 to index
    %792 = memref.load %arg3[%791] : memref<100xf32, #tpu.memory_space<smem>>
    %c18_i32_226 = arith.constant 18 : i32
    %793 = arith.addi %738, %c18_i32_226 : i32
    %794 = arith.index_cast %793 : i32 to index
    %795 = memref.load %arg3[%794] : memref<100xf32, #tpu.memory_space<smem>>
    %c19_i32_227 = arith.constant 19 : i32
    %796 = arith.addi %738, %c19_i32_227 : i32
    %797 = arith.index_cast %796 : i32 to index
    %798 = memref.load %arg3[%797] : memref<100xf32, #tpu.memory_space<smem>>
    %c20_i32_228 = arith.constant 20 : i32
    %799 = arith.addi %738, %c20_i32_228 : i32
    %800 = arith.index_cast %799 : i32 to index
    %801 = memref.load %arg3[%800] : memref<100xf32, #tpu.memory_space<smem>>
    %c21_i32_229 = arith.constant 21 : i32
    %802 = arith.addi %738, %c21_i32_229 : i32
    %803 = arith.index_cast %802 : i32 to index
    %804 = memref.load %arg3[%803] : memref<100xf32, #tpu.memory_space<smem>>
    %c22_i32_230 = arith.constant 22 : i32
    %805 = arith.addi %738, %c22_i32_230 : i32
    %806 = arith.index_cast %805 : i32 to index
    %807 = memref.load %arg3[%806] : memref<100xf32, #tpu.memory_space<smem>>
    %c23_i32_231 = arith.constant 23 : i32
    %808 = arith.addi %738, %c23_i32_231 : i32
    %809 = arith.index_cast %808 : i32 to index
    %810 = memref.load %arg3[%809] : memref<100xf32, #tpu.memory_space<smem>>
    %c24_i32_232 = arith.constant 24 : i32
    %811 = arith.addi %738, %c24_i32_232 : i32
    %812 = arith.index_cast %811 : i32 to index
    %813 = memref.load %arg3[%812] : memref<100xf32, #tpu.memory_space<smem>>
    %c0_i32_233 = arith.constant 0 : i32
    %c8_i32_234 = arith.constant 8 : i32
    %814 = arith.muli %c0_i32_233, %c8_i32_234 : i32
    %815 = tpu.assume_multiple %814, 8 : i32
    %cst_235 = arith.constant 0.000000e+00 : f32
    %816 = vector.broadcast %cst_235 : f32 to vector<8x128xf32>
    %c0_i32_236 = arith.constant 0 : i32
    %817 = arith.addi %815, %c0_i32_236 : i32
    %818 = arith.index_cast %c2_i32_192 : i32 to index
    %819 = arith.index_cast %817 : i32 to index
    %c0_237 = arith.constant 0 : index
    %820 = vector.load %arg5[%818, %819, %c0_237] : memref<4x20x128xf32, #tpu.memory_space<vmem>>, vector<1x8x128xf32>
    %821 = vector.shape_cast %820 : vector<1x8x128xf32> to vector<8x128xf32>
    %c2_i32_238 = arith.constant 2 : i32
    %822 = tpu.dynamic_rotate %821 by %c2_i32_238 dim 1 : vector<8x128xf32>, i32 -> vector<8x128xf32>
    %823 = vector.broadcast %741 : f32 to vector<8x128xf32>
    %824 = arith.mulf %822, %823 : vector<8x128xf32>
    %825 = arith.addf %816, %824 : vector<8x128xf32>
    %c1_i32_239 = arith.constant 1 : i32
    %826 = tpu.dynamic_rotate %821 by %c1_i32_239 dim 1 : vector<8x128xf32>, i32 -> vector<8x128xf32>
    %827 = vector.broadcast %744 : f32 to vector<8x128xf32>
    %828 = arith.mulf %826, %827 : vector<8x128xf32>
    %829 = arith.addf %825, %828 : vector<8x128xf32>
    %830 = vector.broadcast %747 : f32 to vector<8x128xf32>
    %831 = arith.mulf %821, %830 : vector<8x128xf32>
    %832 = arith.addf %829, %831 : vector<8x128xf32>
    %c127_i32_240 = arith.constant 127 : i32
    %833 = tpu.dynamic_rotate %821 by %c127_i32_240 dim 1 : vector<8x128xf32>, i32 -> vector<8x128xf32>
    %834 = vector.broadcast %750 : f32 to vector<8x128xf32>
    %835 = arith.mulf %833, %834 : vector<8x128xf32>
    %836 = arith.addf %832, %835 : vector<8x128xf32>
    %c126_i32_241 = arith.constant 126 : i32
    %837 = tpu.dynamic_rotate %821 by %c126_i32_241 dim 1 : vector<8x128xf32>, i32 -> vector<8x128xf32>
    %838 = vector.broadcast %753 : f32 to vector<8x128xf32>
    %839 = arith.mulf %837, %838 : vector<8x128xf32>
    %840 = arith.addf %836, %839 : vector<8x128xf32>
    %c1_i32_242 = arith.constant 1 : i32
    %841 = arith.addi %815, %c1_i32_242 : i32
    %842 = arith.index_cast %c2_i32_192 : i32 to index
    %843 = arith.index_cast %841 : i32 to index
    %c0_243 = arith.constant 0 : index
    %844 = vector.load %arg5[%842, %843, %c0_243] : memref<4x20x128xf32, #tpu.memory_space<vmem>>, vector<1x8x128xf32>
    %845 = vector.shape_cast %844 : vector<1x8x128xf32> to vector<8x128xf32>
    %c2_i32_244 = arith.constant 2 : i32
    %846 = tpu.dynamic_rotate %845 by %c2_i32_244 dim 1 : vector<8x128xf32>, i32 -> vector<8x128xf32>
    %847 = vector.broadcast %756 : f32 to vector<8x128xf32>
    %848 = arith.mulf %846, %847 : vector<8x128xf32>
    %849 = arith.addf %840, %848 : vector<8x128xf32>
    %c1_i32_245 = arith.constant 1 : i32
    %850 = tpu.dynamic_rotate %845 by %c1_i32_245 dim 1 : vector<8x128xf32>, i32 -> vector<8x128xf32>
    %851 = vector.broadcast %759 : f32 to vector<8x128xf32>
    %852 = arith.mulf %850, %851 : vector<8x128xf32>
    %853 = arith.addf %849, %852 : vector<8x128xf32>
    %854 = vector.broadcast %762 : f32 to vector<8x128xf32>
    %855 = arith.mulf %845, %854 : vector<8x128xf32>
    %856 = arith.addf %853, %855 : vector<8x128xf32>
    %c127_i32_246 = arith.constant 127 : i32
    %857 = tpu.dynamic_rotate %845 by %c127_i32_246 dim 1 : vector<8x128xf32>, i32 -> vector<8x128xf32>
    %858 = vector.broadcast %765 : f32 to vector<8x128xf32>
    %859 = arith.mulf %857, %858 : vector<8x128xf32>
    %860 = arith.addf %856, %859 : vector<8x128xf32>
    %c126_i32_247 = arith.constant 126 : i32
    %861 = tpu.dynamic_rotate %845 by %c126_i32_247 dim 1 : vector<8x128xf32>, i32 -> vector<8x128xf32>
    %862 = vector.broadcast %768 : f32 to vector<8x128xf32>
    %863 = arith.mulf %861, %862 : vector<8x128xf32>
    %864 = arith.addf %860, %863 : vector<8x128xf32>
    %c2_i32_248 = arith.constant 2 : i32
    %865 = arith.addi %815, %c2_i32_248 : i32
    %866 = arith.index_cast %c2_i32_192 : i32 to index
    %867 = arith.index_cast %865 : i32 to index
    %c0_249 = arith.constant 0 : index
    %868 = vector.load %arg5[%866, %867, %c0_249] : memref<4x20x128xf32, #tpu.memory_space<vmem>>, vector<1x8x128xf32>
    %869 = vector.shape_cast %868 : vector<1x8x128xf32> to vector<8x128xf32>
    %c2_i32_250 = arith.constant 2 : i32
    %870 = tpu.dynamic_rotate %869 by %c2_i32_250 dim 1 : vector<8x128xf32>, i32 -> vector<8x128xf32>
    %871 = vector.broadcast %771 : f32 to vector<8x128xf32>
    %872 = arith.mulf %870, %871 : vector<8x128xf32>
    %873 = arith.addf %864, %872 : vector<8x128xf32>
    %c1_i32_251 = arith.constant 1 : i32
    %874 = tpu.dynamic_rotate %869 by %c1_i32_251 dim 1 : vector<8x128xf32>, i32 -> vector<8x128xf32>
    %875 = vector.broadcast %774 : f32 to vector<8x128xf32>
    %876 = arith.mulf %874, %875 : vector<8x128xf32>
    %877 = arith.addf %873, %876 : vector<8x128xf32>
    %878 = vector.broadcast %777 : f32 to vector<8x128xf32>
    %879 = arith.mulf %869, %878 : vector<8x128xf32>
    %880 = arith.addf %877, %879 : vector<8x128xf32>
    %c127_i32_252 = arith.constant 127 : i32
    %881 = tpu.dynamic_rotate %869 by %c127_i32_252 dim 1 : vector<8x128xf32>, i32 -> vector<8x128xf32>
    %882 = vector.broadcast %780 : f32 to vector<8x128xf32>
    %883 = arith.mulf %881, %882 : vector<8x128xf32>
    %884 = arith.addf %880, %883 : vector<8x128xf32>
    %c126_i32_253 = arith.constant 126 : i32
    %885 = tpu.dynamic_rotate %869 by %c126_i32_253 dim 1 : vector<8x128xf32>, i32 -> vector<8x128xf32>
    %886 = vector.broadcast %783 : f32 to vector<8x128xf32>
    %887 = arith.mulf %885, %886 : vector<8x128xf32>
    %888 = arith.addf %884, %887 : vector<8x128xf32>
    %c3_i32_254 = arith.constant 3 : i32
    %889 = arith.addi %815, %c3_i32_254 : i32
    %890 = arith.index_cast %c2_i32_192 : i32 to index
    %891 = arith.index_cast %889 : i32 to index
    %c0_255 = arith.constant 0 : index
    %892 = vector.load %arg5[%890, %891, %c0_255] : memref<4x20x128xf32, #tpu.memory_space<vmem>>, vector<1x8x128xf32>
    %893 = vector.shape_cast %892 : vector<1x8x128xf32> to vector<8x128xf32>
    %c2_i32_256 = arith.constant 2 : i32
    %894 = tpu.dynamic_rotate %893 by %c2_i32_256 dim 1 : vector<8x128xf32>, i32 -> vector<8x128xf32>
    %895 = vector.broadcast %786 : f32 to vector<8x128xf32>
    %896 = arith.mulf %894, %895 : vector<8x128xf32>
    %897 = arith.addf %888, %896 : vector<8x128xf32>
    %c1_i32_257 = arith.constant 1 : i32
    %898 = tpu.dynamic_rotate %893 by %c1_i32_257 dim 1 : vector<8x128xf32>, i32 -> vector<8x128xf32>
    %899 = vector.broadcast %789 : f32 to vector<8x128xf32>
    %900 = arith.mulf %898, %899 : vector<8x128xf32>
    %901 = arith.addf %897, %900 : vector<8x128xf32>
    %902 = vector.broadcast %792 : f32 to vector<8x128xf32>
    %903 = arith.mulf %893, %902 : vector<8x128xf32>
    %904 = arith.addf %901, %903 : vector<8x128xf32>
    %c127_i32_258 = arith.constant 127 : i32
    %905 = tpu.dynamic_rotate %893 by %c127_i32_258 dim 1 : vector<8x128xf32>, i32 -> vector<8x128xf32>
    %906 = vector.broadcast %795 : f32 to vector<8x128xf32>
    %907 = arith.mulf %905, %906 : vector<8x128xf32>
    %908 = arith.addf %904, %907 : vector<8x128xf32>
    %c126_i32_259 = arith.constant 126 : i32
    %909 = tpu.dynamic_rotate %893 by %c126_i32_259 dim 1 : vector<8x128xf32>, i32 -> vector<8x128xf32>
    %910 = vector.broadcast %798 : f32 to vector<8x128xf32>
    %911 = arith.mulf %909, %910 : vector<8x128xf32>
    %912 = arith.addf %908, %911 : vector<8x128xf32>
    %c4_i32_260 = arith.constant 4 : i32
    %913 = arith.addi %815, %c4_i32_260 : i32
    %914 = arith.index_cast %c2_i32_192 : i32 to index
    %915 = arith.index_cast %913 : i32 to index
    %c0_261 = arith.constant 0 : index
    %916 = vector.load %arg5[%914, %915, %c0_261] : memref<4x20x128xf32, #tpu.memory_space<vmem>>, vector<1x8x128xf32>
    %917 = vector.shape_cast %916 : vector<1x8x128xf32> to vector<8x128xf32>
    %c2_i32_262 = arith.constant 2 : i32
    %918 = tpu.dynamic_rotate %917 by %c2_i32_262 dim 1 : vector<8x128xf32>, i32 -> vector<8x128xf32>
    %919 = vector.broadcast %801 : f32 to vector<8x128xf32>
    %920 = arith.mulf %918, %919 : vector<8x128xf32>
    %921 = arith.addf %912, %920 : vector<8x128xf32>
    %c1_i32_263 = arith.constant 1 : i32
    %922 = tpu.dynamic_rotate %917 by %c1_i32_263 dim 1 : vector<8x128xf32>, i32 -> vector<8x128xf32>
    %923 = vector.broadcast %804 : f32 to vector<8x128xf32>
    %924 = arith.mulf %922, %923 : vector<8x128xf32>
    %925 = arith.addf %921, %924 : vector<8x128xf32>
    %926 = vector.broadcast %807 : f32 to vector<8x128xf32>
    %927 = arith.mulf %917, %926 : vector<8x128xf32>
    %928 = arith.addf %925, %927 : vector<8x128xf32>
    %c127_i32_264 = arith.constant 127 : i32
    %929 = tpu.dynamic_rotate %917 by %c127_i32_264 dim 1 : vector<8x128xf32>, i32 -> vector<8x128xf32>
    %930 = vector.broadcast %810 : f32 to vector<8x128xf32>
    %931 = arith.mulf %929, %930 : vector<8x128xf32>
    %932 = arith.addf %928, %931 : vector<8x128xf32>
    %c126_i32_265 = arith.constant 126 : i32
    %933 = tpu.dynamic_rotate %917 by %c126_i32_265 dim 1 : vector<8x128xf32>, i32 -> vector<8x128xf32>
    %934 = vector.broadcast %813 : f32 to vector<8x128xf32>
    %935 = arith.mulf %933, %934 : vector<8x128xf32>
    %936 = arith.addf %932, %935 : vector<8x128xf32>
    %937 = vector.extract_strided_slice %936 {offsets = [0, 0], sizes = [8, 16], strides = [1, 1]} : vector<8x128xf32> to vector<8x16xf32>
    %c0_266 = arith.constant 0 : index
    %938 = arith.index_cast %c2_i32_192 : i32 to index
    %939 = arith.index_cast %815 : i32 to index
    %c0_267 = arith.constant 0 : index
    %940 = vector.load %arg4[%c0_266, %938, %939, %c0_267] : memref<1x4x16x16xf32, #tpu.memory_space<vmem>>, vector<1x1x8x16xf32>
    %941 = vector.shape_cast %940 : vector<1x1x8x16xf32> to vector<8x16xf32>
    %942 = vector.shape_cast %937 : vector<8x16xf32> to vector<1x1x8x16xf32>
    tpu.vector_store %arg4[%c0_266, %938, %939, %c0_267], %942 {strides = array<i32>} : memref<1x4x16x16xf32, #tpu.memory_space<vmem>>, vector<1x1x8x16xf32>,
    %c1_i32_268 = arith.constant 1 : i32
    %c8_i32_269 = arith.constant 8 : i32
    %943 = arith.muli %c1_i32_268, %c8_i32_269 : i32
    %944 = tpu.assume_multiple %943, 8 : i32
    %cst_270 = arith.constant 0.000000e+00 : f32
    %945 = vector.broadcast %cst_270 : f32 to vector<8x128xf32>
    %c0_i32_271 = arith.constant 0 : i32
    %946 = arith.addi %944, %c0_i32_271 : i32
    %947 = arith.index_cast %c2_i32_192 : i32 to index
    %948 = arith.index_cast %946 : i32 to index
    %c0_272 = arith.constant 0 : index
    %949 = vector.load %arg5[%947, %948, %c0_272] : memref<4x20x128xf32, #tpu.memory_space<vmem>>, vector<1x8x128xf32>
    %950 = vector.shape_cast %949 : vector<1x8x128xf32> to vector<8x128xf32>
    %c2_i32_273 = arith.constant 2 : i32
    %951 = tpu.dynamic_rotate %950 by %c2_i32_273 dim 1 : vector<8x128xf32>, i32 -> vector<8x128xf32>
    %952 = vector.broadcast %741 : f32 to vector<8x128xf32>
    %953 = arith.mulf %951, %952 : vector<8x128xf32>
    %954 = arith.addf %945, %953 : vector<8x128xf32>
    %c1_i32_274 = arith.constant 1 : i32
    %955 = tpu.dynamic_rotate %950 by %c1_i32_274 dim 1 : vector<8x128xf32>, i32 -> vector<8x128xf32>
    %956 = vector.broadcast %744 : f32 to vector<8x128xf32>
    %957 = arith.mulf %955, %956 : vector<8x128xf32>
    %958 = arith.addf %954, %957 : vector<8x128xf32>
    %959 = vector.broadcast %747 : f32 to vector<8x128xf32>
    %960 = arith.mulf %950, %959 : vector<8x128xf32>
    %961 = arith.addf %958, %960 : vector<8x128xf32>
    %c127_i32_275 = arith.constant 127 : i32
    %962 = tpu.dynamic_rotate %950 by %c127_i32_275 dim 1 : vector<8x128xf32>, i32 -> vector<8x128xf32>
    %963 = vector.broadcast %750 : f32 to vector<8x128xf32>
    %964 = arith.mulf %962, %963 : vector<8x128xf32>
    %965 = arith.addf %961, %964 : vector<8x128xf32>
    %c126_i32_276 = arith.constant 126 : i32
    %966 = tpu.dynamic_rotate %950 by %c126_i32_276 dim 1 : vector<8x128xf32>, i32 -> vector<8x128xf32>
    %967 = vector.broadcast %753 : f32 to vector<8x128xf32>
    %968 = arith.mulf %966, %967 : vector<8x128xf32>
    %969 = arith.addf %965, %968 : vector<8x128xf32>
    %c1_i32_277 = arith.constant 1 : i32
    %970 = arith.addi %944, %c1_i32_277 : i32
    %971 = arith.index_cast %c2_i32_192 : i32 to index
    %972 = arith.index_cast %970 : i32 to index
    %c0_278 = arith.constant 0 : index
    %973 = vector.load %arg5[%971, %972, %c0_278] : memref<4x20x128xf32, #tpu.memory_space<vmem>>, vector<1x8x128xf32>
    %974 = vector.shape_cast %973 : vector<1x8x128xf32> to vector<8x128xf32>
    %c2_i32_279 = arith.constant 2 : i32
    %975 = tpu.dynamic_rotate %974 by %c2_i32_279 dim 1 : vector<8x128xf32>, i32 -> vector<8x128xf32>
    %976 = vector.broadcast %756 : f32 to vector<8x128xf32>
    %977 = arith.mulf %975, %976 : vector<8x128xf32>
    %978 = arith.addf %969, %977 : vector<8x128xf32>
    %c1_i32_280 = arith.constant 1 : i32
    %979 = tpu.dynamic_rotate %974 by %c1_i32_280 dim 1 : vector<8x128xf32>, i32 -> vector<8x128xf32>
    %980 = vector.broadcast %759 : f32 to vector<8x128xf32>
    %981 = arith.mulf %979, %980 : vector<8x128xf32>
    %982 = arith.addf %978, %981 : vector<8x128xf32>
    %983 = vector.broadcast %762 : f32 to vector<8x128xf32>
    %984 = arith.mulf %974, %983 : vector<8x128xf32>
    %985 = arith.addf %982, %984 : vector<8x128xf32>
    %c127_i32_281 = arith.constant 127 : i32
    %986 = tpu.dynamic_rotate %974 by %c127_i32_281 dim 1 : vector<8x128xf32>, i32 -> vector<8x128xf32>
    %987 = vector.broadcast %765 : f32 to vector<8x128xf32>
    %988 = arith.mulf %986, %987 : vector<8x128xf32>
    %989 = arith.addf %985, %988 : vector<8x128xf32>
    %c126_i32_282 = arith.constant 126 : i32
    %990 = tpu.dynamic_rotate %974 by %c126_i32_282 dim 1 : vector<8x128xf32>, i32 -> vector<8x128xf32>
    %991 = vector.broadcast %768 : f32 to vector<8x128xf32>
    %992 = arith.mulf %990, %991 : vector<8x128xf32>
    %993 = arith.addf %989, %992 : vector<8x128xf32>
    %c2_i32_283 = arith.constant 2 : i32
    %994 = arith.addi %944, %c2_i32_283 : i32
    %995 = arith.index_cast %c2_i32_192 : i32 to index
    %996 = arith.index_cast %994 : i32 to index
    %c0_284 = arith.constant 0 : index
    %997 = vector.load %arg5[%995, %996, %c0_284] : memref<4x20x128xf32, #tpu.memory_space<vmem>>, vector<1x8x128xf32>
    %998 = vector.shape_cast %997 : vector<1x8x128xf32> to vector<8x128xf32>
    %c2_i32_285 = arith.constant 2 : i32
    %999 = tpu.dynamic_rotate %998 by %c2_i32_285 dim 1 : vector<8x128xf32>, i32 -> vector<8x128xf32>
    %1000 = vector.broadcast %771 : f32 to vector<8x128xf32>
    %1001 = arith.mulf %999, %1000 : vector<8x128xf32>
    %1002 = arith.addf %993, %1001 : vector<8x128xf32>
    %c1_i32_286 = arith.constant 1 : i32
    %1003 = tpu.dynamic_rotate %998 by %c1_i32_286 dim 1 : vector<8x128xf32>, i32 -> vector<8x128xf32>
    %1004 = vector.broadcast %774 : f32 to vector<8x128xf32>
    %1005 = arith.mulf %1003, %1004 : vector<8x128xf32>
    %1006 = arith.addf %1002, %1005 : vector<8x128xf32>
    %1007 = vector.broadcast %777 : f32 to vector<8x128xf32>
    %1008 = arith.mulf %998, %1007 : vector<8x128xf32>
    %1009 = arith.addf %1006, %1008 : vector<8x128xf32>
    %c127_i32_287 = arith.constant 127 : i32
    %1010 = tpu.dynamic_rotate %998 by %c127_i32_287 dim 1 : vector<8x128xf32>, i32 -> vector<8x128xf32>
    %1011 = vector.broadcast %780 : f32 to vector<8x128xf32>
    %1012 = arith.mulf %1010, %1011 : vector<8x128xf32>
    %1013 = arith.addf %1009, %1012 : vector<8x128xf32>
    %c126_i32_288 = arith.constant 126 : i32
    %1014 = tpu.dynamic_rotate %998 by %c126_i32_288 dim 1 : vector<8x128xf32>, i32 -> vector<8x128xf32>
    %1015 = vector.broadcast %783 : f32 to vector<8x128xf32>
    %1016 = arith.mulf %1014, %1015 : vector<8x128xf32>
    %1017 = arith.addf %1013, %1016 : vector<8x128xf32>
    %c3_i32_289 = arith.constant 3 : i32
    %1018 = arith.addi %944, %c3_i32_289 : i32
    %1019 = arith.index_cast %c2_i32_192 : i32 to index
    %1020 = arith.index_cast %1018 : i32 to index
    %c0_290 = arith.constant 0 : index
    %1021 = vector.load %arg5[%1019, %1020, %c0_290] : memref<4x20x128xf32, #tpu.memory_space<vmem>>, vector<1x8x128xf32>
    %1022 = vector.shape_cast %1021 : vector<1x8x128xf32> to vector<8x128xf32>
    %c2_i32_291 = arith.constant 2 : i32
    %1023 = tpu.dynamic_rotate %1022 by %c2_i32_291 dim 1 : vector<8x128xf32>, i32 -> vector<8x128xf32>
    %1024 = vector.broadcast %786 : f32 to vector<8x128xf32>
    %1025 = arith.mulf %1023, %1024 : vector<8x128xf32>
    %1026 = arith.addf %1017, %1025 : vector<8x128xf32>
    %c1_i32_292 = arith.constant 1 : i32
    %1027 = tpu.dynamic_rotate %1022 by %c1_i32_292 dim 1 : vector<8x128xf32>, i32 -> vector<8x128xf32>
    %1028 = vector.broadcast %789 : f32 to vector<8x128xf32>
    %1029 = arith.mulf %1027, %1028 : vector<8x128xf32>
    %1030 = arith.addf %1026, %1029 : vector<8x128xf32>
    %1031 = vector.broadcast %792 : f32 to vector<8x128xf32>
    %1032 = arith.mulf %1022, %1031 : vector<8x128xf32>
    %1033 = arith.addf %1030, %1032 : vector<8x128xf32>
    %c127_i32_293 = arith.constant 127 : i32
    %1034 = tpu.dynamic_rotate %1022 by %c127_i32_293 dim 1 : vector<8x128xf32>, i32 -> vector<8x128xf32>
    %1035 = vector.broadcast %795 : f32 to vector<8x128xf32>
    %1036 = arith.mulf %1034, %1035 : vector<8x128xf32>
    %1037 = arith.addf %1033, %1036 : vector<8x128xf32>
    %c126_i32_294 = arith.constant 126 : i32
    %1038 = tpu.dynamic_rotate %1022 by %c126_i32_294 dim 1 : vector<8x128xf32>, i32 -> vector<8x128xf32>
    %1039 = vector.broadcast %798 : f32 to vector<8x128xf32>
    %1040 = arith.mulf %1038, %1039 : vector<8x128xf32>
    %1041 = arith.addf %1037, %1040 : vector<8x128xf32>
    %c4_i32_295 = arith.constant 4 : i32
    %1042 = arith.addi %944, %c4_i32_295 : i32
    %1043 = arith.index_cast %c2_i32_192 : i32 to index
    %1044 = arith.index_cast %1042 : i32 to index
    %c0_296 = arith.constant 0 : index
    %1045 = vector.load %arg5[%1043, %1044, %c0_296] : memref<4x20x128xf32, #tpu.memory_space<vmem>>, vector<1x8x128xf32>
    %1046 = vector.shape_cast %1045 : vector<1x8x128xf32> to vector<8x128xf32>
    %c2_i32_297 = arith.constant 2 : i32
    %1047 = tpu.dynamic_rotate %1046 by %c2_i32_297 dim 1 : vector<8x128xf32>, i32 -> vector<8x128xf32>
    %1048 = vector.broadcast %801 : f32 to vector<8x128xf32>
    %1049 = arith.mulf %1047, %1048 : vector<8x128xf32>
    %1050 = arith.addf %1041, %1049 : vector<8x128xf32>
    %c1_i32_298 = arith.constant 1 : i32
    %1051 = tpu.dynamic_rotate %1046 by %c1_i32_298 dim 1 : vector<8x128xf32>, i32 -> vector<8x128xf32>
    %1052 = vector.broadcast %804 : f32 to vector<8x128xf32>
    %1053 = arith.mulf %1051, %1052 : vector<8x128xf32>
    %1054 = arith.addf %1050, %1053 : vector<8x128xf32>
    %1055 = vector.broadcast %807 : f32 to vector<8x128xf32>
    %1056 = arith.mulf %1046, %1055 : vector<8x128xf32>
    %1057 = arith.addf %1054, %1056 : vector<8x128xf32>
    %c127_i32_299 = arith.constant 127 : i32
    %1058 = tpu.dynamic_rotate %1046 by %c127_i32_299 dim 1 : vector<8x128xf32>, i32 -> vector<8x128xf32>
    %1059 = vector.broadcast %810 : f32 to vector<8x128xf32>
    %1060 = arith.mulf %1058, %1059 : vector<8x128xf32>
    %1061 = arith.addf %1057, %1060 : vector<8x128xf32>
    %c126_i32_300 = arith.constant 126 : i32
    %1062 = tpu.dynamic_rotate %1046 by %c126_i32_300 dim 1 : vector<8x128xf32>, i32 -> vector<8x128xf32>
    %1063 = vector.broadcast %813 : f32 to vector<8x128xf32>
    %1064 = arith.mulf %1062, %1063 : vector<8x128xf32>
    %1065 = arith.addf %1061, %1064 : vector<8x128xf32>
    %1066 = vector.extract_strided_slice %1065 {offsets = [0, 0], sizes = [8, 16], strides = [1, 1]} : vector<8x128xf32> to vector<8x16xf32>
    %c0_301 = arith.constant 0 : index
    %1067 = arith.index_cast %c2_i32_192 : i32 to index
    %1068 = arith.index_cast %944 : i32 to index
    %c0_302 = arith.constant 0 : index
    %1069 = vector.load %arg4[%c0_301, %1067, %1068, %c0_302] : memref<1x4x16x16xf32, #tpu.memory_space<vmem>>, vector<1x1x8x16xf32>
    %1070 = vector.shape_cast %1069 : vector<1x1x8x16xf32> to vector<8x16xf32>
    %1071 = vector.shape_cast %1066 : vector<8x16xf32> to vector<1x1x8x16xf32>
    tpu.vector_store %arg4[%c0_301, %1067, %1068, %c0_302], %1071 {strides = array<i32>} : memref<1x4x16x16xf32, #tpu.memory_space<vmem>>, vector<1x1x8x16xf32>,
    %c2_i32_303 = arith.constant 2 : i32
    %c3_i32_304 = arith.constant 3 : i32
    %cst_305 = arith.constant 0.000000e+00 : f32
    %1072 = vector.broadcast %cst_305 : f32 to vector<2x128xf32>
    %1073 = arith.index_cast %c3_i32_304 : i32 to index
    %c0_306 = arith.constant 0 : index
    %c0_307 = arith.constant 0 : index
    %1074 = vector.load %arg5[%1073, %c0_306, %c0_307] : memref<4x20x128xf32, #tpu.memory_space<vmem>>, vector<1x2x128xf32>
    %1075 = vector.shape_cast %1074 : vector<1x2x128xf32> to vector<2x128xf32>
    %1076 = vector.shape_cast %1072 : vector<2x128xf32> to vector<1x2x128xf32>
    tpu.vector_store %arg5[%1073, %c0_306, %c0_307], %1076 {strides = array<i32>} : memref<4x20x128xf32, #tpu.memory_space<vmem>>, vector<1x2x128xf32>,
    %cst_308 = arith.constant 0.000000e+00 : f32
    %1077 = vector.broadcast %cst_308 : f32 to vector<2x128xf32>
    %1078 = arith.index_cast %c3_i32_304 : i32 to index
    %c18_309 = arith.constant 18 : index
    %c0_310 = arith.constant 0 : index
    %1079 = vector.load %arg5[%1078, %c18_309, %c0_310] : memref<4x20x128xf32, #tpu.memory_space<vmem>>, vector<1x2x128xf32>
    %1080 = vector.shape_cast %1079 : vector<1x2x128xf32> to vector<2x128xf32>
    %1081 = vector.shape_cast %1077 : vector<2x128xf32> to vector<1x2x128xf32>
    tpu.vector_store %arg5[%1078, %c18_309, %c0_310], %1081 {strides = array<i32>} : memref<4x20x128xf32, #tpu.memory_space<vmem>>, vector<1x2x128xf32>,
    %cst_311 = arith.constant 0.000000e+00 : f32
    %1082 = vector.broadcast %cst_311 : f32 to vector<20x112xf32>
    %1083 = arith.index_cast %c3_i32_304 : i32 to index
    %c0_312 = arith.constant 0 : index
    %c16_313 = arith.constant 16 : index
    %1084 = vector.load %arg5[%1083, %c0_312, %c16_313] : memref<4x20x128xf32, #tpu.memory_space<vmem>>, vector<1x20x112xf32>
    %1085 = vector.shape_cast %1084 : vector<1x20x112xf32> to vector<20x112xf32>
    %1086 = vector.shape_cast %1082 : vector<20x112xf32> to vector<1x20x112xf32>
    tpu.vector_store %arg5[%1083, %c0_312, %c16_313], %1086 {strides = array<i32>} : memref<4x20x128xf32, #tpu.memory_space<vmem>>, vector<1x20x112xf32>,
    %c0_314 = arith.constant 0 : index
    %1087 = arith.index_cast %c3_i32_304 : i32 to index
    %c0_315 = arith.constant 0 : index
    %c0_316 = arith.constant 0 : index
    %1088 = vector.load %arg2[%c0_314, %1087, %c0_315, %c0_316] : memref<1x4x16x16xf32, #tpu.memory_space<vmem>>, vector<1x1x16x16xf32>
    %1089 = vector.shape_cast %1088 : vector<1x1x16x16xf32> to vector<16x16xf32>
    %1090 = arith.index_cast %c3_i32_304 : i32 to index
    %c2_317 = arith.constant 2 : index
    %c0_318 = arith.constant 0 : index
    %1091 = vector.load %arg5[%1090, %c2_317, %c0_318] : memref<4x20x128xf32, #tpu.memory_space<vmem>>, vector<1x16x16xf32>
    %1092 = vector.shape_cast %1091 : vector<1x16x16xf32> to vector<16x16xf32>
    %1093 = vector.shape_cast %1089 : vector<16x16xf32> to vector<1x16x16xf32>
    tpu.vector_store %arg5[%1090, %c2_317, %c0_318], %1093 {strides = array<i32>} : memref<4x20x128xf32, #tpu.memory_space<vmem>>, vector<1x16x16xf32>,
    %1094 = arith.addi %0, %c3_i32_304 : i32
    %c25_i32_319 = arith.constant 25 : i32
    %1095 = arith.muli %1094, %c25_i32_319 : i32
    %c0_i32_320 = arith.constant 0 : i32
    %1096 = arith.addi %1095, %c0_i32_320 : i32
    %1097 = arith.index_cast %1096 : i32 to index
    %1098 = memref.load %arg3[%1097] : memref<100xf32, #tpu.memory_space<smem>>
    %c1_i32_321 = arith.constant 1 : i32
    %1099 = arith.addi %1095, %c1_i32_321 : i32
    %1100 = arith.index_cast %1099 : i32 to index
    %1101 = memref.load %arg3[%1100] : memref<100xf32, #tpu.memory_space<smem>>
    %c2_i32_322 = arith.constant 2 : i32
    %1102 = arith.addi %1095, %c2_i32_322 : i32
    %1103 = arith.index_cast %1102 : i32 to index
    %1104 = memref.load %arg3[%1103] : memref<100xf32, #tpu.memory_space<smem>>
    %c3_i32_323 = arith.constant 3 : i32
    %1105 = arith.addi %1095, %c3_i32_323 : i32
    %1106 = arith.index_cast %1105 : i32 to index
    %1107 = memref.load %arg3[%1106] : memref<100xf32, #tpu.memory_space<smem>>
    %c4_i32_324 = arith.constant 4 : i32
    %1108 = arith.addi %1095, %c4_i32_324 : i32
    %1109 = arith.index_cast %1108 : i32 to index
    %1110 = memref.load %arg3[%1109] : memref<100xf32, #tpu.memory_space<smem>>
    %c5_i32_325 = arith.constant 5 : i32
    %1111 = arith.addi %1095, %c5_i32_325 : i32
    %1112 = arith.index_cast %1111 : i32 to index
    %1113 = memref.load %arg3[%1112] : memref<100xf32, #tpu.memory_space<smem>>
    %c6_i32_326 = arith.constant 6 : i32
    %1114 = arith.addi %1095, %c6_i32_326 : i32
    %1115 = arith.index_cast %1114 : i32 to index
    %1116 = memref.load %arg3[%1115] : memref<100xf32, #tpu.memory_space<smem>>
    %c7_i32_327 = arith.constant 7 : i32
    %1117 = arith.addi %1095, %c7_i32_327 : i32
    %1118 = arith.index_cast %1117 : i32 to index
    %1119 = memref.load %arg3[%1118] : memref<100xf32, #tpu.memory_space<smem>>
    %c8_i32_328 = arith.constant 8 : i32
    %1120 = arith.addi %1095, %c8_i32_328 : i32
    %1121 = arith.index_cast %1120 : i32 to index
    %1122 = memref.load %arg3[%1121] : memref<100xf32, #tpu.memory_space<smem>>
    %c9_i32_329 = arith.constant 9 : i32
    %1123 = arith.addi %1095, %c9_i32_329 : i32
    %1124 = arith.index_cast %1123 : i32 to index
    %1125 = memref.load %arg3[%1124] : memref<100xf32, #tpu.memory_space<smem>>
    %c10_i32_330 = arith.constant 10 : i32
    %1126 = arith.addi %1095, %c10_i32_330 : i32
    %1127 = arith.index_cast %1126 : i32 to index
    %1128 = memref.load %arg3[%1127] : memref<100xf32, #tpu.memory_space<smem>>
    %c11_i32_331 = arith.constant 11 : i32
    %1129 = arith.addi %1095, %c11_i32_331 : i32
    %1130 = arith.index_cast %1129 : i32 to index
    %1131 = memref.load %arg3[%1130] : memref<100xf32, #tpu.memory_space<smem>>
    %c12_i32_332 = arith.constant 12 : i32
    %1132 = arith.addi %1095, %c12_i32_332 : i32
    %1133 = arith.index_cast %1132 : i32 to index
    %1134 = memref.load %arg3[%1133] : memref<100xf32, #tpu.memory_space<smem>>
    %c13_i32_333 = arith.constant 13 : i32
    %1135 = arith.addi %1095, %c13_i32_333 : i32
    %1136 = arith.index_cast %1135 : i32 to index
    %1137 = memref.load %arg3[%1136] : memref<100xf32, #tpu.memory_space<smem>>
    %c14_i32_334 = arith.constant 14 : i32
    %1138 = arith.addi %1095, %c14_i32_334 : i32
    %1139 = arith.index_cast %1138 : i32 to index
    %1140 = memref.load %arg3[%1139] : memref<100xf32, #tpu.memory_space<smem>>
    %c15_i32_335 = arith.constant 15 : i32
    %1141 = arith.addi %1095, %c15_i32_335 : i32
    %1142 = arith.index_cast %1141 : i32 to index
    %1143 = memref.load %arg3[%1142] : memref<100xf32, #tpu.memory_space<smem>>
    %c16_i32_336 = arith.constant 16 : i32
    %1144 = arith.addi %1095, %c16_i32_336 : i32
    %1145 = arith.index_cast %1144 : i32 to index
    %1146 = memref.load %arg3[%1145] : memref<100xf32, #tpu.memory_space<smem>>
    %c17_i32_337 = arith.constant 17 : i32
    %1147 = arith.addi %1095, %c17_i32_337 : i32
    %1148 = arith.index_cast %1147 : i32 to index
    %1149 = memref.load %arg3[%1148] : memref<100xf32, #tpu.memory_space<smem>>
    %c18_i32_338 = arith.constant 18 : i32
    %1150 = arith.addi %1095, %c18_i32_338 : i32
    %1151 = arith.index_cast %1150 : i32 to index
    %1152 = memref.load %arg3[%1151] : memref<100xf32, #tpu.memory_space<smem>>
    %c19_i32_339 = arith.constant 19 : i32
    %1153 = arith.addi %1095, %c19_i32_339 : i32
    %1154 = arith.index_cast %1153 : i32 to index
    %1155 = memref.load %arg3[%1154] : memref<100xf32, #tpu.memory_space<smem>>
    %c20_i32_340 = arith.constant 20 : i32
    %1156 = arith.addi %1095, %c20_i32_340 : i32
    %1157 = arith.index_cast %1156 : i32 to index
    %1158 = memref.load %arg3[%1157] : memref<100xf32, #tpu.memory_space<smem>>
    %c21_i32_341 = arith.constant 21 : i32
    %1159 = arith.addi %1095, %c21_i32_341 : i32
    %1160 = arith.index_cast %1159 : i32 to index
    %1161 = memref.load %arg3[%1160] : memref<100xf32, #tpu.memory_space<smem>>
    %c22_i32_342 = arith.constant 22 : i32
    %1162 = arith.addi %1095, %c22_i32_342 : i32
    %1163 = arith.index_cast %1162 : i32 to index
    %1164 = memref.load %arg3[%1163] : memref<100xf32, #tpu.memory_space<smem>>
    %c23_i32_343 = arith.constant 23 : i32
    %1165 = arith.addi %1095, %c23_i32_343 : i32
    %1166 = arith.index_cast %1165 : i32 to index
    %1167 = memref.load %arg3[%1166] : memref<100xf32, #tpu.memory_space<smem>>
    %c24_i32_344 = arith.constant 24 : i32
    %1168 = arith.addi %1095, %c24_i32_344 : i32
    %1169 = arith.index_cast %1168 : i32 to index
    %1170 = memref.load %arg3[%1169] : memref<100xf32, #tpu.memory_space<smem>>
    %c0_i32_345 = arith.constant 0 : i32
    %c8_i32_346 = arith.constant 8 : i32
    %1171 = arith.muli %c0_i32_345, %c8_i32_346 : i32
    %1172 = tpu.assume_multiple %1171, 8 : i32
    %cst_347 = arith.constant 0.000000e+00 : f32
    %1173 = vector.broadcast %cst_347 : f32 to vector<8x128xf32>
    %c0_i32_348 = arith.constant 0 : i32
    %1174 = arith.addi %1172, %c0_i32_348 : i32
    %1175 = arith.index_cast %c3_i32_304 : i32 to index
    %1176 = arith.index_cast %1174 : i32 to index
    %c0_349 = arith.constant 0 : index
    %1177 = vector.load %arg5[%1175, %1176, %c0_349] : memref<4x20x128xf32, #tpu.memory_space<vmem>>, vector<1x8x128xf32>
    %1178 = vector.shape_cast %1177 : vector<1x8x128xf32> to vector<8x128xf32>
    %c2_i32_350 = arith.constant 2 : i32
    %1179 = tpu.dynamic_rotate %1178 by %c2_i32_350 dim 1 : vector<8x128xf32>, i32 -> vector<8x128xf32>
    %1180 = vector.broadcast %1098 : f32 to vector<8x128xf32>
    %1181 = arith.mulf %1179, %1180 : vector<8x128xf32>
    %1182 = arith.addf %1173, %1181 : vector<8x128xf32>
    %c1_i32_351 = arith.constant 1 : i32
    %1183 = tpu.dynamic_rotate %1178 by %c1_i32_351 dim 1 : vector<8x128xf32>, i32 -> vector<8x128xf32>
    %1184 = vector.broadcast %1101 : f32 to vector<8x128xf32>
    %1185 = arith.mulf %1183, %1184 : vector<8x128xf32>
    %1186 = arith.addf %1182, %1185 : vector<8x128xf32>
    %1187 = vector.broadcast %1104 : f32 to vector<8x128xf32>
    %1188 = arith.mulf %1178, %1187 : vector<8x128xf32>
    %1189 = arith.addf %1186, %1188 : vector<8x128xf32>
    %c127_i32_352 = arith.constant 127 : i32
    %1190 = tpu.dynamic_rotate %1178 by %c127_i32_352 dim 1 : vector<8x128xf32>, i32 -> vector<8x128xf32>
    %1191 = vector.broadcast %1107 : f32 to vector<8x128xf32>
    %1192 = arith.mulf %1190, %1191 : vector<8x128xf32>
    %1193 = arith.addf %1189, %1192 : vector<8x128xf32>
    %c126_i32_353 = arith.constant 126 : i32
    %1194 = tpu.dynamic_rotate %1178 by %c126_i32_353 dim 1 : vector<8x128xf32>, i32 -> vector<8x128xf32>
    %1195 = vector.broadcast %1110 : f32 to vector<8x128xf32>
    %1196 = arith.mulf %1194, %1195 : vector<8x128xf32>
    %1197 = arith.addf %1193, %1196 : vector<8x128xf32>
    %c1_i32_354 = arith.constant 1 : i32
    %1198 = arith.addi %1172, %c1_i32_354 : i32
    %1199 = arith.index_cast %c3_i32_304 : i32 to index
    %1200 = arith.index_cast %1198 : i32 to index
    %c0_355 = arith.constant 0 : index
    %1201 = vector.load %arg5[%1199, %1200, %c0_355] : memref<4x20x128xf32, #tpu.memory_space<vmem>>, vector<1x8x128xf32>
    %1202 = vector.shape_cast %1201 : vector<1x8x128xf32> to vector<8x128xf32>
    %c2_i32_356 = arith.constant 2 : i32
    %1203 = tpu.dynamic_rotate %1202 by %c2_i32_356 dim 1 : vector<8x128xf32>, i32 -> vector<8x128xf32>
    %1204 = vector.broadcast %1113 : f32 to vector<8x128xf32>
    %1205 = arith.mulf %1203, %1204 : vector<8x128xf32>
    %1206 = arith.addf %1197, %1205 : vector<8x128xf32>
    %c1_i32_357 = arith.constant 1 : i32
    %1207 = tpu.dynamic_rotate %1202 by %c1_i32_357 dim 1 : vector<8x128xf32>, i32 -> vector<8x128xf32>
    %1208 = vector.broadcast %1116 : f32 to vector<8x128xf32>
    %1209 = arith.mulf %1207, %1208 : vector<8x128xf32>
    %1210 = arith.addf %1206, %1209 : vector<8x128xf32>
    %1211 = vector.broadcast %1119 : f32 to vector<8x128xf32>
    %1212 = arith.mulf %1202, %1211 : vector<8x128xf32>
    %1213 = arith.addf %1210, %1212 : vector<8x128xf32>
    %c127_i32_358 = arith.constant 127 : i32
    %1214 = tpu.dynamic_rotate %1202 by %c127_i32_358 dim 1 : vector<8x128xf32>, i32 -> vector<8x128xf32>
    %1215 = vector.broadcast %1122 : f32 to vector<8x128xf32>
    %1216 = arith.mulf %1214, %1215 : vector<8x128xf32>
    %1217 = arith.addf %1213, %1216 : vector<8x128xf32>
    %c126_i32_359 = arith.constant 126 : i32
    %1218 = tpu.dynamic_rotate %1202 by %c126_i32_359 dim 1 : vector<8x128xf32>, i32 -> vector<8x128xf32>
    %1219 = vector.broadcast %1125 : f32 to vector<8x128xf32>
    %1220 = arith.mulf %1218, %1219 : vector<8x128xf32>
    %1221 = arith.addf %1217, %1220 : vector<8x128xf32>
    %c2_i32_360 = arith.constant 2 : i32
    %1222 = arith.addi %1172, %c2_i32_360 : i32
    %1223 = arith.index_cast %c3_i32_304 : i32 to index
    %1224 = arith.index_cast %1222 : i32 to index
    %c0_361 = arith.constant 0 : index
    %1225 = vector.load %arg5[%1223, %1224, %c0_361] : memref<4x20x128xf32, #tpu.memory_space<vmem>>, vector<1x8x128xf32>
    %1226 = vector.shape_cast %1225 : vector<1x8x128xf32> to vector<8x128xf32>
    %c2_i32_362 = arith.constant 2 : i32
    %1227 = tpu.dynamic_rotate %1226 by %c2_i32_362 dim 1 : vector<8x128xf32>, i32 -> vector<8x128xf32>
    %1228 = vector.broadcast %1128 : f32 to vector<8x128xf32>
    %1229 = arith.mulf %1227, %1228 : vector<8x128xf32>
    %1230 = arith.addf %1221, %1229 : vector<8x128xf32>
    %c1_i32_363 = arith.constant 1 : i32
    %1231 = tpu.dynamic_rotate %1226 by %c1_i32_363 dim 1 : vector<8x128xf32>, i32 -> vector<8x128xf32>
    %1232 = vector.broadcast %1131 : f32 to vector<8x128xf32>
    %1233 = arith.mulf %1231, %1232 : vector<8x128xf32>
    %1234 = arith.addf %1230, %1233 : vector<8x128xf32>
    %1235 = vector.broadcast %1134 : f32 to vector<8x128xf32>
    %1236 = arith.mulf %1226, %1235 : vector<8x128xf32>
    %1237 = arith.addf %1234, %1236 : vector<8x128xf32>
    %c127_i32_364 = arith.constant 127 : i32
    %1238 = tpu.dynamic_rotate %1226 by %c127_i32_364 dim 1 : vector<8x128xf32>, i32 -> vector<8x128xf32>
    %1239 = vector.broadcast %1137 : f32 to vector<8x128xf32>
    %1240 = arith.mulf %1238, %1239 : vector<8x128xf32>
    %1241 = arith.addf %1237, %1240 : vector<8x128xf32>
    %c126_i32_365 = arith.constant 126 : i32
    %1242 = tpu.dynamic_rotate %1226 by %c126_i32_365 dim 1 : vector<8x128xf32>, i32 -> vector<8x128xf32>
    %1243 = vector.broadcast %1140 : f32 to vector<8x128xf32>
    %1244 = arith.mulf %1242, %1243 : vector<8x128xf32>
    %1245 = arith.addf %1241, %1244 : vector<8x128xf32>
    %c3_i32_366 = arith.constant 3 : i32
    %1246 = arith.addi %1172, %c3_i32_366 : i32
    %1247 = arith.index_cast %c3_i32_304 : i32 to index
    %1248 = arith.index_cast %1246 : i32 to index
    %c0_367 = arith.constant 0 : index
    %1249 = vector.load %arg5[%1247, %1248, %c0_367] : memref<4x20x128xf32, #tpu.memory_space<vmem>>, vector<1x8x128xf32>
    %1250 = vector.shape_cast %1249 : vector<1x8x128xf32> to vector<8x128xf32>
    %c2_i32_368 = arith.constant 2 : i32
    %1251 = tpu.dynamic_rotate %1250 by %c2_i32_368 dim 1 : vector<8x128xf32>, i32 -> vector<8x128xf32>
    %1252 = vector.broadcast %1143 : f32 to vector<8x128xf32>
    %1253 = arith.mulf %1251, %1252 : vector<8x128xf32>
    %1254 = arith.addf %1245, %1253 : vector<8x128xf32>
    %c1_i32_369 = arith.constant 1 : i32
    %1255 = tpu.dynamic_rotate %1250 by %c1_i32_369 dim 1 : vector<8x128xf32>, i32 -> vector<8x128xf32>
    %1256 = vector.broadcast %1146 : f32 to vector<8x128xf32>
    %1257 = arith.mulf %1255, %1256 : vector<8x128xf32>
    %1258 = arith.addf %1254, %1257 : vector<8x128xf32>
    %1259 = vector.broadcast %1149 : f32 to vector<8x128xf32>
    %1260 = arith.mulf %1250, %1259 : vector<8x128xf32>
    %1261 = arith.addf %1258, %1260 : vector<8x128xf32>
    %c127_i32_370 = arith.constant 127 : i32
    %1262 = tpu.dynamic_rotate %1250 by %c127_i32_370 dim 1 : vector<8x128xf32>, i32 -> vector<8x128xf32>
    %1263 = vector.broadcast %1152 : f32 to vector<8x128xf32>
    %1264 = arith.mulf %1262, %1263 : vector<8x128xf32>
    %1265 = arith.addf %1261, %1264 : vector<8x128xf32>
    %c126_i32_371 = arith.constant 126 : i32
    %1266 = tpu.dynamic_rotate %1250 by %c126_i32_371 dim 1 : vector<8x128xf32>, i32 -> vector<8x128xf32>
    %1267 = vector.broadcast %1155 : f32 to vector<8x128xf32>
    %1268 = arith.mulf %1266, %1267 : vector<8x128xf32>
    %1269 = arith.addf %1265, %1268 : vector<8x128xf32>
    %c4_i32_372 = arith.constant 4 : i32
    %1270 = arith.addi %1172, %c4_i32_372 : i32
    %1271 = arith.index_cast %c3_i32_304 : i32 to index
    %1272 = arith.index_cast %1270 : i32 to index
    %c0_373 = arith.constant 0 : index
    %1273 = vector.load %arg5[%1271, %1272, %c0_373] : memref<4x20x128xf32, #tpu.memory_space<vmem>>, vector<1x8x128xf32>
    %1274 = vector.shape_cast %1273 : vector<1x8x128xf32> to vector<8x128xf32>
    %c2_i32_374 = arith.constant 2 : i32
    %1275 = tpu.dynamic_rotate %1274 by %c2_i32_374 dim 1 : vector<8x128xf32>, i32 -> vector<8x128xf32>
    %1276 = vector.broadcast %1158 : f32 to vector<8x128xf32>
    %1277 = arith.mulf %1275, %1276 : vector<8x128xf32>
    %1278 = arith.addf %1269, %1277 : vector<8x128xf32>
    %c1_i32_375 = arith.constant 1 : i32
    %1279 = tpu.dynamic_rotate %1274 by %c1_i32_375 dim 1 : vector<8x128xf32>, i32 -> vector<8x128xf32>
    %1280 = vector.broadcast %1161 : f32 to vector<8x128xf32>
    %1281 = arith.mulf %1279, %1280 : vector<8x128xf32>
    %1282 = arith.addf %1278, %1281 : vector<8x128xf32>
    %1283 = vector.broadcast %1164 : f32 to vector<8x128xf32>
    %1284 = arith.mulf %1274, %1283 : vector<8x128xf32>
    %1285 = arith.addf %1282, %1284 : vector<8x128xf32>
    %c127_i32_376 = arith.constant 127 : i32
    %1286 = tpu.dynamic_rotate %1274 by %c127_i32_376 dim 1 : vector<8x128xf32>, i32 -> vector<8x128xf32>
    %1287 = vector.broadcast %1167 : f32 to vector<8x128xf32>
    %1288 = arith.mulf %1286, %1287 : vector<8x128xf32>
    %1289 = arith.addf %1285, %1288 : vector<8x128xf32>
    %c126_i32_377 = arith.constant 126 : i32
    %1290 = tpu.dynamic_rotate %1274 by %c126_i32_377 dim 1 : vector<8x128xf32>, i32 -> vector<8x128xf32>
    %1291 = vector.broadcast %1170 : f32 to vector<8x128xf32>
    %1292 = arith.mulf %1290, %1291 : vector<8x128xf32>
    %1293 = arith.addf %1289, %1292 : vector<8x128xf32>
    %1294 = vector.extract_strided_slice %1293 {offsets = [0, 0], sizes = [8, 16], strides = [1, 1]} : vector<8x128xf32> to vector<8x16xf32>
    %c0_378 = arith.constant 0 : index
    %1295 = arith.index_cast %c3_i32_304 : i32 to index
    %1296 = arith.index_cast %1172 : i32 to index
    %c0_379 = arith.constant 0 : index
    %1297 = vector.load %arg4[%c0_378, %1295, %1296, %c0_379] : memref<1x4x16x16xf32, #tpu.memory_space<vmem>>, vector<1x1x8x16xf32>
    %1298 = vector.shape_cast %1297 : vector<1x1x8x16xf32> to vector<8x16xf32>
    %1299 = vector.shape_cast %1294 : vector<8x16xf32> to vector<1x1x8x16xf32>
    tpu.vector_store %arg4[%c0_378, %1295, %1296, %c0_379], %1299 {strides = array<i32>} : memref<1x4x16x16xf32, #tpu.memory_space<vmem>>, vector<1x1x8x16xf32>,
    %c1_i32_380 = arith.constant 1 : i32
    %c8_i32_381 = arith.constant 8 : i32
    %1300 = arith.muli %c1_i32_380, %c8_i32_381 : i32
    %1301 = tpu.assume_multiple %1300, 8 : i32
    %cst_382 = arith.constant 0.000000e+00 : f32
    %1302 = vector.broadcast %cst_382 : f32 to vector<8x128xf32>
    %c0_i32_383 = arith.constant 0 : i32
    %1303 = arith.addi %1301, %c0_i32_383 : i32
    %1304 = arith.index_cast %c3_i32_304 : i32 to index
    %1305 = arith.index_cast %1303 : i32 to index
    %c0_384 = arith.constant 0 : index
    %1306 = vector.load %arg5[%1304, %1305, %c0_384] : memref<4x20x128xf32, #tpu.memory_space<vmem>>, vector<1x8x128xf32>
    %1307 = vector.shape_cast %1306 : vector<1x8x128xf32> to vector<8x128xf32>
    %c2_i32_385 = arith.constant 2 : i32
    %1308 = tpu.dynamic_rotate %1307 by %c2_i32_385 dim 1 : vector<8x128xf32>, i32 -> vector<8x128xf32>
    %1309 = vector.broadcast %1098 : f32 to vector<8x128xf32>
    %1310 = arith.mulf %1308, %1309 : vector<8x128xf32>
    %1311 = arith.addf %1302, %1310 : vector<8x128xf32>
    %c1_i32_386 = arith.constant 1 : i32
    %1312 = tpu.dynamic_rotate %1307 by %c1_i32_386 dim 1 : vector<8x128xf32>, i32 -> vector<8x128xf32>
    %1313 = vector.broadcast %1101 : f32 to vector<8x128xf32>
    %1314 = arith.mulf %1312, %1313 : vector<8x128xf32>
    %1315 = arith.addf %1311, %1314 : vector<8x128xf32>
    %1316 = vector.broadcast %1104 : f32 to vector<8x128xf32>
    %1317 = arith.mulf %1307, %1316 : vector<8x128xf32>
    %1318 = arith.addf %1315, %1317 : vector<8x128xf32>
    %c127_i32_387 = arith.constant 127 : i32
    %1319 = tpu.dynamic_rotate %1307 by %c127_i32_387 dim 1 : vector<8x128xf32>, i32 -> vector<8x128xf32>
    %1320 = vector.broadcast %1107 : f32 to vector<8x128xf32>
    %1321 = arith.mulf %1319, %1320 : vector<8x128xf32>
    %1322 = arith.addf %1318, %1321 : vector<8x128xf32>
    %c126_i32_388 = arith.constant 126 : i32
    %1323 = tpu.dynamic_rotate %1307 by %c126_i32_388 dim 1 : vector<8x128xf32>, i32 -> vector<8x128xf32>
    %1324 = vector.broadcast %1110 : f32 to vector<8x128xf32>
    %1325 = arith.mulf %1323, %1324 : vector<8x128xf32>
    %1326 = arith.addf %1322, %1325 : vector<8x128xf32>
    %c1_i32_389 = arith.constant 1 : i32
    %1327 = arith.addi %1301, %c1_i32_389 : i32
    %1328 = arith.index_cast %c3_i32_304 : i32 to index
    %1329 = arith.index_cast %1327 : i32 to index
    %c0_390 = arith.constant 0 : index
    %1330 = vector.load %arg5[%1328, %1329, %c0_390] : memref<4x20x128xf32, #tpu.memory_space<vmem>>, vector<1x8x128xf32>
    %1331 = vector.shape_cast %1330 : vector<1x8x128xf32> to vector<8x128xf32>
    %c2_i32_391 = arith.constant 2 : i32
    %1332 = tpu.dynamic_rotate %1331 by %c2_i32_391 dim 1 : vector<8x128xf32>, i32 -> vector<8x128xf32>
    %1333 = vector.broadcast %1113 : f32 to vector<8x128xf32>
    %1334 = arith.mulf %1332, %1333 : vector<8x128xf32>
    %1335 = arith.addf %1326, %1334 : vector<8x128xf32>
    %c1_i32_392 = arith.constant 1 : i32
    %1336 = tpu.dynamic_rotate %1331 by %c1_i32_392 dim 1 : vector<8x128xf32>, i32 -> vector<8x128xf32>
    %1337 = vector.broadcast %1116 : f32 to vector<8x128xf32>
    %1338 = arith.mulf %1336, %1337 : vector<8x128xf32>
    %1339 = arith.addf %1335, %1338 : vector<8x128xf32>
    %1340 = vector.broadcast %1119 : f32 to vector<8x128xf32>
    %1341 = arith.mulf %1331, %1340 : vector<8x128xf32>
    %1342 = arith.addf %1339, %1341 : vector<8x128xf32>
    %c127_i32_393 = arith.constant 127 : i32
    %1343 = tpu.dynamic_rotate %1331 by %c127_i32_393 dim 1 : vector<8x128xf32>, i32 -> vector<8x128xf32>
    %1344 = vector.broadcast %1122 : f32 to vector<8x128xf32>
    %1345 = arith.mulf %1343, %1344 : vector<8x128xf32>
    %1346 = arith.addf %1342, %1345 : vector<8x128xf32>
    %c126_i32_394 = arith.constant 126 : i32
    %1347 = tpu.dynamic_rotate %1331 by %c126_i32_394 dim 1 : vector<8x128xf32>, i32 -> vector<8x128xf32>
    %1348 = vector.broadcast %1125 : f32 to vector<8x128xf32>
    %1349 = arith.mulf %1347, %1348 : vector<8x128xf32>
    %1350 = arith.addf %1346, %1349 : vector<8x128xf32>
    %c2_i32_395 = arith.constant 2 : i32
    %1351 = arith.addi %1301, %c2_i32_395 : i32
    %1352 = arith.index_cast %c3_i32_304 : i32 to index
    %1353 = arith.index_cast %1351 : i32 to index
    %c0_396 = arith.constant 0 : index
    %1354 = vector.load %arg5[%1352, %1353, %c0_396] : memref<4x20x128xf32, #tpu.memory_space<vmem>>, vector<1x8x128xf32>
    %1355 = vector.shape_cast %1354 : vector<1x8x128xf32> to vector<8x128xf32>
    %c2_i32_397 = arith.constant 2 : i32
    %1356 = tpu.dynamic_rotate %1355 by %c2_i32_397 dim 1 : vector<8x128xf32>, i32 -> vector<8x128xf32>
    %1357 = vector.broadcast %1128 : f32 to vector<8x128xf32>
    %1358 = arith.mulf %1356, %1357 : vector<8x128xf32>
    %1359 = arith.addf %1350, %1358 : vector<8x128xf32>
    %c1_i32_398 = arith.constant 1 : i32
    %1360 = tpu.dynamic_rotate %1355 by %c1_i32_398 dim 1 : vector<8x128xf32>, i32 -> vector<8x128xf32>
    %1361 = vector.broadcast %1131 : f32 to vector<8x128xf32>
    %1362 = arith.mulf %1360, %1361 : vector<8x128xf32>
    %1363 = arith.addf %1359, %1362 : vector<8x128xf32>
    %1364 = vector.broadcast %1134 : f32 to vector<8x128xf32>
    %1365 = arith.mulf %1355, %1364 : vector<8x128xf32>
    %1366 = arith.addf %1363, %1365 : vector<8x128xf32>
    %c127_i32_399 = arith.constant 127 : i32
    %1367 = tpu.dynamic_rotate %1355 by %c127_i32_399 dim 1 : vector<8x128xf32>, i32 -> vector<8x128xf32>
    %1368 = vector.broadcast %1137 : f32 to vector<8x128xf32>
    %1369 = arith.mulf %1367, %1368 : vector<8x128xf32>
    %1370 = arith.addf %1366, %1369 : vector<8x128xf32>
    %c126_i32_400 = arith.constant 126 : i32
    %1371 = tpu.dynamic_rotate %1355 by %c126_i32_400 dim 1 : vector<8x128xf32>, i32 -> vector<8x128xf32>
    %1372 = vector.broadcast %1140 : f32 to vector<8x128xf32>
    %1373 = arith.mulf %1371, %1372 : vector<8x128xf32>
    %1374 = arith.addf %1370, %1373 : vector<8x128xf32>
    %c3_i32_401 = arith.constant 3 : i32
    %1375 = arith.addi %1301, %c3_i32_401 : i32
    %1376 = arith.index_cast %c3_i32_304 : i32 to index
    %1377 = arith.index_cast %1375 : i32 to index
    %c0_402 = arith.constant 0 : index
    %1378 = vector.load %arg5[%1376, %1377, %c0_402] : memref<4x20x128xf32, #tpu.memory_space<vmem>>, vector<1x8x128xf32>
    %1379 = vector.shape_cast %1378 : vector<1x8x128xf32> to vector<8x128xf32>
    %c2_i32_403 = arith.constant 2 : i32
    %1380 = tpu.dynamic_rotate %1379 by %c2_i32_403 dim 1 : vector<8x128xf32>, i32 -> vector<8x128xf32>
    %1381 = vector.broadcast %1143 : f32 to vector<8x128xf32>
    %1382 = arith.mulf %1380, %1381 : vector<8x128xf32>
    %1383 = arith.addf %1374, %1382 : vector<8x128xf32>
    %c1_i32_404 = arith.constant 1 : i32
    %1384 = tpu.dynamic_rotate %1379 by %c1_i32_404 dim 1 : vector<8x128xf32>, i32 -> vector<8x128xf32>
    %1385 = vector.broadcast %1146 : f32 to vector<8x128xf32>
    %1386 = arith.mulf %1384, %1385 : vector<8x128xf32>
    %1387 = arith.addf %1383, %1386 : vector<8x128xf32>
    %1388 = vector.broadcast %1149 : f32 to vector<8x128xf32>
    %1389 = arith.mulf %1379, %1388 : vector<8x128xf32>
    %1390 = arith.addf %1387, %1389 : vector<8x128xf32>
    %c127_i32_405 = arith.constant 127 : i32
    %1391 = tpu.dynamic_rotate %1379 by %c127_i32_405 dim 1 : vector<8x128xf32>, i32 -> vector<8x128xf32>
    %1392 = vector.broadcast %1152 : f32 to vector<8x128xf32>
    %1393 = arith.mulf %1391, %1392 : vector<8x128xf32>
    %1394 = arith.addf %1390, %1393 : vector<8x128xf32>
    %c126_i32_406 = arith.constant 126 : i32
    %1395 = tpu.dynamic_rotate %1379 by %c126_i32_406 dim 1 : vector<8x128xf32>, i32 -> vector<8x128xf32>
    %1396 = vector.broadcast %1155 : f32 to vector<8x128xf32>
    %1397 = arith.mulf %1395, %1396 : vector<8x128xf32>
    %1398 = arith.addf %1394, %1397 : vector<8x128xf32>
    %c4_i32_407 = arith.constant 4 : i32
    %1399 = arith.addi %1301, %c4_i32_407 : i32
    %1400 = arith.index_cast %c3_i32_304 : i32 to index
    %1401 = arith.index_cast %1399 : i32 to index
    %c0_408 = arith.constant 0 : index
    %1402 = vector.load %arg5[%1400, %1401, %c0_408] : memref<4x20x128xf32, #tpu.memory_space<vmem>>, vector<1x8x128xf32>
    %1403 = vector.shape_cast %1402 : vector<1x8x128xf32> to vector<8x128xf32>
    %c2_i32_409 = arith.constant 2 : i32
    %1404 = tpu.dynamic_rotate %1403 by %c2_i32_409 dim 1 : vector<8x128xf32>, i32 -> vector<8x128xf32>
    %1405 = vector.broadcast %1158 : f32 to vector<8x128xf32>
    %1406 = arith.mulf %1404, %1405 : vector<8x128xf32>
    %1407 = arith.addf %1398, %1406 : vector<8x128xf32>
    %c1_i32_410 = arith.constant 1 : i32
    %1408 = tpu.dynamic_rotate %1403 by %c1_i32_410 dim 1 : vector<8x128xf32>, i32 -> vector<8x128xf32>
    %1409 = vector.broadcast %1161 : f32 to vector<8x128xf32>
    %1410 = arith.mulf %1408, %1409 : vector<8x128xf32>
    %1411 = arith.addf %1407, %1410 : vector<8x128xf32>
    %1412 = vector.broadcast %1164 : f32 to vector<8x128xf32>
    %1413 = arith.mulf %1403, %1412 : vector<8x128xf32>
    %1414 = arith.addf %1411, %1413 : vector<8x128xf32>
    %c127_i32_411 = arith.constant 127 : i32
    %1415 = tpu.dynamic_rotate %1403 by %c127_i32_411 dim 1 : vector<8x128xf32>, i32 -> vector<8x128xf32>
    %1416 = vector.broadcast %1167 : f32 to vector<8x128xf32>
    %1417 = arith.mulf %1415, %1416 : vector<8x128xf32>
    %1418 = arith.addf %1414, %1417 : vector<8x128xf32>
    %c126_i32_412 = arith.constant 126 : i32
    %1419 = tpu.dynamic_rotate %1403 by %c126_i32_412 dim 1 : vector<8x128xf32>, i32 -> vector<8x128xf32>
    %1420 = vector.broadcast %1170 : f32 to vector<8x128xf32>
    %1421 = arith.mulf %1419, %1420 : vector<8x128xf32>
    %1422 = arith.addf %1418, %1421 : vector<8x128xf32>
    %1423 = vector.extract_strided_slice %1422 {offsets = [0, 0], sizes = [8, 16], strides = [1, 1]} : vector<8x128xf32> to vector<8x16xf32>
    %c0_413 = arith.constant 0 : index
    %1424 = arith.index_cast %c3_i32_304 : i32 to index
    %1425 = arith.index_cast %1301 : i32 to index
    %c0_414 = arith.constant 0 : index
    %1426 = vector.load %arg4[%c0_413, %1424, %1425, %c0_414] : memref<1x4x16x16xf32, #tpu.memory_space<vmem>>, vector<1x1x8x16xf32>
    %1427 = vector.shape_cast %1426 : vector<1x1x8x16xf32> to vector<8x16xf32>
    %1428 = vector.shape_cast %1423 : vector<8x16xf32> to vector<1x1x8x16xf32>
    tpu.vector_store %arg4[%c0_413, %1424, %1425, %c0_414], %1428 {strides = array<i32>} : memref<1x4x16x16xf32, #tpu.memory_space<vmem>>, vector<1x1x8x16xf32>,
    %c2_i32_415 = arith.constant 2 : i32
    %c4_i32_416 = arith.constant 4 : i32
    return
  }
  func.func @transform_0(%arg0: i32, %arg1: i32) -> (i32, i32, i32, i32) {
    %c0_i32 = arith.constant 0 : i32
    %c0_i32_0 = arith.constant 0 : i32
    %c0_i32_1 = arith.constant 0 : i32
    return %arg0, %arg1, %c0_i32, %c0_i32_0 : i32, i32, i32, i32
  }
  func.func @transform_1(%arg0: i32, %arg1: i32) -> i32 {
    %c0_i32 = arith.constant 0 : i32
    %c0_i32_0 = arith.constant 0 : i32
    return %c0_i32 : i32
  }
  func.func @transform_2(%arg0: i32, %arg1: i32) -> (i32, i32, i32, i32) {
    %c0_i32 = arith.constant 0 : i32
    %c0_i32_0 = arith.constant 0 : i32
    %c0_i32_1 = arith.constant 0 : i32
    return %arg0, %arg1, %c0_i32, %c0_i32_0 : i32, i32, i32, i32
  }
}

</mosaic_0001>

<llo_original>
// kernel: tpu_custom_call.1
$region0: #{tpu_custom_call.1}
  #allocation0 [shape = 'u32[]', space=smem, size = 0x4, offset = 0x4, fixed_abs, tag = 'smem constant byte address 0x4 - core index']
  #allocation1 [shape = 'u32[72,128]{1,0:T(1,128)}', space=vmem, size = 0x9000, scoped, tag = 'internal scratch']
  #allocation2 [shape = 'f32[4,20,128]{2,1,0:T(8,128)}', space=vmem, size = 0xc000, scoped, tag = 'scratch operand']
  %s0 = inlined_call_operand.hbm [shape: f32[2,4,16,16], index: 0, kind: input, shape index: {}]
  %s1 = inlined_call_operand.hbm [shape: f32[100], index: 1, kind: input, shape index: {}]
  %s2 = inlined_call_operand.hbm [shape: f32[2,4,16,16], index: 2, kind: output, shape index: {}]
  %s3 = sld [smem:[#allocation0]]
  $region49: #{tpu_custom_call.1} parent=0
    _
  %s5 = ssub.s32 1, %s3
  %s6 = scalar_select 0, %s5, %s3
  $region1: #{tpu_custom_call.1} parent=0
    #allocation3 [shape = 'u8[65536]{0}', space=vmem, size = 0x10000, scoped, tag = 'input window, operand 0']
    #allocation4 [shape = 's32[2]{0}', space=sflag, size = 0x8, scoped, tag = 'scoped memory for tpu_custom_call.1']
    #allocation5 [shape = 's32[2]{0}', space=sflag, size = 0x8, scoped, tag = 'scoped memory for tpu_custom_call.1']
    #allocation6 [shape = 's32[2]{0}', space=sflag, size = 0x8, scoped, tag = 'scoped memory for tpu_custom_call.1']
    #allocation7 [shape = 'u8[512]{0}', space=smem, size = 0x200, scoped, tag = 'input window, operand 1, single buffered']
    #allocation8 [shape = 'u8[65536]{0}', space=vmem, size = 0x10000, scoped, tag = 'output window, operand 0']
    %7 = vsyncpa [#allocation4], 0
    %s8 = scalar_lea.sflag [#allocation4], 1
    %9 = vsyncpa %s8, 0
    %10 = vsyncpa [#allocation6], 0
    %11 = vsyncpa [#allocation5], 0
    %s12 = scalar_lea.sflag [#allocation5], 1
    %13 = vsyncpa %s12, 0
    loop: start=0, step=1, limit=4
    $region2: #{tpu_custom_call.1} parent=1 // loop_pre_header
      _
    $region3: #{tpu_custom_call.1} parent=1 // loop_header
      %s15 = sphi 0, %s19
      %p16 = scmp.ge.s32.totalorder %s15, 4
      %s22 = sphi 0, %s34
      %s23 = sphi 0, %s30
      %s24 = sphi 0, %s22
      %s25 = sphi 0, %s23
      %s26 = sphi 0, %s24
      %s27 = sphi 0, %s25
      %s39 = sphi 0, %s41
      %s42 = sphi 0, %s39
      %s43 = sphi 0, %s42
      %s59 = sphi 0, %s43
      %s63 = sphi 0, %s63
      %s65 = sphi 0, %s63
      %s66 = sphi 0, %s65
      %s80 = sphi 0, %s66
      %s88 = sphi 0, %s90
      %s91 = sphi 0, %s88
      %s92 = sphi 0, %s91
      %s108 = sphi 0, %s92
    $region4: #{tpu_custom_call.1} parent=1 // loop_header_branch
      %18 = sbr.rel (%p16) target = $region8
    $region5: #{tpu_custom_call.1} parent=1 // loop_body
      %s20 = ssub.s32 %s15, 1
      %s21 = ssub.s32 %s15, 2
      %s28 = sadd.s32 1, %s23
      %p29 = scmp.ge.s32.totalorder %s28, 1
      %s30 = scalar_select %p29, 0, %s28
      %s31 = sadd.s32 1, %s22
      %s32 = scalar_select %p29, %s31, %s22
      %p33 = scmp.ge.s32.totalorder %s32, 2
      %s34 = scalar_select %p33, 0, %s32
      %s35 = ssub.s32 %s22, %s34
      %s36 = ssub.s32 %s23, %s30
      %s37 = sor.u32 %s35, %s36
      %p38 = scmp.eq.s32.totalorder %s37, 0
      %s40 = sadd.s32 %s39, 1
      %s41 = scalar_select %p38, %s39, %s40
      %p44 = pneg %p38
      %p45 = scmp.eq.s32.totalorder %s15, 1
      %p46 = por %p44, %p45
      %p47 = scmp.ne.s32.totalorder %s39, %s42
      %p48 = scmp.eq.s32.totalorder %s15, 0
      %p49 = por %p47, %p48
      %p50 = scmp.ne.s32.totalorder %s39, %s42
      %p51 = scmp.eq.s32.totalorder %s20, 1
      %p52 = por %p50, %p51
      %p53 = scmp.ne.s32.totalorder %s42, %s43
      %p54 = scmp.eq.s32.totalorder %s20, 0
      %p55 = por %p53, %p54
      %p56 = scmp.ne.s32.totalorder %s42, %s43
      %p57 = scmp.eq.s32.totalorder %s21, 1
      %p58 = por %p56, %p57
      %p60 = scmp.ne.s32.totalorder %s43, %s59
      %p61 = scmp.eq.s32.totalorder %s21, 0
      %p62 = por %p60, %p61
      %s64 = sadd.s32 %s63, 1
      %p67 = scmp.eq.s32.totalorder %s15, 1
      %p68 = scmp.ne.s32.totalorder %s63, %s65
      %p69 = scmp.eq.s32.totalorder %s15, 0
      %p70 = por %p68, %p69
      %p71 = scmp.ne.s32.totalorder %s63, %s65
      %p72 = scmp.eq.s32.totalorder %s20, 1
      %p73 = por %p71, %p72
      %p74 = scmp.ne.s32.totalorder %s65, %s66
      %p75 = scmp.eq.s32.totalorder %s20, 0
      %p76 = por %p74, %p75
      %p77 = scmp.ne.s32.totalorder %s65, %s66
      %p78 = scmp.eq.s32.totalorder %s21, 1
      %p79 = por %p77, %p78
      %p81 = scmp.ne.s32.totalorder %s66, %s80
      %p82 = scmp.eq.s32.totalorder %s21, 0
      %p83 = por %p81, %p82
      %s84 = ssub.s32 %s22, %s34
      %s85 = ssub.s32 %s23, %s30
      %s86 = sor.u32 %s84, %s85
      %p87 = scmp.eq.s32.totalorder %s86, 0
      %s89 = sadd.s32 %s88, 1
      %s90 = scalar_select %p87, %s88, %s89
      %p93 = pneg %p87
      %p94 = scmp.eq.s32.totalorder %s15, 1
      %p95 = por %p93, %p94
      %p96 = scmp.ne.s32.totalorder %s88, %s91
      %p97 = scmp.eq.s32.totalorder %s15, 0
      %p98 = por %p96, %p97
      %p99 = scmp.ne.s32.totalorder %s88, %s91
      %p100 = scmp.eq.s32.totalorder %s20, 1
      %p101 = por %p99, %p100
      %p102 = scmp.ne.s32.totalorder %s91, %s92
      %p103 = scmp.eq.s32.totalorder %s20, 0
      %p104 = por %p102, %p103
      %p105 = scmp.ne.s32.totalorder %s91, %s92
      %p106 = scmp.eq.s32.totalorder %s21, 1
      %p107 = por %p105, %p106
      %p109 = scmp.ne.s32.totalorder %s92, %s108
      %p110 = scmp.eq.s32.totalorder %s21, 0
      %p111 = por %p109, %p110
      %p112 = scmp.le.s32.totalorder 1, %s15
      %p113 = scmp.lt.s32.totalorder %s15, 3
      %p114 = pnand %p112, %p113
      %p115 = pneg %p114
      // Predicated region
      $region9: #{tpu_custom_call.1} parent=5 // pred_check
        _
      $region10: #{tpu_custom_call.1} parent=5 // pred_check_branch
        %117 = sbr.rel (%p114) target = $region12
      $region11: #{tpu_custom_call.1} parent=5 // pred_region
        %s118 = ssub.s32 %s15, 1
        // Predicated region
        $region13: #{tpu_custom_call.1} parent=11 // pred_check
          %p119 = pneg %p76
        $region14: #{tpu_custom_call.1} parent=11 // pred_check_branch
          %121 = sbr.rel (%p119) target = $region16
        $region15: #{tpu_custom_call.1} parent=11 // pred_region
          %123 = vsyncadd [#allocation6], 0
          %s125 = sshll.u32 %s1, 4
          %s126 = int_to_ptr.hbm [resolvable:$true] %s125
          %128 = dma.hbm_to_smem %s126, 16, [#allocation7], [#allocation6]
        $region16: #{tpu_custom_call.1} parent=11 // pred_fallthru
          _
      $region12: #{tpu_custom_call.1} parent=5 // pred_fallthru
        _
      %p129 = scmp.lt.s32.totalorder %s15, 2
      // Predicated region
      $region17: #{tpu_custom_call.1} parent=5 // pred_check
        %p130 = pneg %p129
      $region18: #{tpu_custom_call.1} parent=5 // pred_check_branch
        %132 = sbr.rel (%p130) target = $region20
      $region19: #{tpu_custom_call.1} parent=5 // pred_region
        // Predicated region
        $region21: #{tpu_custom_call.1} parent=19 // pred_check
          %p133 = pneg %p49
        $region22: #{tpu_custom_call.1} parent=19 // pred_check_branch
          %135 = sbr.rel (%p133) target = $region24
        $region23: #{tpu_custom_call.1} parent=19 // pred_region
          %s136 = sand.u32 %s39, 1
          %s137 = scalar_lea.sflag [#allocation4], %s136
          %s138 = sand.u32 %s39, 1
          %s139 = smul.addr %s138, 64
          %s140 = scalar_lea.vmem [#allocation3], %s139
          %s141 = smul.u32 4, %s23
          %143 = vsyncadd %s137, 0
          %s144 = smul.addr %s141, 2
          %s145 = smul.addr %s22, 8
          %s146 = sadd.s32 %s144, %s145
          %s147 = smul.addr %s146, 8
          %s148 = scalar_lea.hbm %s0, %s147
          %s149 = sshll.u32 %s148, 4
          %s150 = int_to_ptr.hbm [resolvable:$true] %s149
          %s151 = sshll.u32 %s140, 4
          %s152 = int_to_ptr.vmem [resolvable:$true] %s151
          %157 = dma.hbm_to_vmem [thread:$0]  %s150, 1024, %s152, %s137, 128, 128, 8
        $region24: #{tpu_custom_call.1} parent=19 // pred_fallthru
          _
      $region20: #{tpu_custom_call.1} parent=5 // pred_fallthru
        _
      %p158 = scmp.le.s32.totalorder 1, %s15
      %p159 = scmp.lt.s32.totalorder %s15, 3
      %p160 = pnand %p158, %p159
      %p161 = pneg %p160
      // Predicated region
      $region25: #{tpu_custom_call.1} parent=5 // pred_check
        _
      $region26: #{tpu_custom_call.1} parent=5 // pred_check_branch
        %163 = sbr.rel (%p160) target = $region28
      $region27: #{tpu_custom_call.1} parent=5 // pred_region
        %s164 = ssub.s32 %s15, 1
        %s165 = sand.u32 %s42, 1
        %s166 = scalar_lea.sflag [#allocation4], %s165
        %s167 = sand.u32 %s42, 1
        %s168 = smul.addr %s167, 64
        %s169 = scalar_lea.vmem [#allocation3], %s168
        // Predicated region
        $region29: #{tpu_custom_call.1} parent=27 // pred_check
          %p170 = pneg %p55
        $region30: #{tpu_custom_call.1} parent=27 // pred_check_branch
          %172 = sbr.rel (%p170) target = $region32
        $region31: #{tpu_custom_call.1} parent=27 // pred_region
          %174 = dma.done %s166, 1024
        $region32: #{tpu_custom_call.1} parent=27 // pred_fallthru
          _
        // Predicated region
        $region33: #{tpu_custom_call.1} parent=27 // pred_check
          %p175 = pneg %p76
        $region34: #{tpu_custom_call.1} parent=27 // pred_check_branch
          %177 = sbr.rel (%p175) target = $region36
        $region35: #{tpu_custom_call.1} parent=27 // pred_region
          %179 = dma.done [#allocation6], 16
        $region36: #{tpu_custom_call.1} parent=27 // pred_fallthru
          _
        %180 = sfence
        %s181 = sand.u32 %s42, 1
        %s182 = scalar_lea.sflag [#allocation4], %s181
        %s183 = sand.u32 %s42, 1
        %s184 = smul.addr %s183, 64
        %s185 = scalar_lea.vmem [#allocation3], %s184
        %p186 = pneg %p55
        %p187 = pneg %p52
        %p188 = pneg %p76
        %p189 = pneg %p73
        %p190 = pneg %p104
        %p191 = pneg %p101
        %s192 = sand.u32 %s91, 1
        %s193 = scalar_lea.sflag [#allocation5], %s192
        %s194 = sand.u32 %s91, 1
        %s195 = smul.addr %s194, 64
        %s196 = scalar_lea.vmem [#allocation8], %s195
        %s197 = smul.u32 4, %s25
        %s198 = smul.u32 4, %s25
        %s199 = smul.u32 %s25, 4
        %200 = vst [vmem:[#allocation2] sm:$0x3] 0.0
        %201 = vst [vmem:[#allocation2 + $0x12] sm:$0x3] 0.0
        %vm202 = vcmask 1047680
        %203 = vst.msk [vmem:[#allocation2] sm:$0xff] %vm202, 0.0
        %204 = vst.msk [vmem:[#allocation2 + $0x8] sm:$0xff] %vm202, 0.0
        %vm205 = vcmask 1043584
        %206 = vst.msk [vmem:[#allocation2 + $0x10] sm:$0xf] %vm205, 0.0
        %v207 = vld [vmem:[%s169] sm:$0xff]
        %v208 = vld [vmem:[%s169 + $0x8] sm:$0xff]
        %vm209 = vcmask 130048
        %210 = vst.msk [vmem:[#allocation2 + $0x2] sm:$0xff] %vm209, %v207
        %211 = vst.msk [vmem:[#allocation2 + $0xa] sm:$0xff] %vm209, %v208
        %s212 = smul.u32 %s25, 100
        %s213 = sld [smem:[#allocation7 + %s212]]
        %s214 = sadd.s32 %s212, 1
        %s215 = sld [smem:[#allocation7 + %s214]]
        %s216 = sadd.s32 %s212, 2
        %s217 = sld [smem:[#allocation7 + %s216]]
        %s218 = sadd.s32 %s212, 3
        %s219 = sld [smem:[#allocation7 + %s218]]
        %s220 = sadd.s32 %s212, 4
        %s221 = sld [smem:[#allocation7 + %s220]]
        %s222 = sadd.s32 %s212, 5
        %s223 = sld [smem:[#allocation7 + %s222]]
        %s224 = sadd.s32 %s212, 6
        %s225 = sld [smem:[#allocation7 + %s224]]
        %s226 = sadd.s32 %s212, 7
        %s227 = sld [smem:[#allocation7 + %s226]]
        %s228 = sadd.s32 %s212, 8
        %s229 = sld [smem:[#allocation7 + %s228]]
        %s230 = sadd.s32 %s212, 9
        %s231 = sld [smem:[#allocation7 + %s230]]
        %s232 = sadd.s32 %s212, 10
        %s233 = sld [smem:[#allocation7 + %s232]]
        %s234 = sadd.s32 %s212, 11
        %s235 = sld [smem:[#allocation7 + %s234]]
        %s236 = sadd.s32 %s212, 12
        %s237 = sld [smem:[#allocation7 + %s236]]
        %s238 = sadd.s32 %s212, 13
        %s239 = sld [smem:[#allocation7 + %s238]]
        %s240 = sadd.s32 %s212, 14
        %s241 = sld [smem:[#allocation7 + %s240]]
        %s242 = sadd.s32 %s212, 15
        %s243 = sld [smem:[#allocation7 + %s242]]
        %s244 = sadd.s32 %s212, 16
        %s245 = sld [smem:[#allocation7 + %s244]]
        %s246 = sadd.s32 %s212, 17
        %s247 = sld [smem:[#allocation7 + %s246]]
        %s248 = sadd.s32 %s212, 18
        %s249 = sld [smem:[#allocation7 + %s248]]
        %s250 = sadd.s32 %s212, 19
        %s251 = sld [smem:[#allocation7 + %s250]]
        %s252 = sadd.s32 %s212, 20
        %s253 = sld [smem:[#allocation7 + %s252]]
        %s254 = sadd.s32 %s212, 21
        %s255 = sld [smem:[#allocation7 + %s254]]
        %s256 = sadd.s32 %s212, 22
        %s257 = sld [smem:[#allocation7 + %s256]]
        %s258 = sadd.s32 %s212, 23
        %s259 = sld [smem:[#allocation7 + %s258]]
        %s260 = sadd.s32 %s212, 24
        %s261 = sld [smem:[#allocation7 + %s260]]
        %v262 = vld [vmem:[#allocation2] sm:$0xff]
        %263 = vrot.lane.b32.xlu0 %v262, 2
        %v264 = vpop.permute.xlu0 %263
        %v265 = vstv %s213
        %v266 = vmul.f32 %v264, %v265
        %v267 = vadd.f32 %v266, 0.0
        %268 = vrot.lane.b32.xlu0 %v262, 1
        %v269 = vpop.permute.xlu0 %268
        %v270 = vstv %s215
        %v271 = vmul.f32 %v269, %v270
        %v272 = vadd.f32 %v267, %v271
        %v273 = vstv %s217
        %v274 = vmul.f32 %v262, %v273
        %v275 = vadd.f32 %v272, %v274
        %276 = vrot.lane.b32.xlu0 %v262, 127
        %v277 = vpop.permute.xlu0 %276
        %v278 = vstv %s219
        %v279 = vmul.f32 %v277, %v278
        %v280 = vadd.f32 %v275, %v279
        %281 = vrot.lane.b32.xlu0 %v262, 126
        %v282 = vpop.permute.xlu0 %281
        %v283 = vstv %s221
        %v284 = vmul.f32 %v282, %v283
        %v285 = vadd.f32 %v280, %v284
        %s286 = sadd.s32 0, 1
        %s287 = scalar_lea.vmem [#allocation2], %s286
        %v288 = vld [vmem:[%s287] sm:$0xff]
        %289 = vrot.lane.b32.xlu0 %v288, 2
        %v290 = vpop.permute.xlu0 %289
        %v291 = vstv %s223
        %v292 = vmul.f32 %v290, %v291
        %v293 = vadd.f32 %v285, %v292
        %294 = vrot.lane.b32.xlu0 %v288, 1
        %v295 = vpop.permute.xlu0 %294
        %v296 = vstv %s225
        %v297 = vmul.f32 %v295, %v296
        %v298 = vadd.f32 %v293, %v297
        %v299 = vstv %s227
        %v300 = vmul.f32 %v288, %v299
        %v301 = vadd.f32 %v298, %v300
        %302 = vrot.lane.b32.xlu0 %v288, 127
        %v303 = vpop.permute.xlu0 %302
        %v304 = vstv %s229
        %v305 = vmul.f32 %v303, %v304
        %v306 = vadd.f32 %v301, %v305
        %307 = vrot.lane.b32.xlu0 %v288, 126
        %v308 = vpop.permute.xlu0 %307
        %v309 = vstv %s231
        %v310 = vmul.f32 %v308, %v309
        %v311 = vadd.f32 %v306, %v310
        %s312 = sadd.s32 0, 2
        %s313 = scalar_lea.vmem [#allocation2], %s312
        %v314 = vld [vmem:[%s313] sm:$0xff]
        %315 = vrot.lane.b32.xlu0 %v314, 2
        %v316 = vpop.permute.xlu0 %315
        %v317 = vstv %s233
        %v318 = vmul.f32 %v316, %v317
        %v319 = vadd.f32 %v311, %v318
        %320 = vrot.lane.b32.xlu0 %v314, 1
        %v321 = vpop.permute.xlu0 %320
        %v322 = vstv %s235
        %v323 = vmul.f32 %v321, %v322
        %v324 = vadd.f32 %v319, %v323
        %v325 = vstv %s237
        %v326 = vmul.f32 %v314, %v325
        %v327 = vadd.f32 %v324, %v326
        %328 = vrot.lane.b32.xlu0 %v314, 127
        %v329 = vpop.permute.xlu0 %328
        %v330 = vstv %s239
        %v331 = vmul.f32 %v329, %v330
        %v332 = vadd.f32 %v327, %v331
        %333 = vrot.lane.b32.xlu0 %v314, 126
        %v334 = vpop.permute.xlu0 %333
        %v335 = vstv %s241
        %v336 = vmul.f32 %v334, %v335
        %v337 = vadd.f32 %v332, %v336
        %s338 = sadd.s32 0, 3
        %s339 = scalar_lea.vmem [#allocation2], %s338
        %v340 = vld [vmem:[%s339] sm:$0xff]
        %341 = vrot.lane.b32.xlu0 %v340, 2
        %v342 = vpop.permute.xlu0 %341
        %v343 = vstv %s243
        %v344 = vmul.f32 %v342, %v343
        %v345 = vadd.f32 %v337, %v344
        %346 = vrot.lane.b32.xlu0 %v340, 1
        %v347 = vpop.permute.xlu0 %346
        %v348 = vstv %s245
        %v349 = vmul.f32 %v347, %v348
        %v350 = vadd.f32 %v345, %v349
        %v351 = vstv %s247
        %v352 = vmul.f32 %v340, %v351
        %v353 = vadd.f32 %v350, %v352
        %354 = vrot.lane.b32.xlu0 %v340, 127
        %v355 = vpop.permute.xlu0 %354
        %v356 = vstv %s249
        %v357 = vmul.f32 %v355, %v356
        %v358 = vadd.f32 %v353, %v357
        %359 = vrot.lane.b32.xlu0 %v340, 126
        %v360 = vpop.permute.xlu0 %359
        %v361 = vstv %s251
        %v362 = vmul.f32 %v360, %v361
        %v363 = vadd.f32 %v358, %v362
        %s364 = sadd.s32 0, 4
        %s365 = scalar_lea.vmem [#allocation2], %s364
        %v366 = vld [vmem:[%s365] sm:$0xff]
        %367 = vrot.lane.b32.xlu0 %v366, 2
        %v368 = vpop.permute.xlu0 %367
        %v369 = vstv %s253
        %v370 = vmul.f32 %v368, %v369
        %v371 = vadd.f32 %v363, %v370
        %372 = vrot.lane.b32.xlu0 %v366, 1
        %v373 = vpop.permute.xlu0 %372
        %v374 = vstv %s255
        %v375 = vmul.f32 %v373, %v374
        %v376 = vadd.f32 %v371, %v375
        %v377 = vstv %s257
        %v378 = vmul.f32 %v366, %v377
        %v379 = vadd.f32 %v376, %v378
        %380 = vrot.lane.b32.xlu0 %v366, 127
        %v381 = vpop.permute.xlu0 %380
        %v382 = vstv %s259
        %v383 = vmul.f32 %v381, %v382
        %v384 = vadd.f32 %v379, %v383
        %385 = vrot.lane.b32.xlu0 %v366, 126
        %v386 = vpop.permute.xlu0 %385
        %v387 = vstv %s261
        %v388 = vmul.f32 %v386, %v387
        %v389 = vadd.f32 %v384, %v388
        %390 = vst.msk [vmem:[%s196] sm:$0xff] %vm209, %v389
        %s391 = scalar_lea.vmem [#allocation2], 8
        %v392 = vld [vmem:[%s391] sm:$0xff]
        %393 = vrot.lane.b32.xlu0 %v392, 2
        %v394 = vpop.permute.xlu0 %393
        %v395 = vmul.f32 %v394, %v265
        %v396 = vadd.f32 %v395, 0.0
        %397 = vrot.lane.b32.xlu0 %v392, 1
        %v398 = vpop.permute.xlu0 %397
        %v399 = vmul.f32 %v398, %v270
        %v400 = vadd.f32 %v396, %v399
        %v401 = vmul.f32 %v392, %v273
        %v402 = vadd.f32 %v400, %v401
        %403 = vrot.lane.b32.xlu0 %v392, 127
        %v404 = vpop.permute.xlu0 %403
        %v405 = vmul.f32 %v404, %v278
        %v406 = vadd.f32 %v402, %v405
        %407 = vrot.lane.b32.xlu0 %v392, 126
        %v408 = vpop.permute.xlu0 %407
        %v409 = vmul.f32 %v408, %v283
        %v410 = vadd.f32 %v406, %v409
        %s411 = sadd.s32 8, 1
        %s412 = scalar_lea.vmem [#allocation2], %s411
        %v413 = vld [vmem:[%s412] sm:$0xff]
        %414 = vrot.lane.b32.xlu0 %v413, 2
        %v415 = vpop.permute.xlu0 %414
        %v416 = vmul.f32 %v415, %v291
        %v417 = vadd.f32 %v410, %v416
        %418 = vrot.lane.b32.xlu0 %v413, 1
        %v419 = vpop.permute.xlu0 %418
        %v420 = vmul.f32 %v419, %v296
        %v421 = vadd.f32 %v417, %v420
        %v422 = vmul.f32 %v413, %v299
        %v423 = vadd.f32 %v421, %v422
        %424 = vrot.lane.b32.xlu0 %v413, 127
        %v425 = vpop.permute.xlu0 %424
        %v426 = vmul.f32 %v425, %v304
        %v427 = vadd.f32 %v423, %v426
        %428 = vrot.lane.b32.xlu0 %v413, 126
        %v429 = vpop.permute.xlu0 %428
        %v430 = vmul.f32 %v429, %v309
        %v431 = vadd.f32 %v427, %v430
        %s432 = sadd.s32 8, 2
        %s433 = scalar_lea.vmem [#allocation2], %s432
        %v434 = vld [vmem:[%s433] sm:$0xff]
        %435 = vrot.lane.b32.xlu0 %v434, 2
        %v436 = vpop.permute.xlu0 %435
        %v437 = vmul.f32 %v436, %v317
        %v438 = vadd.f32 %v431, %v437
        %439 = vrot.lane.b32.xlu0 %v434, 1
        %v440 = vpop.permute.xlu0 %439
        %v441 = vmul.f32 %v440, %v322
        %v442 = vadd.f32 %v438, %v441
        %v443 = vmul.f32 %v434, %v325
        %v444 = vadd.f32 %v442, %v443
        %445 = vrot.lane.b32.xlu0 %v434, 127
        %v446 = vpop.permute.xlu0 %445
        %v447 = vmul.f32 %v446, %v330
        %v448 = vadd.f32 %v444, %v447
        %449 = vrot.lane.b32.xlu0 %v434, 126
        %v450 = vpop.permute.xlu0 %449
        %v451 = vmul.f32 %v450, %v335
        %v452 = vadd.f32 %v448, %v451
        %s453 = sadd.s32 8, 3
        %s454 = scalar_lea.vmem [#allocation2], %s453
        %v455 = vld [vmem:[%s454] sm:$0xff]
        %456 = vrot.lane.b32.xlu0 %v455, 2
        %v457 = vpop.permute.xlu0 %456
        %v458 = vmul.f32 %v457, %v343
        %v459 = vadd.f32 %v452, %v458
        %460 = vrot.lane.b32.xlu0 %v455, 1
        %v461 = vpop.permute.xlu0 %460
        %v462 = vmul.f32 %v461, %v348
        %v463 = vadd.f32 %v459, %v462
        %v464 = vmul.f32 %v455, %v351
        %v465 = vadd.f32 %v463, %v464
        %466 = vrot.lane.b32.xlu0 %v455, 127
        %v467 = vpop.permute.xlu0 %466
        %v468 = vmul.f32 %v467, %v356
        %v469 = vadd.f32 %v465, %v468
        %470 = vrot.lane.b32.xlu0 %v455, 126
        %v471 = vpop.permute.xlu0 %470
        %v472 = vmul.f32 %v471, %v361
        %v473 = vadd.f32 %v469, %v472
        %s474 = sadd.s32 8, 4
        %s475 = scalar_lea.vmem [#allocation2], %s474
        %v476 = vld [vmem:[%s475] sm:$0xff]
        %477 = vrot.lane.b32.xlu0 %v476, 2
        %v478 = vpop.permute.xlu0 %477
        %v479 = vmul.f32 %v478, %v369
        %v480 = vadd.f32 %v473, %v479
        %481 = vrot.lane.b32.xlu0 %v476, 1
        %v482 = vpop.permute.xlu0 %481
        %v483 = vmul.f32 %v482, %v374
        %v484 = vadd.f32 %v480, %v483
        %v485 = vmul.f32 %v476, %v377
        %v486 = vadd.f32 %v484, %v485
        %487 = vrot.lane.b32.xlu0 %v476, 127
        %v488 = vpop.permute.xlu0 %487
        %v489 = vmul.f32 %v488, %v382
        %v490 = vadd.f32 %v486, %v489
        %491 = vrot.lane.b32.xlu0 %v476, 126
        %v492 = vpop.permute.xlu0 %491
        %v493 = vmul.f32 %v492, %v387
        %v494 = vadd.f32 %v490, %v493
        %s495 = scalar_lea.vmem %s196, 8 [#allocation8]
        %496 = vst.msk [vmem:[%s495] sm:$0xff] %vm209, %v494
        %s497 = scalar_lea.vmem [#allocation2], 24
        %498 = vst [vmem:[%s497] sm:$0x3] 0.0
        %499 = vst [vmem:[%s497 + $0x12] sm:$0x3] 0.0
        %500 = vst.msk [vmem:[%s497] sm:$0xff] %vm202, 0.0
        %501 = vst.msk [vmem:[%s497 + $0x8] sm:$0xff] %vm202, 0.0
        %502 = vst.msk [vmem:[%s497 + $0x10] sm:$0xf] %vm205, 0.0
        %s503 = scalar_lea.vmem %s169, 16 [#allocation3]
        %v504 = vld [vmem:[%s503] sm:$0xff]
        %v505 = vld [vmem:[%s503 + $0x8] sm:$0xff]
        %506 = vst.msk [vmem:[%s497 + $0x2] sm:$0xff] %vm209, %v504
        %507 = vst.msk [vmem:[%s497 + $0xa] sm:$0xff] %vm209, %v505
        %s508 = sadd.s32 %s199, 1
        %s509 = smul.u32 %s508, 25
        %s510 = sld [smem:[#allocation7 + %s509]]
        %s511 = sadd.s32 %s509, 1
        %s512 = sld [smem:[#allocation7 + %s511]]
        %s513 = sadd.s32 %s509, 2
        %s514 = sld [smem:[#allocation7 + %s513]]
        %s515 = sadd.s32 %s509, 3
        %s516 = sld [smem:[#allocation7 + %s515]]
        %s517 = sadd.s32 %s509, 4
        %s518 = sld [smem:[#allocation7 + %s517]]
        %s519 = sadd.s32 %s509, 5
        %s520 = sld [smem:[#allocation7 + %s519]]
        %s521 = sadd.s32 %s509, 6
        %s522 = sld [smem:[#allocation7 + %s521]]
        %s523 = sadd.s32 %s509, 7
        %s524 = sld [smem:[#allocation7 + %s523]]
        %s525 = sadd.s32 %s509, 8
        %s526 = sld [smem:[#allocation7 + %s525]]
        %s527 = sadd.s32 %s509, 9
        %s528 = sld [smem:[#allocation7 + %s527]]
        %s529 = sadd.s32 %s509, 10
        %s530 = sld [smem:[#allocation7 + %s529]]
        %s531 = sadd.s32 %s509, 11
        %s532 = sld [smem:[#allocation7 + %s531]]
        %s533 = sadd.s32 %s509, 12
        %s534 = sld [smem:[#allocation7 + %s533]]
        %s535 = sadd.s32 %s509, 13
        %s536 = sld [smem:[#allocation7 + %s535]]
        %s537 = sadd.s32 %s509, 14
        %s538 = sld [smem:[#allocation7 + %s537]]
        %s539 = sadd.s32 %s509, 15
        %s540 = sld [smem:[#allocation7 + %s539]]
        %s541 = sadd.s32 %s509, 16
        %s542 = sld [smem:[#allocation7 + %s541]]
        %s543 = sadd.s32 %s509, 17
        %s544 = sld [smem:[#allocation7 + %s543]]
        %s545 = sadd.s32 %s509, 18
        %s546 = sld [smem:[#allocation7 + %s545]]
        %s547 = sadd.s32 %s509, 19
        %s548 = sld [smem:[#allocation7 + %s547]]
        %s549 = sadd.s32 %s509, 20
        %s550 = sld [smem:[#allocation7 + %s549]]
        %s551 = sadd.s32 %s509, 21
        %s552 = sld [smem:[#allocation7 + %s551]]
        %s553 = sadd.s32 %s509, 22
        %s554 = sld [smem:[#allocation7 + %s553]]
        %s555 = sadd.s32 %s509, 23
        %s556 = sld [smem:[#allocation7 + %s555]]
        %s557 = sadd.s32 %s509, 24
        %s558 = sld [smem:[#allocation7 + %s557]]
        %s559 = sadd.s32 0, 24
        %s560 = scalar_lea.vmem [#allocation2], %s559
        %v561 = vld [vmem:[%s560] sm:$0xff]
        %562 = vrot.lane.b32.xlu0 %v561, 2
        %v563 = vpop.permute.xlu0 %562
        %v564 = vstv %s510
        %v565 = vmul.f32 %v563, %v564
        %v566 = vadd.f32 %v565, 0.0
        %567 = vrot.lane.b32.xlu0 %v561, 1
        %v568 = vpop.permute.xlu0 %567
        %v569 = vstv %s512
        %v570 = vmul.f32 %v568, %v569
        %v571 = vadd.f32 %v566, %v570
        %v572 = vstv %s514
        %v573 = vmul.f32 %v561, %v572
        %v574 = vadd.f32 %v571, %v573
        %575 = vrot.lane.b32.xlu0 %v561, 127
        %v576 = vpop.permute.xlu0 %575
        %v577 = vstv %s516
        %v578 = vmul.f32 %v576, %v577
        %v579 = vadd.f32 %v574, %v578
        %580 = vrot.lane.b32.xlu0 %v561, 126
        %v581 = vpop.permute.xlu0 %580
        %v582 = vstv %s518
        %v583 = vmul.f32 %v581, %v582
        %v584 = vadd.f32 %v579, %v583
        %s585 = sadd.s32 %s286, 24
        %s586 = scalar_lea.vmem [#allocation2], %s585
        %v587 = vld [vmem:[%s586] sm:$0xff]
        %588 = vrot.lane.b32.xlu0 %v587, 2
        %v589 = vpop.permute.xlu0 %588
        %v590 = vstv %s520
        %v591 = vmul.f32 %v589, %v590
        %v592 = vadd.f32 %v584, %v591
        %593 = vrot.lane.b32.xlu0 %v587, 1
        %v594 = vpop.permute.xlu0 %593
        %v595 = vstv %s522
        %v596 = vmul.f32 %v594, %v595
        %v597 = vadd.f32 %v592, %v596
        %v598 = vstv %s524
        %v599 = vmul.f32 %v587, %v598
        %v600 = vadd.f32 %v597, %v599
        %601 = vrot.lane.b32.xlu0 %v587, 127
        %v602 = vpop.permute.xlu0 %601
        %v603 = vstv %s526
        %v604 = vmul.f32 %v602, %v603
        %v605 = vadd.f32 %v600, %v604
        %606 = vrot.lane.b32.xlu0 %v587, 126
        %v607 = vpop.permute.xlu0 %606
        %v608 = vstv %s528
        %v609 = vmul.f32 %v607, %v608
        %v610 = vadd.f32 %v605, %v609
        %s611 = sadd.s32 %s312, 24
        %s612 = scalar_lea.vmem [#allocation2], %s611
        %v613 = vld [vmem:[%s612] sm:$0xff]
        %614 = vrot.lane.b32.xlu0 %v613, 2
        %v615 = vpop.permute.xlu0 %614
        %v616 = vstv %s530
        %v617 = vmul.f32 %v615, %v616
        %v618 = vadd.f32 %v610, %v617
        %619 = vrot.lane.b32.xlu0 %v613, 1
        %v620 = vpop.permute.xlu0 %619
        %v621 = vstv %s532
        %v622 = vmul.f32 %v620, %v621
        %v623 = vadd.f32 %v618, %v622
        %v624 = vstv %s534
        %v625 = vmul.f32 %v613, %v624
        %v626 = vadd.f32 %v623, %v625
        %627 = vrot.lane.b32.xlu0 %v613, 127
        %v628 = vpop.permute.xlu0 %627
        %v629 = vstv %s536
        %v630 = vmul.f32 %v628, %v629
        %v631 = vadd.f32 %v626, %v630
        %632 = vrot.lane.b32.xlu0 %v613, 126
        %v633 = vpop.permute.xlu0 %632
        %v634 = vstv %s538
        %v635 = vmul.f32 %v633, %v634
        %v636 = vadd.f32 %v631, %v635
        %s637 = sadd.s32 %s338, 24
        %s638 = scalar_lea.vmem [#allocation2], %s637
        %v639 = vld [vmem:[%s638] sm:$0xff]
        %640 = vrot.lane.b32.xlu0 %v639, 2
        %v641 = vpop.permute.xlu0 %640
        %v642 = vstv %s540
        %v643 = vmul.f32 %v641, %v642
        %v644 = vadd.f32 %v636, %v643
        %645 = vrot.lane.b32.xlu0 %v639, 1
        %v646 = vpop.permute.xlu0 %645
        %v647 = vstv %s542
        %v648 = vmul.f32 %v646, %v647
        %v649 = vadd.f32 %v644, %v648
        %v650 = vstv %s544
        %v651 = vmul.f32 %v639, %v650
        %v652 = vadd.f32 %v649, %v651
        %653 = vrot.lane.b32.xlu0 %v639, 127
        %v654 = vpop.permute.xlu0 %653
        %v655 = vstv %s546
        %v656 = vmul.f32 %v654, %v655
        %v657 = vadd.f32 %v652, %v656
        %658 = vrot.lane.b32.xlu0 %v639, 126
        %v659 = vpop.permute.xlu0 %658
        %v660 = vstv %s548
        %v661 = vmul.f32 %v659, %v660
        %v662 = vadd.f32 %v657, %v661
        %s663 = sadd.s32 %s364, 24
        %s664 = scalar_lea.vmem [#allocation2], %s663
        %v665 = vld [vmem:[%s664] sm:$0xff]
        %666 = vrot.lane.b32.xlu0 %v665, 2
        %v667 = vpop.permute.xlu0 %666
        %v668 = vstv %s550
        %v669 = vmul.f32 %v667, %v668
        %v670 = vadd.f32 %v662, %v669
        %671 = vrot.lane.b32.xlu0 %v665, 1
        %v672 = vpop.permute.xlu0 %671
        %v673 = vstv %s552
        %v674 = vmul.f32 %v672, %v673
        %v675 = vadd.f32 %v670, %v674
        %v676 = vstv %s554
        %v677 = vmul.f32 %v665, %v676
        %v678 = vadd.f32 %v675, %v677
        %679 = vrot.lane.b32.xlu0 %v665, 127
        %v680 = vpop.permute.xlu0 %679
        %v681 = vstv %s556
        %v682 = vmul.f32 %v680, %v681
        %v683 = vadd.f32 %v678, %v682
        %684 = vrot.lane.b32.xlu0 %v665, 126
        %v685 = vpop.permute.xlu0 %684
        %v686 = vstv %s558
        %v687 = vmul.f32 %v685, %v686
        %v688 = vadd.f32 %v683, %v687
        %s689 = sadd.s32 0, 16
        %s690 = scalar_lea.vmem %s196, %s689 [#allocation8]
        %691 = vst.msk [vmem:[%s690] sm:$0xff] %vm209, %v688
        %s692 = sadd.s32 8, 24
        %s693 = scalar_lea.vmem [#allocation2], %s692
        %v694 = vld [vmem:[%s693] sm:$0xff]
        %695 = vrot.lane.b32.xlu0 %v694, 2
        %v696 = vpop.permute.xlu0 %695
        %v697 = vmul.f32 %v696, %v564
        %v698 = vadd.f32 %v697, 0.0
        %699 = vrot.lane.b32.xlu0 %v694, 1
        %v700 = vpop.permute.xlu0 %699
        %v701 = vmul.f32 %v700, %v569
        %v702 = vadd.f32 %v698, %v701
        %v703 = vmul.f32 %v694, %v572
        %v704 = vadd.f32 %v702, %v703
        %705 = vrot.lane.b32.xlu0 %v694, 127
        %v706 = vpop.permute.xlu0 %705
        %v707 = vmul.f32 %v706, %v577
        %v708 = vadd.f32 %v704, %v707
        %709 = vrot.lane.b32.xlu0 %v694, 126
        %v710 = vpop.permute.xlu0 %709
        %v711 = vmul.f32 %v710, %v582
        %v712 = vadd.f32 %v708, %v711
        %s713 = sadd.s32 %s411, 24
        %s714 = scalar_lea.vmem [#allocation2], %s713
        %v715 = vld [vmem:[%s714] sm:$0xff]
        %716 = vrot.lane.b32.xlu0 %v715, 2
        %v717 = vpop.permute.xlu0 %716
        %v718 = vmul.f32 %v717, %v590
        %v719 = vadd.f32 %v712, %v718
        %720 = vrot.lane.b32.xlu0 %v715, 1
        %v721 = vpop.permute.xlu0 %720
        %v722 = vmul.f32 %v721, %v595
        %v723 = vadd.f32 %v719, %v722
        %v724 = vmul.f32 %v715, %v598
        %v725 = vadd.f32 %v723, %v724
        %726 = vrot.lane.b32.xlu0 %v715, 127
        %v727 = vpop.permute.xlu0 %726
        %v728 = vmul.f32 %v727, %v603
        %v729 = vadd.f32 %v725, %v728
        %730 = vrot.lane.b32.xlu0 %v715, 126
        %v731 = vpop.permute.xlu0 %730
        %v732 = vmul.f32 %v731, %v608
        %v733 = vadd.f32 %v729, %v732
        %s734 = sadd.s32 %s432, 24
        %s735 = scalar_lea.vmem [#allocation2], %s734
        %v736 = vld [vmem:[%s735] sm:$0xff]
        %737 = vrot.lane.b32.xlu0 %v736, 2
        %v738 = vpop.permute.xlu0 %737
        %v739 = vmul.f32 %v738, %v616
        %v740 = vadd.f32 %v733, %v739
        %741 = vrot.lane.b32.xlu0 %v736, 1
        %v742 = vpop.permute.xlu0 %741
        %v743 = vmul.f32 %v742, %v621
        %v744 = vadd.f32 %v740, %v743
        %v745 = vmul.f32 %v736, %v624
        %v746 = vadd.f32 %v744, %v745
        %747 = vrot.lane.b32.xlu0 %v736, 127
        %v748 = vpop.permute.xlu0 %747
        %v749 = vmul.f32 %v748, %v629
        %v750 = vadd.f32 %v746, %v749
        %751 = vrot.lane.b32.xlu0 %v736, 126
        %v752 = vpop.permute.xlu0 %751
        %v753 = vmul.f32 %v752, %v634
        %v754 = vadd.f32 %v750, %v753
        %s755 = sadd.s32 %s453, 24
        %s756 = scalar_lea.vmem [#allocation2], %s755
        %v757 = vld [vmem:[%s756] sm:$0xff]
        %758 = vrot.lane.b32.xlu0 %v757, 2
        %v759 = vpop.permute.xlu0 %758
        %v760 = vmul.f32 %v759, %v642
        %v761 = vadd.f32 %v754, %v760
        %762 = vrot.lane.b32.xlu0 %v757, 1
        %v763 = vpop.permute.xlu0 %762
        %v764 = vmul.f32 %v763, %v647
        %v765 = vadd.f32 %v761, %v764
        %v766 = vmul.f32 %v757, %v650
        %v767 = vadd.f32 %v765, %v766
        %768 = vrot.lane.b32.xlu0 %v757, 127
        %v769 = vpop.permute.xlu0 %768
        %v770 = vmul.f32 %v769, %v655
        %v771 = vadd.f32 %v767, %v770
        %772 = vrot.lane.b32.xlu0 %v757, 126
        %v773 = vpop.permute.xlu0 %772
        %v774 = vmul.f32 %v773, %v660
        %v775 = vadd.f32 %v771, %v774
        %s776 = sadd.s32 %s474, 24
        %s777 = scalar_lea.vmem [#allocation2], %s776
        %v778 = vld [vmem:[%s777] sm:$0xff]
        %779 = vrot.lane.b32.xlu0 %v778, 2
        %v780 = vpop.permute.xlu0 %779
        %v781 = vmul.f32 %v780, %v668
        %v782 = vadd.f32 %v775, %v781
        %783 = vrot.lane.b32.xlu0 %v778, 1
        %v784 = vpop.permute.xlu0 %783
        %v785 = vmul.f32 %v784, %v673
        %v786 = vadd.f32 %v782, %v785
        %v787 = vmul.f32 %v778, %v676
        %v788 = vadd.f32 %v786, %v787
        %789 = vrot.lane.b32.xlu0 %v778, 127
        %v790 = vpop.permute.xlu0 %789
        %v791 = vmul.f32 %v790, %v681
        %v792 = vadd.f32 %v788, %v791
        %793 = vrot.lane.b32.xlu0 %v778, 126
        %v794 = vpop.permute.xlu0 %793
        %v795 = vmul.f32 %v794, %v686
        %v796 = vadd.f32 %v792, %v795
        %s797 = sadd.s32 8, 16
        %s798 = scalar_lea.vmem %s196, %s797 [#allocation8]
        %799 = vst.msk [vmem:[%s798] sm:$0xff] %vm209, %v796
        %s800 = scalar_lea.vmem [#allocation2], 48
        %801 = vst [vmem:[%s800] sm:$0x3] 0.0
        %802 = vst [vmem:[%s800 + $0x12] sm:$0x3] 0.0
        %803 = vst.msk [vmem:[%s800] sm:$0xff] %vm202, 0.0
        %804 = vst.msk [vmem:[%s800 + $0x8] sm:$0xff] %vm202, 0.0
        %805 = vst.msk [vmem:[%s800 + $0x10] sm:$0xf] %vm205, 0.0
        %s806 = scalar_lea.vmem %s169, 32 [#allocation3]
        %v807 = vld [vmem:[%s806] sm:$0xff]
        %v808 = vld [vmem:[%s806 + $0x8] sm:$0xff]
        %809 = vst.msk [vmem:[%s800 + $0x2] sm:$0xff] %vm209, %v807
        %810 = vst.msk [vmem:[%s800 + $0xa] sm:$0xff] %vm209, %v808
        %s811 = sadd.s32 %s199, 2
        %s812 = smul.u32 %s811, 25
        %s813 = sld [smem:[#allocation7 + %s812]]
        %s814 = sadd.s32 %s812, 1
        %s815 = sld [smem:[#allocation7 + %s814]]
        %s816 = sadd.s32 %s812, 2
        %s817 = sld [smem:[#allocation7 + %s816]]
        %s818 = sadd.s32 %s812, 3
        %s819 = sld [smem:[#allocation7 + %s818]]
        %s820 = sadd.s32 %s812, 4
        %s821 = sld [smem:[#allocation7 + %s820]]
        %s822 = sadd.s32 %s812, 5
        %s823 = sld [smem:[#allocation7 + %s822]]
        %s824 = sadd.s32 %s812, 6
        %s825 = sld [smem:[#allocation7 + %s824]]
        %s826 = sadd.s32 %s812, 7
        %s827 = sld [smem:[#allocation7 + %s826]]
        %s828 = sadd.s32 %s812, 8
        %s829 = sld [smem:[#allocation7 + %s828]]
        %s830 = sadd.s32 %s812, 9
        %s831 = sld [smem:[#allocation7 + %s830]]
        %s832 = sadd.s32 %s812, 10
        %s833 = sld [smem:[#allocation7 + %s832]]
        %s834 = sadd.s32 %s812, 11
        %s835 = sld [smem:[#allocation7 + %s834]]
        %s836 = sadd.s32 %s812, 12
        %s837 = sld [smem:[#allocation7 + %s836]]
        %s838 = sadd.s32 %s812, 13
        %s839 = sld [smem:[#allocation7 + %s838]]
        %s840 = sadd.s32 %s812, 14
        %s841 = sld [smem:[#allocation7 + %s840]]
        %s842 = sadd.s32 %s812, 15
        %s843 = sld [smem:[#allocation7 + %s842]]
        %s844 = sadd.s32 %s812, 16
        %s845 = sld [smem:[#allocation7 + %s844]]
        %s846 = sadd.s32 %s812, 17
        %s847 = sld [smem:[#allocation7 + %s846]]
        %s848 = sadd.s32 %s812, 18
        %s849 = sld [smem:[#allocation7 + %s848]]
        %s850 = sadd.s32 %s812, 19
        %s851 = sld [smem:[#allocation7 + %s850]]
        %s852 = sadd.s32 %s812, 20
        %s853 = sld [smem:[#allocation7 + %s852]]
        %s854 = sadd.s32 %s812, 21
        %s855 = sld [smem:[#allocation7 + %s854]]
        %s856 = sadd.s32 %s812, 22
        %s857 = sld [smem:[#allocation7 + %s856]]
        %s858 = sadd.s32 %s812, 23
        %s859 = sld [smem:[#allocation7 + %s858]]
        %s860 = sadd.s32 %s812, 24
        %s861 = sld [smem:[#allocation7 + %s860]]
        %s862 = sadd.s32 0, 48
        %s863 = scalar_lea.vmem [#allocation2], %s862
        %v864 = vld [vmem:[%s863] sm:$0xff]
        %865 = vrot.lane.b32.xlu0 %v864, 2
        %v866 = vpop.permute.xlu0 %865
        %v867 = vstv %s813
        %v868 = vmul.f32 %v866, %v867
        %v869 = vadd.f32 %v868, 0.0
        %870 = vrot.lane.b32.xlu0 %v864, 1
        %v871 = vpop.permute.xlu0 %870
        %v872 = vstv %s815
        %v873 = vmul.f32 %v871, %v872
        %v874 = vadd.f32 %v869, %v873
        %v875 = vstv %s817
        %v876 = vmul.f32 %v864, %v875
        %v877 = vadd.f32 %v874, %v876
        %878 = vrot.lane.b32.xlu0 %v864, 127
        %v879 = vpop.permute.xlu0 %878
        %v880 = vstv %s819
        %v881 = vmul.f32 %v879, %v880
        %v882 = vadd.f32 %v877, %v881
        %883 = vrot.lane.b32.xlu0 %v864, 126
        %v884 = vpop.permute.xlu0 %883
        %v885 = vstv %s821
        %v886 = vmul.f32 %v884, %v885
        %v887 = vadd.f32 %v882, %v886
        %s888 = sadd.s32 %s286, 48
        %s889 = scalar_lea.vmem [#allocation2], %s888
        %v890 = vld [vmem:[%s889] sm:$0xff]
        %891 = vrot.lane.b32.xlu0 %v890, 2
        %v892 = vpop.permute.xlu0 %891
        %v893 = vstv %s823
        %v894 = vmul.f32 %v892, %v893
        %v895 = vadd.f32 %v887, %v894
        %896 = vrot.lane.b32.xlu0 %v890, 1
        %v897 = vpop.permute.xlu0 %896
        %v898 = vstv %s825
        %v899 = vmul.f32 %v897, %v898
        %v900 = vadd.f32 %v895, %v899
        %v901 = vstv %s827
        %v902 = vmul.f32 %v890, %v901
        %v903 = vadd.f32 %v900, %v902
        %904 = vrot.lane.b32.xlu0 %v890, 127
        %v905 = vpop.permute.xlu0 %904
        %v906 = vstv %s829
        %v907 = vmul.f32 %v905, %v906
        %v908 = vadd.f32 %v903, %v907
        %909 = vrot.lane.b32.xlu0 %v890, 126
        %v910 = vpop.permute.xlu0 %909
        %v911 = vstv %s831
        %v912 = vmul.f32 %v910, %v911
        %v913 = vadd.f32 %v908, %v912
        %s914 = sadd.s32 %s312, 48
        %s915 = scalar_lea.vmem [#allocation2], %s914
        %v916 = vld [vmem:[%s915] sm:$0xff]
        %917 = vrot.lane.b32.xlu0 %v916, 2
        %v918 = vpop.permute.xlu0 %917
        %v919 = vstv %s833
        %v920 = vmul.f32 %v918, %v919
        %v921 = vadd.f32 %v913, %v920
        %922 = vrot.lane.b32.xlu0 %v916, 1
        %v923 = vpop.permute.xlu0 %922
        %v924 = vstv %s835
        %v925 = vmul.f32 %v923, %v924
        %v926 = vadd.f32 %v921, %v925
        %v927 = vstv %s837
        %v928 = vmul.f32 %v916, %v927
        %v929 = vadd.f32 %v926, %v928
        %930 = vrot.lane.b32.xlu0 %v916, 127
        %v931 = vpop.permute.xlu0 %930
        %v932 = vstv %s839
        %v933 = vmul.f32 %v931, %v932
        %v934 = vadd.f32 %v929, %v933
        %935 = vrot.lane.b32.xlu0 %v916, 126
        %v936 = vpop.permute.xlu0 %935
        %v937 = vstv %s841
        %v938 = vmul.f32 %v936, %v937
        %v939 = vadd.f32 %v934, %v938
        %s940 = sadd.s32 %s338, 48
        %s941 = scalar_lea.vmem [#allocation2], %s940
        %v942 = vld [vmem:[%s941] sm:$0xff]
        %943 = vrot.lane.b32.xlu0 %v942, 2
        %v944 = vpop.permute.xlu0 %943
        %v945 = vstv %s843
        %v946 = vmul.f32 %v944, %v945
        %v947 = vadd.f32 %v939, %v946
        %948 = vrot.lane.b32.xlu0 %v942, 1
        %v949 = vpop.permute.xlu0 %948
        %v950 = vstv %s845
        %v951 = vmul.f32 %v949, %v950
        %v952 = vadd.f32 %v947, %v951
        %v953 = vstv %s847
        %v954 = vmul.f32 %v942, %v953
        %v955 = vadd.f32 %v952, %v954
        %956 = vrot.lane.b32.xlu0 %v942, 127
        %v957 = vpop.permute.xlu0 %956
        %v958 = vstv %s849
        %v959 = vmul.f32 %v957, %v958
        %v960 = vadd.f32 %v955, %v959
        %961 = vrot.lane.b32.xlu0 %v942, 126
        %v962 = vpop.permute.xlu0 %961
        %v963 = vstv %s851
        %v964 = vmul.f32 %v962, %v963
        %v965 = vadd.f32 %v960, %v964
        %s966 = sadd.s32 %s364, 48
        %s967 = scalar_lea.vmem [#allocation2], %s966
        %v968 = vld [vmem:[%s967] sm:$0xff]
        %969 = vrot.lane.b32.xlu0 %v968, 2
        %v970 = vpop.permute.xlu0 %969
        %v971 = vstv %s853
        %v972 = vmul.f32 %v970, %v971
        %v973 = vadd.f32 %v965, %v972
        %974 = vrot.lane.b32.xlu0 %v968, 1
        %v975 = vpop.permute.xlu0 %974
        %v976 = vstv %s855
        %v977 = vmul.f32 %v975, %v976
        %v978 = vadd.f32 %v973, %v977
        %v979 = vstv %s857
        %v980 = vmul.f32 %v968, %v979
        %v981 = vadd.f32 %v978, %v980
        %982 = vrot.lane.b32.xlu0 %v968, 127
        %v983 = vpop.permute.xlu0 %982
        %v984 = vstv %s859
        %v985 = vmul.f32 %v983, %v984
        %v986 = vadd.f32 %v981, %v985
        %987 = vrot.lane.b32.xlu0 %v968, 126
        %v988 = vpop.permute.xlu0 %987
        %v989 = vstv %s861
        %v990 = vmul.f32 %v988, %v989
        %v991 = vadd.f32 %v986, %v990
        %s992 = sadd.s32 0, 32
        %s993 = scalar_lea.vmem %s196, %s992 [#allocation8]
        %994 = vst.msk [vmem:[%s993] sm:$0xff] %vm209, %v991
        %s995 = sadd.s32 8, 48
        %s996 = scalar_lea.vmem [#allocation2], %s995
        %v997 = vld [vmem:[%s996] sm:$0xff]
        %998 = vrot.lane.b32.xlu0 %v997, 2
        %v999 = vpop.permute.xlu0 %998
        %v1000 = vmul.f32 %v999, %v867
        %v1001 = vadd.f32 %v1000, 0.0
        %1002 = vrot.lane.b32.xlu0 %v997, 1
        %v1003 = vpop.permute.xlu0 %1002
        %v1004 = vmul.f32 %v1003, %v872
        %v1005 = vadd.f32 %v1001, %v1004
        %v1006 = vmul.f32 %v997, %v875
        %v1007 = vadd.f32 %v1005, %v1006
        %1008 = vrot.lane.b32.xlu0 %v997, 127
        %v1009 = vpop.permute.xlu0 %1008
        %v1010 = vmul.f32 %v1009, %v880
        %v1011 = vadd.f32 %v1007, %v1010
        %1012 = vrot.lane.b32.xlu0 %v997, 126
        %v1013 = vpop.permute.xlu0 %1012
        %v1014 = vmul.f32 %v1013, %v885
        %v1015 = vadd.f32 %v1011, %v1014
        %s1016 = sadd.s32 %s411, 48
        %s1017 = scalar_lea.vmem [#allocation2], %s1016
        %v1018 = vld [vmem:[%s1017] sm:$0xff]
        %1019 = vrot.lane.b32.xlu0 %v1018, 2
        %v1020 = vpop.permute.xlu0 %1019
        %v1021 = vmul.f32 %v1020, %v893
        %v1022 = vadd.f32 %v1015, %v1021
        %1023 = vrot.lane.b32.xlu0 %v1018, 1
        %v1024 = vpop.permute.xlu0 %1023
        %v1025 = vmul.f32 %v1024, %v898
        %v1026 = vadd.f32 %v1022, %v1025
        %v1027 = vmul.f32 %v1018, %v901
        %v1028 = vadd.f32 %v1026, %v1027
        %1029 = vrot.lane.b32.xlu0 %v1018, 127
        %v1030 = vpop.permute.xlu0 %1029
        %v1031 = vmul.f32 %v1030, %v906
        %v1032 = vadd.f32 %v1028, %v1031
        %1033 = vrot.lane.b32.xlu0 %v1018, 126
        %v1034 = vpop.permute.xlu0 %1033
        %v1035 = vmul.f32 %v1034, %v911
        %v1036 = vadd.f32 %v1032, %v1035
        %s1037 = sadd.s32 %s432, 48
        %s1038 = scalar_lea.vmem [#allocation2], %s1037
        %v1039 = vld [vmem:[%s1038] sm:$0xff]
        %1040 = vrot.lane.b32.xlu0 %v1039, 2
        %v1041 = vpop.permute.xlu0 %1040
        %v1042 = vmul.f32 %v1041, %v919
        %v1043 = vadd.f32 %v1036, %v1042
        %1044 = vrot.lane.b32.xlu0 %v1039, 1
        %v1045 = vpop.permute.xlu0 %1044
        %v1046 = vmul.f32 %v1045, %v924
        %v1047 = vadd.f32 %v1043, %v1046
        %v1048 = vmul.f32 %v1039, %v927
        %v1049 = vadd.f32 %v1047, %v1048
        %1050 = vrot.lane.b32.xlu0 %v1039, 127
        %v1051 = vpop.permute.xlu0 %1050
        %v1052 = vmul.f32 %v1051, %v932
        %v1053 = vadd.f32 %v1049, %v1052
        %1054 = vrot.lane.b32.xlu0 %v1039, 126
        %v1055 = vpop.permute.xlu0 %1054
        %v1056 = vmul.f32 %v1055, %v937
        %v1057 = vadd.f32 %v1053, %v1056
        %s1058 = sadd.s32 %s453, 48
        %s1059 = scalar_lea.vmem [#allocation2], %s1058
        %v1060 = vld [vmem:[%s1059] sm:$0xff]
        %1061 = vrot.lane.b32.xlu0 %v1060, 2
        %v1062 = vpop.permute.xlu0 %1061
        %v1063 = vmul.f32 %v1062, %v945
        %v1064 = vadd.f32 %v1057, %v1063
        %1065 = vrot.lane.b32.xlu0 %v1060, 1
        %v1066 = vpop.permute.xlu0 %1065
        %v1067 = vmul.f32 %v1066, %v950
        %v1068 = vadd.f32 %v1064, %v1067
        %v1069 = vmul.f32 %v1060, %v953
        %v1070 = vadd.f32 %v1068, %v1069
        %1071 = vrot.lane.b32.xlu0 %v1060, 127
        %v1072 = vpop.permute.xlu0 %1071
        %v1073 = vmul.f32 %v1072, %v958
        %v1074 = vadd.f32 %v1070, %v1073
        %1075 = vrot.lane.b32.xlu0 %v1060, 126
        %v1076 = vpop.permute.xlu0 %1075
        %v1077 = vmul.f32 %v1076, %v963
        %v1078 = vadd.f32 %v1074, %v1077
        %s1079 = sadd.s32 %s474, 48
        %s1080 = scalar_lea.vmem [#allocation2], %s1079
        %v1081 = vld [vmem:[%s1080] sm:$0xff]
        %1082 = vrot.lane.b32.xlu0 %v1081, 2
        %v1083 = vpop.permute.xlu0 %1082
        %v1084 = vmul.f32 %v1083, %v971
        %v1085 = vadd.f32 %v1078, %v1084
        %1086 = vrot.lane.b32.xlu0 %v1081, 1
        %v1087 = vpop.permute.xlu0 %1086
        %v1088 = vmul.f32 %v1087, %v976
        %v1089 = vadd.f32 %v1085, %v1088
        %v1090 = vmul.f32 %v1081, %v979
        %v1091 = vadd.f32 %v1089, %v1090
        %1092 = vrot.lane.b32.xlu0 %v1081, 127
        %v1093 = vpop.permute.xlu0 %1092
        %v1094 = vmul.f32 %v1093, %v984
        %v1095 = vadd.f32 %v1091, %v1094
        %1096 = vrot.lane.b32.xlu0 %v1081, 126
        %v1097 = vpop.permute.xlu0 %1096
        %v1098 = vmul.f32 %v1097, %v989
        %v1099 = vadd.f32 %v1095, %v1098
        %s1100 = sadd.s32 8, 32
        %s1101 = scalar_lea.vmem %s196, %s1100 [#allocation8]
        %1102 = vst.msk [vmem:[%s1101] sm:$0xff] %vm209, %v1099
        %s1103 = scalar_lea.vmem [#allocation2], 72
        %1104 = vst [vmem:[%s1103] sm:$0x3] 0.0
        %1105 = vst [vmem:[%s1103 + $0x12] sm:$0x3] 0.0
        %1106 = vst.msk [vmem:[%s1103] sm:$0xff] %vm202, 0.0
        %1107 = vst.msk [vmem:[%s1103 + $0x8] sm:$0xff] %vm202, 0.0
        %1108 = vst.msk [vmem:[%s1103 + $0x10] sm:$0xf] %vm205, 0.0
        %s1109 = scalar_lea.vmem %s169, 48 [#allocation3]
        %v1110 = vld [vmem:[%s1109] sm:$0xff]
        %v1111 = vld [vmem:[%s1109 + $0x8] sm:$0xff]
        %1112 = vst.msk [vmem:[%s1103 + $0x2] sm:$0xff] %vm209, %v1110
        %1113 = vst.msk [vmem:[%s1103 + $0xa] sm:$0xff] %vm209, %v1111
        %s1114 = sadd.s32 %s199, 3
        %s1115 = smul.u32 %s1114, 25
        %s1116 = sld [smem:[#allocation7 + %s1115]]
        %s1117 = sadd.s32 %s1115, 1
        %s1118 = sld [smem:[#allocation7 + %s1117]]
        %s1119 = sadd.s32 %s1115, 2
        %s1120 = sld [smem:[#allocation7 + %s1119]]
        %s1121 = sadd.s32 %s1115, 3
        %s1122 = sld [smem:[#allocation7 + %s1121]]
        %s1123 = sadd.s32 %s1115, 4
        %s1124 = sld [smem:[#allocation7 + %s1123]]
        %s1125 = sadd.s32 %s1115, 5
        %s1126 = sld [smem:[#allocation7 + %s1125]]
        %s1127 = sadd.s32 %s1115, 6
        %s1128 = sld [smem:[#allocation7 + %s1127]]
        %s1129 = sadd.s32 %s1115, 7
        %s1130 = sld [smem:[#allocation7 + %s1129]]
        %s1131 = sadd.s32 %s1115, 8
        %s1132 = sld [smem:[#allocation7 + %s1131]]
        %s1133 = sadd.s32 %s1115, 9
        %s1134 = sld [smem:[#allocation7 + %s1133]]
        %s1135 = sadd.s32 %s1115, 10
        %s1136 = sld [smem:[#allocation7 + %s1135]]
        %s1137 = sadd.s32 %s1115, 11
        %s1138 = sld [smem:[#allocation7 + %s1137]]
        %s1139 = sadd.s32 %s1115, 12
        %s1140 = sld [smem:[#allocation7 + %s1139]]
        %s1141 = sadd.s32 %s1115, 13
        %s1142 = sld [smem:[#allocation7 + %s1141]]
        %s1143 = sadd.s32 %s1115, 14
        %s1144 = sld [smem:[#allocation7 + %s1143]]
        %s1145 = sadd.s32 %s1115, 15
        %s1146 = sld [smem:[#allocation7 + %s1145]]
        %s1147 = sadd.s32 %s1115, 16
        %s1148 = sld [smem:[#allocation7 + %s1147]]
        %s1149 = sadd.s32 %s1115, 17
        %s1150 = sld [smem:[#allocation7 + %s1149]]
        %s1151 = sadd.s32 %s1115, 18
        %s1152 = sld [smem:[#allocation7 + %s1151]]
        %s1153 = sadd.s32 %s1115, 19
        %s1154 = sld [smem:[#allocation7 + %s1153]]
        %s1155 = sadd.s32 %s1115, 20
        %s1156 = sld [smem:[#allocation7 + %s1155]]
        %s1157 = sadd.s32 %s1115, 21
        %s1158 = sld [smem:[#allocation7 + %s1157]]
        %s1159 = sadd.s32 %s1115, 22
        %s1160 = sld [smem:[#allocation7 + %s1159]]
        %s1161 = sadd.s32 %s1115, 23
        %s1162 = sld [smem:[#allocation7 + %s1161]]
        %s1163 = sadd.s32 %s1115, 24
        %s1164 = sld [smem:[#allocation7 + %s1163]]
        %s1165 = sadd.s32 0, 72
        %s1166 = scalar_lea.vmem [#allocation2], %s1165
        %v1167 = vld [vmem:[%s1166] sm:$0xff]
        %1168 = vrot.lane.b32.xlu0 %v1167, 2
        %v1169 = vpop.permute.xlu0 %1168
        %v1170 = vstv %s1116
        %v1171 = vmul.f32 %v1169, %v1170
        %v1172 = vadd.f32 %v1171, 0.0
        %1173 = vrot.lane.b32.xlu0 %v1167, 1
        %v1174 = vpop.permute.xlu0 %1173
        %v1175 = vstv %s1118
        %v1176 = vmul.f32 %v1174, %v1175
        %v1177 = vadd.f32 %v1172, %v1176
        %v1178 = vstv %s1120
        %v1179 = vmul.f32 %v1167, %v1178
        %v1180 = vadd.f32 %v1177, %v1179
        %1181 = vrot.lane.b32.xlu0 %v1167, 127
        %v1182 = vpop.permute.xlu0 %1181
        %v1183 = vstv %s1122
        %v1184 = vmul.f32 %v1182, %v1183
        %v1185 = vadd.f32 %v1180, %v1184
        %1186 = vrot.lane.b32.xlu0 %v1167, 126
        %v1187 = vpop.permute.xlu0 %1186
        %v1188 = vstv %s1124
        %v1189 = vmul.f32 %v1187, %v1188
        %v1190 = vadd.f32 %v1185, %v1189
        %s1191 = sadd.s32 %s286, 72
        %s1192 = scalar_lea.vmem [#allocation2], %s1191
        %v1193 = vld [vmem:[%s1192] sm:$0xff]
        %1194 = vrot.lane.b32.xlu0 %v1193, 2
        %v1195 = vpop.permute.xlu0 %1194
        %v1196 = vstv %s1126
        %v1197 = vmul.f32 %v1195, %v1196
        %v1198 = vadd.f32 %v1190, %v1197
        %1199 = vrot.lane.b32.xlu0 %v1193, 1
        %v1200 = vpop.permute.xlu0 %1199
        %v1201 = vstv %s1128
        %v1202 = vmul.f32 %v1200, %v1201
        %v1203 = vadd.f32 %v1198, %v1202
        %v1204 = vstv %s1130
        %v1205 = vmul.f32 %v1193, %v1204
        %v1206 = vadd.f32 %v1203, %v1205
        %1207 = vrot.lane.b32.xlu0 %v1193, 127
        %v1208 = vpop.permute.xlu0 %1207
        %v1209 = vstv %s1132
        %v1210 = vmul.f32 %v1208, %v1209
        %v1211 = vadd.f32 %v1206, %v1210
        %1212 = vrot.lane.b32.xlu0 %v1193, 126
        %v1213 = vpop.permute.xlu0 %1212
        %v1214 = vstv %s1134
        %v1215 = vmul.f32 %v1213, %v1214
        %v1216 = vadd.f32 %v1211, %v1215
        %s1217 = sadd.s32 %s312, 72
        %s1218 = scalar_lea.vmem [#allocation2], %s1217
        %v1219 = vld [vmem:[%s1218] sm:$0xff]
        %1220 = vrot.lane.b32.xlu0 %v1219, 2
        %v1221 = vpop.permute.xlu0 %1220
        %v1222 = vstv %s1136
        %v1223 = vmul.f32 %v1221, %v1222
        %v1224 = vadd.f32 %v1216, %v1223
        %1225 = vrot.lane.b32.xlu0 %v1219, 1
        %v1226 = vpop.permute.xlu0 %1225
        %v1227 = vstv %s1138
        %v1228 = vmul.f32 %v1226, %v1227
        %v1229 = vadd.f32 %v1224, %v1228
        %v1230 = vstv %s1140
        %v1231 = vmul.f32 %v1219, %v1230
        %v1232 = vadd.f32 %v1229, %v1231
        %1233 = vrot.lane.b32.xlu0 %v1219, 127
        %v1234 = vpop.permute.xlu0 %1233
        %v1235 = vstv %s1142
        %v1236 = vmul.f32 %v1234, %v1235
        %v1237 = vadd.f32 %v1232, %v1236
        %1238 = vrot.lane.b32.xlu0 %v1219, 126
        %v1239 = vpop.permute.xlu0 %1238
        %v1240 = vstv %s1144
        %v1241 = vmul.f32 %v1239, %v1240
        %v1242 = vadd.f32 %v1237, %v1241
        %s1243 = sadd.s32 %s338, 72
        %s1244 = scalar_lea.vmem [#allocation2], %s1243
        %v1245 = vld [vmem:[%s1244] sm:$0xff]
        %1246 = vrot.lane.b32.xlu0 %v1245, 2
        %v1247 = vpop.permute.xlu0 %1246
        %v1248 = vstv %s1146
        %v1249 = vmul.f32 %v1247, %v1248
        %v1250 = vadd.f32 %v1242, %v1249
        %1251 = vrot.lane.b32.xlu0 %v1245, 1
        %v1252 = vpop.permute.xlu0 %1251
        %v1253 = vstv %s1148
        %v1254 = vmul.f32 %v1252, %v1253
        %v1255 = vadd.f32 %v1250, %v1254
        %v1256 = vstv %s1150
        %v1257 = vmul.f32 %v1245, %v1256
        %v1258 = vadd.f32 %v1255, %v1257
        %1259 = vrot.lane.b32.xlu0 %v1245, 127
        %v1260 = vpop.permute.xlu0 %1259
        %v1261 = vstv %s1152
        %v1262 = vmul.f32 %v1260, %v1261
        %v1263 = vadd.f32 %v1258, %v1262
        %1264 = vrot.lane.b32.xlu0 %v1245, 126
        %v1265 = vpop.permute.xlu0 %1264
        %v1266 = vstv %s1154
        %v1267 = vmul.f32 %v1265, %v1266
        %v1268 = vadd.f32 %v1263, %v1267
        %s1269 = sadd.s32 %s364, 72
        %s1270 = scalar_lea.vmem [#allocation2], %s1269
        %v1271 = vld [vmem:[%s1270] sm:$0xff]
        %1272 = vrot.lane.b32.xlu0 %v1271, 2
        %v1273 = vpop.permute.xlu0 %1272
        %v1274 = vstv %s1156
        %v1275 = vmul.f32 %v1273, %v1274
        %v1276 = vadd.f32 %v1268, %v1275
        %1277 = vrot.lane.b32.xlu0 %v1271, 1
        %v1278 = vpop.permute.xlu0 %1277
        %v1279 = vstv %s1158
        %v1280 = vmul.f32 %v1278, %v1279
        %v1281 = vadd.f32 %v1276, %v1280
        %v1282 = vstv %s1160
        %v1283 = vmul.f32 %v1271, %v1282
        %v1284 = vadd.f32 %v1281, %v1283
        %1285 = vrot.lane.b32.xlu0 %v1271, 127
        %v1286 = vpop.permute.xlu0 %1285
        %v1287 = vstv %s1162
        %v1288 = vmul.f32 %v1286, %v1287
        %v1289 = vadd.f32 %v1284, %v1288
        %1290 = vrot.lane.b32.xlu0 %v1271, 126
        %v1291 = vpop.permute.xlu0 %1290
        %v1292 = vstv %s1164
        %v1293 = vmul.f32 %v1291, %v1292
        %v1294 = vadd.f32 %v1289, %v1293
        %s1295 = scalar_lea.vmem %s196, %s862 [#allocation8]
        %1296 = vst.msk [vmem:[%s1295] sm:$0xff] %vm209, %v1294
        %s1297 = sadd.s32 8, 72
        %s1298 = scalar_lea.vmem [#allocation2], %s1297
        %v1299 = vld [vmem:[%s1298] sm:$0xff]
        %1300 = vrot.lane.b32.xlu0 %v1299, 2
        %v1301 = vpop.permute.xlu0 %1300
        %v1302 = vmul.f32 %v1301, %v1170
        %v1303 = vadd.f32 %v1302, 0.0
        %1304 = vrot.lane.b32.xlu0 %v1299, 1
        %v1305 = vpop.permute.xlu0 %1304
        %v1306 = vmul.f32 %v1305, %v1175
        %v1307 = vadd.f32 %v1303, %v1306
        %v1308 = vmul.f32 %v1299, %v1178
        %v1309 = vadd.f32 %v1307, %v1308
        %1310 = vrot.lane.b32.xlu0 %v1299, 127
        %v1311 = vpop.permute.xlu0 %1310
        %v1312 = vmul.f32 %v1311, %v1183
        %v1313 = vadd.f32 %v1309, %v1312
        %1314 = vrot.lane.b32.xlu0 %v1299, 126
        %v1315 = vpop.permute.xlu0 %1314
        %v1316 = vmul.f32 %v1315, %v1188
        %v1317 = vadd.f32 %v1313, %v1316
        %s1318 = sadd.s32 %s411, 72
        %s1319 = scalar_lea.vmem [#allocation2], %s1318
        %v1320 = vld [vmem:[%s1319] sm:$0xff]
        %1321 = vrot.lane.b32.xlu0 %v1320, 2
        %v1322 = vpop.permute.xlu0 %1321
        %v1323 = vmul.f32 %v1322, %v1196
        %v1324 = vadd.f32 %v1317, %v1323
        %1325 = vrot.lane.b32.xlu0 %v1320, 1
        %v1326 = vpop.permute.xlu0 %1325
        %v1327 = vmul.f32 %v1326, %v1201
        %v1328 = vadd.f32 %v1324, %v1327
        %v1329 = vmul.f32 %v1320, %v1204
        %v1330 = vadd.f32 %v1328, %v1329
        %1331 = vrot.lane.b32.xlu0 %v1320, 127
        %v1332 = vpop.permute.xlu0 %1331
        %v1333 = vmul.f32 %v1332, %v1209
        %v1334 = vadd.f32 %v1330, %v1333
        %1335 = vrot.lane.b32.xlu0 %v1320, 126
        %v1336 = vpop.permute.xlu0 %1335
        %v1337 = vmul.f32 %v1336, %v1214
        %v1338 = vadd.f32 %v1334, %v1337
        %s1339 = sadd.s32 %s432, 72
        %s1340 = scalar_lea.vmem [#allocation2], %s1339
        %v1341 = vld [vmem:[%s1340] sm:$0xff]
        %1342 = vrot.lane.b32.xlu0 %v1341, 2
        %v1343 = vpop.permute.xlu0 %1342
        %v1344 = vmul.f32 %v1343, %v1222
        %v1345 = vadd.f32 %v1338, %v1344
        %1346 = vrot.lane.b32.xlu0 %v1341, 1
        %v1347 = vpop.permute.xlu0 %1346
        %v1348 = vmul.f32 %v1347, %v1227
        %v1349 = vadd.f32 %v1345, %v1348
        %v1350 = vmul.f32 %v1341, %v1230
        %v1351 = vadd.f32 %v1349, %v1350
        %1352 = vrot.lane.b32.xlu0 %v1341, 127
        %v1353 = vpop.permute.xlu0 %1352
        %v1354 = vmul.f32 %v1353, %v1235
        %v1355 = vadd.f32 %v1351, %v1354
        %1356 = vrot.lane.b32.xlu0 %v1341, 126
        %v1357 = vpop.permute.xlu0 %1356
        %v1358 = vmul.f32 %v1357, %v1240
        %v1359 = vadd.f32 %v1355, %v1358
        %s1360 = sadd.s32 %s453, 72
        %s1361 = scalar_lea.vmem [#allocation2], %s1360
        %v1362 = vld [vmem:[%s1361] sm:$0xff]
        %1363 = vrot.lane.b32.xlu0 %v1362, 2
        %v1364 = vpop.permute.xlu0 %1363
        %v1365 = vmul.f32 %v1364, %v1248
        %v1366 = vadd.f32 %v1359, %v1365
        %1367 = vrot.lane.b32.xlu0 %v1362, 1
        %v1368 = vpop.permute.xlu0 %1367
        %v1369 = vmul.f32 %v1368, %v1253
        %v1370 = vadd.f32 %v1366, %v1369
        %v1371 = vmul.f32 %v1362, %v1256
        %v1372 = vadd.f32 %v1370, %v1371
        %1373 = vrot.lane.b32.xlu0 %v1362, 127
        %v1374 = vpop.permute.xlu0 %1373
        %v1375 = vmul.f32 %v1374, %v1261
        %v1376 = vadd.f32 %v1372, %v1375
        %1377 = vrot.lane.b32.xlu0 %v1362, 126
        %v1378 = vpop.permute.xlu0 %1377
        %v1379 = vmul.f32 %v1378, %v1266
        %v1380 = vadd.f32 %v1376, %v1379
        %s1381 = sadd.s32 %s474, 72
        %s1382 = scalar_lea.vmem [#allocation2], %s1381
        %v1383 = vld [vmem:[%s1382] sm:$0xff]
        %1384 = vrot.lane.b32.xlu0 %v1383, 2
        %v1385 = vpop.permute.xlu0 %1384
        %v1386 = vmul.f32 %v1385, %v1274
        %v1387 = vadd.f32 %v1380, %v1386
        %1388 = vrot.lane.b32.xlu0 %v1383, 1
        %v1389 = vpop.permute.xlu0 %1388
        %v1390 = vmul.f32 %v1389, %v1279
        %v1391 = vadd.f32 %v1387, %v1390
        %v1392 = vmul.f32 %v1383, %v1282
        %v1393 = vadd.f32 %v1391, %v1392
        %1394 = vrot.lane.b32.xlu0 %v1383, 127
        %v1395 = vpop.permute.xlu0 %1394
        %v1396 = vmul.f32 %v1395, %v1287
        %v1397 = vadd.f32 %v1393, %v1396
        %1398 = vrot.lane.b32.xlu0 %v1383, 126
        %v1399 = vpop.permute.xlu0 %1398
        %v1400 = vmul.f32 %v1399, %v1292
        %v1401 = vadd.f32 %v1397, %v1400
        %s1402 = scalar_lea.vmem %s196, %s995 [#allocation8]
        %1403 = vst.msk [vmem:[%s1402] sm:$0xff] %vm209, %v1401
        %s1404 = sand.u32 %s91, 1
        %s1405 = scalar_lea.sflag [#allocation5], %s1404
        %s1406 = sand.u32 %s91, 1
        %s1407 = smul.addr %s1406, 64
        %s1408 = scalar_lea.vmem [#allocation8], %s1407
        // Predicated region
        $region37: #{tpu_custom_call.1} parent=27 // pred_check
          %p1409 = pneg %p101
        $region38: #{tpu_custom_call.1} parent=27 // pred_check_branch
          %1411 = sbr.rel (%p1409) target = $region40
        $region39: #{tpu_custom_call.1} parent=27 // pred_region
          %s1412 = smul.u32 4, %s25
          %1414 = vsyncadd %s1405, 0
          %s1415 = smul.addr %s1412, 2
          %s1416 = smul.addr %s24, 8
          %s1417 = sadd.s32 %s1415, %s1416
          %s1418 = smul.addr %s1417, 8
          %s1419 = scalar_lea.hbm %s2, %s1418
          %s1420 = sshll.u32 %s1408, 4
          %s1421 = int_to_ptr.vmem [resolvable:$true] %s1420
          %s1422 = sshll.u32 %s1419, 4
          %s1423 = int_to_ptr.hbm [resolvable:$true] %s1422
          %1428 = dma.vmem_to_hbm [thread:$0]  %s1421, 1024, %s1423, %s1405, 128, 128, 8
        $region40: #{tpu_custom_call.1} parent=27 // pred_fallthru
          _
      $region28: #{tpu_custom_call.1} parent=5 // pred_fallthru
        _
      %p1429 = scmp.le.s32.totalorder 2, %s15
      // Predicated region
      $region41: #{tpu_custom_call.1} parent=5 // pred_check
        %p1430 = pneg %p1429
      $region42: #{tpu_custom_call.1} parent=5 // pred_check_branch
        %1432 = sbr.rel (%p1430) target = $region44
      $region43: #{tpu_custom_call.1} parent=5 // pred_region
        %s1433 = ssub.s32 %s15, 2
        // Predicated region
        $region45: #{tpu_custom_call.1} parent=43 // pred_check
          %p1434 = pneg %p107
        $region46: #{tpu_custom_call.1} parent=43 // pred_check_branch
          %1436 = sbr.rel (%p1434) target = $region48
        $region47: #{tpu_custom_call.1} parent=43 // pred_region
          %s1437 = sand.u32 %s92, 1
          %s1438 = scalar_lea.sflag [#allocation5], %s1437
          %s1439 = sand.u32 %s92, 1
          %s1440 = smul.addr %s1439, 64
          %s1441 = scalar_lea.vmem [#allocation8], %s1440
          %1443 = dma.done %s1438, 1024
        $region48: #{tpu_custom_call.1} parent=43 // pred_fallthru
          _
      $region44: #{tpu_custom_call.1} parent=5 // pred_fallthru
        _
    $region6: #{tpu_custom_call.1} parent=1 // loop_footer
      %s19 = sadd.s32 1, %s15
    $region7: #{tpu_custom_call.1} parent=1 // loop_footer_branch
      %14 = sbr.rel target = $region3
    $region8: #{tpu_custom_call.1} parent=1 // loop_exit
      _
    %1444 = vsyncpa [#allocation4], 1
    %s1445 = scalar_lea.sflag [#allocation4], 1
    %1446 = vsyncpa %s1445, 1
    %1447 = vsyncpa [#allocation5], 1
    %s1448 = scalar_lea.sflag [#allocation5], 1
    %1449 = vsyncpa %s1448, 1
    %1450 = vsyncpa [#allocation6], 1
    %s1451 = scalar_lea.sflag [#allocation6], 1
    %1452 = vsyncpa %s1451, 1

</llo_original>
